<compile_context>
chip_gen: v7x
topology: tpu7x:2x2x1
jax: 0.10.0
libtpu: 0.0.40
codegen_flags: <defaults>
</compile_context>

<pallas_src>
import functools

import jax
import jax.numpy as jnp
import numpy as np
from jax.experimental import pallas as pl
from jax.experimental.pallas import tpu as pltpu

EPS = 1e-5  # PyTorch InstanceNorm2d default


# ---------------------------------------------------------------------------
# In-kernel helpers
# ---------------------------------------------------------------------------
def _reflect_edges(pad_ref, H, W):
    """Fill the 1-px reflection border of pad_ref [(H+2),(W+2),C].

    Interior rows 1..H / cols 1..W must already be written.  Rows first, then
    columns (the column copies also fill the corners)."""
    pad_ref[0:1, 1:W + 1, :] = pad_ref[2:3, 1:W + 1, :]
    pad_ref[H + 1:H + 2, 1:W + 1, :] = pad_ref[H - 1:H, 1:W + 1, :]
    pad_ref[:, 0:1, :] = pad_ref[:, 2:3, :]
    pad_ref[:, W + 1:W + 2, :] = pad_ref[:, W - 1:W, :]


def _conv_tiles(pad_ref, col_ref, y_ref, s_ref, ss_ref, w_ref, b_ref,
                W, C, TILE_H, num_tiles):
    """3x3 conv of the reflect-padded image in pad_ref, row-tiled.

    Per tile of TILE_H output rows: build the im2col block (one lane-column
    slice per tap, no reshape in the store path), run ONE MXU matmul with
    contraction K = 9*C (low-precision operands, f32 accumulation), store the
    f32 result into y_ref and accumulate per-channel sum / sum-of-squares."""
    TILE_M = TILE_H * W

    s_ref[...] = jnp.zeros_like(s_ref)
    ss_ref[...] = jnp.zeros_like(ss_ref)

    @pl.loop(0, num_tiles)
    def _(t):
        h0 = t * TILE_H
        for dy in range(3):
            for dx in range(3):
                tap = dy * 3 + dx
                col_ref[:, :, tap * C:(tap + 1) * C] = (
                    pad_ref[pl.ds(h0 + dy, TILE_H), dx:dx + W, :])
        # Single collapse of the contiguous col buffer, then one matmul.
        yt = jnp.dot(col_ref[...].reshape(TILE_M, 9 * C), w_ref[...],
                     preferred_element_type=jnp.float32) + b_ref[...]
        y_ref[pl.ds(h0 * W, TILE_M), :] = yt
        s_ref[...] += jnp.sum(yt, axis=0, keepdims=True)
        ss_ref[...] += jnp.sum(yt * yt, axis=0, keepdims=True)


def _finalize_stats(s_ref, ss_ref, inv_hw):
    """InstanceNorm statistics (f32 accumulators, biased var = E[y^2]-mean^2)."""
    mean = s_ref[...] * inv_hw
    var = jnp.maximum(ss_ref[...] * inv_hw - mean * mean, 0.0)
    return mean, jax.lax.rsqrt(var + EPS)


# ---------------------------------------------------------------------------
# Kernel
# ---------------------------------------------------------------------------
def resnet_block_kernel(x_ref, w1_ref, b1_ref, w2_ref, b2_ref, o_ref,
                        pad_ref, col_ref, y_ref, s_ref, ss_ref,
                        *, H, W, C, TILE_H):
    num_tiles = H // TILE_H
    TILE_M = TILE_H * W
    inv_hw = 1.0 / float(H * W)
    cdt = pad_ref.dtype                       # MXU operand dtype (bf16 default)

    # ---- reflect-pad x (cast to the MXU operand dtype), row-tiled ----
    @pl.loop(0, num_tiles)
    def _(t):
        h0 = t * TILE_H
        pad_ref[pl.ds(h0 + 1, TILE_H), 1:W + 1, :] = (
            x_ref[0, pl.ds(h0, TILE_H), :, :].astype(cdt))
    _reflect_edges(pad_ref, H, W)

    # ---- conv1 (one matmul per tile) + fused stats ----
    _conv_tiles(pad_ref, col_ref, y_ref, s_ref, ss_ref, w1_ref, b1_ref,
                W, C, TILE_H, num_tiles)
    mean1, rstd1 = _finalize_stats(s_ref, ss_ref, inv_hw)

    # ---- instance-norm + ReLU (f32), write reflect-padded input of conv2 ----
    @pl.loop(0, num_tiles)
    def _(t):
        h0 = t * TILE_H
        yt = y_ref[pl.ds(h0 * W, TILE_M), :]
        ht = jnp.maximum((yt - mean1) * rstd1, 0.0)
        pad_ref[pl.ds(h0 + 1, TILE_H), 1:W + 1, :] = (
            ht.reshape(TILE_H, W, C).astype(cdt))
    _reflect_edges(pad_ref, H, W)

    # ---- conv2 + fused stats ----
    _conv_tiles(pad_ref, col_ref, y_ref, s_ref, ss_ref, w2_ref, b2_ref,
                W, C, TILE_H, num_tiles)
    mean2, rstd2 = _finalize_stats(s_ref, ss_ref, inv_hw)

    # ---- instance-norm + skip connection.  x is re-read here from its
    #      resident input block (not held live across both convs). ----
    @pl.loop(0, num_tiles)
    def _(t):
        h0 = t * TILE_H
        yt = y_ref[pl.ds(h0 * W, TILE_M), :]
        ht = (yt - mean2) * rstd2
        xt = x_ref[0, pl.ds(h0, TILE_H), :, :].astype(jnp.float32)
        o_ref[0, pl.ds(h0, TILE_H), :, :] = (
            xt + ht.reshape(TILE_H, W, C)).astype(o_ref.dtype)


# ---------------------------------------------------------------------------
# Host-side helpers / wrappers
# ---------------------------------------------------------------------------
def _prepare_params(w1, b1, w2, b2, C, compute_dtype):
    """OIHW -> [9*Cin, Cout] (tap-major, channel-minor rows) in the MXU
    operand dtype; biases stay f32.  Static per model — hoist/cache once."""
    def conv_w(w):
        return jnp.transpose(w, (2, 3, 1, 0)).reshape(9 * C, C).astype(compute_dtype)
    return (conv_w(w1), b1.reshape(1, C).astype(jnp.float32),
            conv_w(w2), b2.reshape(1, C).astype(jnp.float32))


def _pick_tile_h(H, W, C, itemsize, budget_bytes=8 * 1024 * 1024):
    """Largest divisor of H whose im2col tile fits the budget.  Keeps TILE_M
    (= TILE_H*W) as large as possible (MXU M-axis slack) while bounding the
    dominant scratch for v7x's 64 MiB VMEM."""
    best = 1
    for th in range(1, H + 1):
        if H % th == 0 and th * W * 9 * C * itemsize <= budget_bytes:
            best = th
    return best


def _vmem_need_bytes(H, W, C, TILE_H, x_itemsize, c_itemsize):
    blk = H * W * C
    need = 2 * 2 * blk * x_itemsize                     # x & out blocks, dbl-buffered
    need += 2 * 2 * (9 * C * C * c_itemsize + C * 4)    # weights + biases, dbl-buffered
    need += (H + 2) * (W + 2) * C * c_itemsize          # pad_ref
    need += TILE_H * W * 9 * C * c_itemsize             # col_ref (im2col tile)
    need += H * W * C * 4                               # y_ref (f32 conv output)
    need += 2 * C * 4                                   # stats
    need += 2 * 1024 * 1024                             # live-value headroom
    return need


def _vmem_limit_bytes(need_bytes):
    """Generation-aware scoped-VMEM request (defaults are only 16-32 MiB)."""
    try:
        physical = int(pltpu.get_tpu_info().vmem_capacity_bytes)
    except Exception:                                    # off-TPU trace / old runtime
        physical = 64 * 1024 * 1024                      # smallest per-core VMEM (v7x)
    cap = int(physical * 0.875)                          # leave runtime headroom
    if need_bytes > cap:
        # Request the real footprint and fail loudly at compile time rather
        # than silently under-requesting.  TODO(synk): auto-shrink TILE_H here.
        return int(need_bytes)
    return int(min(max(int(need_bytes * 1.5), 32 * 1024 * 1024), cap))


def resnet_block_nhwc(x_nhwc, w1, b1, w2, b2, *, compute_dtype=jnp.bfloat16):
    """Preferred entry point: activations stay NHWC (no transposes)."""
    N, H, W, C = x_nhwc.shape
    assert H >= 2 and W >= 2, "ReflectionPad2d(1) requires H, W >= 2"
    c_itemsize = jnp.dtype(compute_dtype).itemsize
    w1k, b1k, w2k, b2k = _prepare_params(w1, b1, w2, b2, C, compute_dtype)

    TILE_H = _pick_tile_h(H, W, C, c_itemsize)
    need = _vmem_need_bytes(H, W, C, TILE_H,
                            jnp.dtype(x_nhwc.dtype).itemsize, c_itemsize)

    kernel = functools.partial(resnet_block_kernel, H=H, W=W, C=C, TILE_H=TILE_H)

    return pl.pallas_call(
        kernel,
        out_shape=jax.ShapeDtypeStruct((N, H, W, C), x_nhwc.dtype),
        grid_spec=pltpu.PrefetchScalarGridSpec(
            num_scalar_prefetch=0,
            grid=(N,),
            in_specs=[
                pl.BlockSpec((1, H, W, C), lambda n: (n, 0, 0, 0)),
                pl.BlockSpec((9 * C, C), lambda n: (0, 0)),
                pl.BlockSpec((1, C), lambda n: (0, 0)),
                pl.BlockSpec((9 * C, C), lambda n: (0, 0)),
                pl.BlockSpec((1, C), lambda n: (0, 0)),
            ],
            out_specs=pl.BlockSpec((1, H, W, C), lambda n: (n, 0, 0, 0)),
            scratch_shapes=[
                pltpu.VMEM((H + 2, W + 2, C), compute_dtype),   # padded image
                pltpu.VMEM((TILE_H, W, 9 * C), compute_dtype),  # im2col tile
                pltpu.VMEM((H * W, C), jnp.float32),            # conv output (f32)
                pltpu.VMEM((1, C), jnp.float32),                # channel sum
                pltpu.VMEM((1, C), jnp.float32),                # channel sum-of-squares
            ],
        ),
        compiler_params=pltpu.CompilerParams(
            dimension_semantics=("parallel",),        # batch steps / 2 TCs on v7x
            vmem_limit_bytes=_vmem_limit_bytes(need),
        ),
    )(x_nhwc, w1k, b1k, w2k, b2k)


def resnet_block(x_nchw, w1, b1, w2, b2, *, compute_dtype=jnp.bfloat16):
    """PyTorch-parity wrapper (NCHW in/out).  Inside a model, call
    resnet_block_nhwc directly so these transposes disappear."""
    out = resnet_block_nhwc(jnp.transpose(x_nchw, (0, 2, 3, 1)),
                            w1, b1, w2, b2, compute_dtype=compute_dtype)
    return jnp.transpose(out, (0, 3, 1, 2))


def resnet_block_reference(x, w1, b1, w2, b2):
    """Pure-JAX NCHW reference matching the PyTorch module."""
    def conv(h, w, b):
        hp = jnp.pad(h, ((0, 0), (0, 0), (1, 1), (1, 1)), mode="reflect")
        y = jax.lax.conv_general_dilated(
            hp, w, window_strides=(1, 1), padding="VALID",
            dimension_numbers=("NCHW", "OIHW", "NCHW"))
        return y + b.reshape(1, -1, 1, 1)

    def inorm(y):
        m = y.mean(axis=(2, 3), keepdims=True)
        v = ((y - m) ** 2).mean(axis=(2, 3), keepdims=True)
        return (y - m) / jnp.sqrt(v + EPS)

    h = jnp.maximum(inorm(conv(x, w1, b1)), 0.0)
    h = inorm(conv(h, w2, b2))
    return x + h


if __name__ == "__main__":
    N, C, H, W = 2, 4, 16, 16
    key = jax.random.PRNGKey(0)
    kx, k1, k2, k3, k4 = jax.random.split(key, 5)

    x = jax.random.normal(kx, (N, C, H, W), dtype=jnp.float32)
    # Deterministic synthetic parameters (Conv2d(dim, dim, 3, bias=True) x2)
    w1 = jax.random.normal(k1, (C, C, 3, 3), dtype=jnp.float32) * 0.1
    b1 = jax.random.normal(k2, (C,), dtype=jnp.float32) * 0.1
    w2 = jax.random.normal(k3, (C, C, 3, 3), dtype=jnp.float32) * 0.1
    b2 = jax.random.normal(k4, (C,), dtype=jnp.float32) * 0.1

    ref = jax.block_until_ready(resnet_block_reference(x, w1, b1, w2, b2))

    # Exact-parity check with f32 MXU operands (same kernel, slower path).
    out_f32 = jax.block_until_ready(
        resnet_block(x, w1, b1, w2, b2, compute_dtype=jnp.float32))
    assert out_f32.shape == (N, C, H, W)
    np.testing.assert_allclose(np.asarray(out_f32), np.asarray(ref),
                               rtol=1e-4, atol=1e-4)

    # Default fast path: bf16 MXU operands (f32 accumulation / norm math).
    # Tolerance is looser purely because conv operands are bf16-quantized.
    out_bf16 = jax.block_until_ready(resnet_block(x, w1, b1, w2, b2))
    assert out_bf16.shape == (N, C, H, W)
    np.testing.assert_allclose(np.asarray(out_bf16), np.asarray(ref),
                               rtol=5e-2, atol=5e-2)

    print("KERNEL_OK")
</pallas_src>

<mosaic_0001>
module attributes {stable_mosaic.version = 11 : i64} {
  func.func @resnet_block_kernel(%arg0: i32, %arg1: memref<1x16x16x4xf32, #tpu.memory_space<vmem>>, %arg2: memref<36x4xf32, #tpu.memory_space<vmem>>, %arg3: memref<1x4xf32, #tpu.memory_space<vmem>>, %arg4: memref<36x4xf32, #tpu.memory_space<vmem>>, %arg5: memref<1x4xf32, #tpu.memory_space<vmem>>, %arg6: memref<1x16x16x4xf32, #tpu.memory_space<vmem>>, %arg7: memref<18x18x4xf32, #tpu.memory_space<vmem>>, %arg8: memref<16x16x36xf32, #tpu.memory_space<vmem>>, %arg9: memref<256x4xf32, #tpu.memory_space<vmem>>, %arg10: memref<1x4xf32, #tpu.memory_space<vmem>>, %arg11: memref<1x4xf32, #tpu.memory_space<vmem>>) attributes {dimension_semantics = [#tpu.dimension_semantics<parallel>], iteration_bounds = array<i64: 2>, scalar_prefetch = 0 : i64, scratch_operands = 5 : i64, tpu.core_type = #tpu.core_type<tc>, window_params = [{transform_indices = @transform_0, window_bounds = array<i64: 1, 16, 16, 4>}, {pipeline_mode = #tpu.pipeline_mode<synchronous>, transform_indices = @transform_1, window_bounds = array<i64: 36, 4>}, {pipeline_mode = #tpu.pipeline_mode<synchronous>, transform_indices = @transform_2, window_bounds = array<i64: 1, 4>}, {pipeline_mode = #tpu.pipeline_mode<synchronous>, transform_indices = @transform_3, window_bounds = array<i64: 36, 4>}, {pipeline_mode = #tpu.pipeline_mode<synchronous>, transform_indices = @transform_4, window_bounds = array<i64: 1, 4>}, {transform_indices = @transform_5, window_bounds = array<i64: 1, 16, 16, 4>}]} {
    %c0_i32 = arith.constant 0 : i32
    %c1_i32 = arith.constant 1 : i32
    %0 = arith.muli %c0_i32, %c1_i32 : i32
    %c0_i32_0 = arith.constant 0 : i32
    %1 = arith.addi %c0_i32_0, %0 : i32
    %c16_i32 = arith.constant 16 : i32
    %2 = arith.muli %1, %c16_i32 : i32
    %c0 = arith.constant 0 : index
    %3 = arith.index_cast %2 : i32 to index
    %c0_1 = arith.constant 0 : index
    %c0_2 = arith.constant 0 : index
    %4 = vector.load %arg1[%c0, %3, %c0_1, %c0_2] : memref<1x16x16x4xf32, #tpu.memory_space<vmem>>, vector<1x16x16x4xf32>
    %5 = vector.shape_cast %4 : vector<1x16x16x4xf32> to vector<16x16x4xf32>
    %c1_i32_3 = arith.constant 1 : i32
    %6 = arith.addi %2, %c1_i32_3 : i32
    %7 = arith.index_cast %6 : i32 to index
    %c1 = arith.constant 1 : index
    %c0_4 = arith.constant 0 : index
    %8 = vector.load %arg7[%7, %c1, %c0_4] : memref<18x18x4xf32, #tpu.memory_space<vmem>>, vector<16x16x4xf32>
    tpu.vector_store %arg7[%7, %c1, %c0_4], %5 {strides = array<i32>} : memref<18x18x4xf32, #tpu.memory_space<vmem>>, vector<16x16x4xf32>,
    %c1_i32_5 = arith.constant 1 : i32
    %c2 = arith.constant 2 : index
    %c1_6 = arith.constant 1 : index
    %c0_7 = arith.constant 0 : index
    %9 = vector.load %arg7[%c2, %c1_6, %c0_7] : memref<18x18x4xf32, #tpu.memory_space<vmem>>, vector<1x16x4xf32>
    %c0_8 = arith.constant 0 : index
    %c1_9 = arith.constant 1 : index
    %c0_10 = arith.constant 0 : index
    %10 = vector.load %arg7[%c0_8, %c1_9, %c0_10] : memref<18x18x4xf32, #tpu.memory_space<vmem>>, vector<1x16x4xf32>
    tpu.vector_store %arg7[%c0_8, %c1_9, %c0_10], %9 {strides = array<i32>} : memref<18x18x4xf32, #tpu.memory_space<vmem>>, vector<1x16x4xf32>,
    %c15 = arith.constant 15 : index
    %c1_11 = arith.constant 1 : index
    %c0_12 = arith.constant 0 : index
    %11 = vector.load %arg7[%c15, %c1_11, %c0_12] : memref<18x18x4xf32, #tpu.memory_space<vmem>>, vector<1x16x4xf32>
    %c17 = arith.constant 17 : index
    %c1_13 = arith.constant 1 : index
    %c0_14 = arith.constant 0 : index
    %12 = vector.load %arg7[%c17, %c1_13, %c0_14] : memref<18x18x4xf32, #tpu.memory_space<vmem>>, vector<1x16x4xf32>
    tpu.vector_store %arg7[%c17, %c1_13, %c0_14], %11 {strides = array<i32>} : memref<18x18x4xf32, #tpu.memory_space<vmem>>, vector<1x16x4xf32>,
    %c0_15 = arith.constant 0 : index
    %c2_16 = arith.constant 2 : index
    %c0_17 = arith.constant 0 : index
    %13 = vector.load %arg7[%c0_15, %c2_16, %c0_17] : memref<18x18x4xf32, #tpu.memory_space<vmem>>, vector<18x1x4xf32>
    %c0_18 = arith.constant 0 : index
    %c0_19 = arith.constant 0 : index
    %c0_20 = arith.constant 0 : index
    %14 = vector.load %arg7[%c0_18, %c0_19, %c0_20] : memref<18x18x4xf32, #tpu.memory_space<vmem>>, vector<18x1x4xf32>
    tpu.vector_store %arg7[%c0_18, %c0_19, %c0_20], %13 {strides = array<i32>} : memref<18x18x4xf32, #tpu.memory_space<vmem>>, vector<18x1x4xf32>,
    %c0_21 = arith.constant 0 : index
    %c15_22 = arith.constant 15 : index
    %c0_23 = arith.constant 0 : index
    %15 = vector.load %arg7[%c0_21, %c15_22, %c0_23] : memref<18x18x4xf32, #tpu.memory_space<vmem>>, vector<18x1x4xf32>
    %c0_24 = arith.constant 0 : index
    %c17_25 = arith.constant 17 : index
    %c0_26 = arith.constant 0 : index
    %16 = vector.load %arg7[%c0_24, %c17_25, %c0_26] : memref<18x18x4xf32, #tpu.memory_space<vmem>>, vector<18x1x4xf32>
    tpu.vector_store %arg7[%c0_24, %c17_25, %c0_26], %15 {strides = array<i32>} : memref<18x18x4xf32, #tpu.memory_space<vmem>>, vector<18x1x4xf32>,
    %cst = arith.constant 0.000000e+00 : f32
    %17 = vector.broadcast %cst : f32 to vector<1x4xf32>
    %c0_27 = arith.constant 0 : index
    %c0_28 = arith.constant 0 : index
    %18 = vector.load %arg10[%c0_27, %c0_28] : memref<1x4xf32, #tpu.memory_space<vmem>>, vector<1x4xf32>
    tpu.vector_store %arg10[%c0_27, %c0_28], %17 {strides = array<i32>} : memref<1x4xf32, #tpu.memory_space<vmem>>, vector<1x4xf32>,
    %cst_29 = arith.constant 0.000000e+00 : f32
    %19 = vector.broadcast %cst_29 : f32 to vector<1x4xf32>
    %c0_30 = arith.constant 0 : index
    %c0_31 = arith.constant 0 : index
    %20 = vector.load %arg11[%c0_30, %c0_31] : memref<1x4xf32, #tpu.memory_space<vmem>>, vector<1x4xf32>
    tpu.vector_store %arg11[%c0_30, %c0_31], %19 {strides = array<i32>} : memref<1x4xf32, #tpu.memory_space<vmem>>, vector<1x4xf32>,
    %c0_i32_32 = arith.constant 0 : i32
    %c1_i32_33 = arith.constant 1 : i32
    %21 = arith.muli %c0_i32_32, %c1_i32_33 : i32
    %c0_i32_34 = arith.constant 0 : i32
    %22 = arith.addi %c0_i32_34, %21 : i32
    %c16_i32_35 = arith.constant 16 : i32
    %23 = arith.muli %22, %c16_i32_35 : i32
    %c0_i32_36 = arith.constant 0 : i32
    %24 = arith.addi %23, %c0_i32_36 : i32
    %25 = arith.index_cast %24 : i32 to index
    %c0_37 = arith.constant 0 : index
    %c0_38 = arith.constant 0 : index
    %26 = vector.load %arg7[%25, %c0_37, %c0_38] : memref<18x18x4xf32, #tpu.memory_space<vmem>>, vector<16x16x4xf32>
    %c0_39 = arith.constant 0 : index
    %c0_40 = arith.constant 0 : index
    %c0_41 = arith.constant 0 : index
    %27 = vector.load %arg8[%c0_39, %c0_40, %c0_41] : memref<16x16x36xf32, #tpu.memory_space<vmem>>, vector<16x16x4xf32>
    tpu.vector_store %arg8[%c0_39, %c0_40, %c0_41], %26 {strides = array<i32>} : memref<16x16x36xf32, #tpu.memory_space<vmem>>, vector<16x16x4xf32>,
    %c0_i32_42 = arith.constant 0 : i32
    %28 = arith.addi %23, %c0_i32_42 : i32
    %29 = arith.index_cast %28 : i32 to index
    %c1_43 = arith.constant 1 : index
    %c0_44 = arith.constant 0 : index
    %30 = vector.load %arg7[%29, %c1_43, %c0_44] : memref<18x18x4xf32, #tpu.memory_space<vmem>>, vector<16x16x4xf32>
    %c0_45 = arith.constant 0 : index
    %c0_46 = arith.constant 0 : index
    %c4 = arith.constant 4 : index
    %31 = vector.load %arg8[%c0_45, %c0_46, %c4] : memref<16x16x36xf32, #tpu.memory_space<vmem>>, vector<16x16x4xf32>
    tpu.vector_store %arg8[%c0_45, %c0_46, %c4], %30 {strides = array<i32>} : memref<16x16x36xf32, #tpu.memory_space<vmem>>, vector<16x16x4xf32>,
    %c0_i32_47 = arith.constant 0 : i32
    %32 = arith.addi %23, %c0_i32_47 : i32
    %33 = arith.index_cast %32 : i32 to index
    %c2_48 = arith.constant 2 : index
    %c0_49 = arith.constant 0 : index
    %34 = vector.load %arg7[%33, %c2_48, %c0_49] : memref<18x18x4xf32, #tpu.memory_space<vmem>>, vector<16x16x4xf32>
    %c0_50 = arith.constant 0 : index
    %c0_51 = arith.constant 0 : index
    %c8 = arith.constant 8 : index
    %35 = vector.load %arg8[%c0_50, %c0_51, %c8] : memref<16x16x36xf32, #tpu.memory_space<vmem>>, vector<16x16x4xf32>
    tpu.vector_store %arg8[%c0_50, %c0_51, %c8], %34 {strides = array<i32>} : memref<16x16x36xf32, #tpu.memory_space<vmem>>, vector<16x16x4xf32>,
    %c1_i32_52 = arith.constant 1 : i32
    %36 = arith.addi %23, %c1_i32_52 : i32
    %37 = arith.index_cast %36 : i32 to index
    %c0_53 = arith.constant 0 : index
    %c0_54 = arith.constant 0 : index
    %38 = vector.load %arg7[%37, %c0_53, %c0_54] : memref<18x18x4xf32, #tpu.memory_space<vmem>>, vector<16x16x4xf32>
    %c0_55 = arith.constant 0 : index
    %c0_56 = arith.constant 0 : index
    %c12 = arith.constant 12 : index
    %39 = vector.load %arg8[%c0_55, %c0_56, %c12] : memref<16x16x36xf32, #tpu.memory_space<vmem>>, vector<16x16x4xf32>
    tpu.vector_store %arg8[%c0_55, %c0_56, %c12], %38 {strides = array<i32>} : memref<16x16x36xf32, #tpu.memory_space<vmem>>, vector<16x16x4xf32>,
    %c1_i32_57 = arith.constant 1 : i32
    %40 = arith.addi %23, %c1_i32_57 : i32
    %41 = arith.index_cast %40 : i32 to index
    %c1_58 = arith.constant 1 : index
    %c0_59 = arith.constant 0 : index
    %42 = vector.load %arg7[%41, %c1_58, %c0_59] : memref<18x18x4xf32, #tpu.memory_space<vmem>>, vector<16x16x4xf32>
    %c0_60 = arith.constant 0 : index
    %c0_61 = arith.constant 0 : index
    %c16 = arith.constant 16 : index
    %43 = vector.load %arg8[%c0_60, %c0_61, %c16] : memref<16x16x36xf32, #tpu.memory_space<vmem>>, vector<16x16x4xf32>
    tpu.vector_store %arg8[%c0_60, %c0_61, %c16], %42 {strides = array<i32>} : memref<16x16x36xf32, #tpu.memory_space<vmem>>, vector<16x16x4xf32>,
    %c1_i32_62 = arith.constant 1 : i32
    %44 = arith.addi %23, %c1_i32_62 : i32
    %45 = arith.index_cast %44 : i32 to index
    %c2_63 = arith.constant 2 : index
    %c0_64 = arith.constant 0 : index
    %46 = vector.load %arg7[%45, %c2_63, %c0_64] : memref<18x18x4xf32, #tpu.memory_space<vmem>>, vector<16x16x4xf32>
    %c0_65 = arith.constant 0 : index
    %c0_66 = arith.constant 0 : index
    %c20 = arith.constant 20 : index
    %47 = vector.load %arg8[%c0_65, %c0_66, %c20] : memref<16x16x36xf32, #tpu.memory_space<vmem>>, vector<16x16x4xf32>
    tpu.vector_store %arg8[%c0_65, %c0_66, %c20], %46 {strides = array<i32>} : memref<16x16x36xf32, #tpu.memory_space<vmem>>, vector<16x16x4xf32>,
    %c2_i32 = arith.constant 2 : i32
    %48 = arith.addi %23, %c2_i32 : i32
    %49 = arith.index_cast %48 : i32 to index
    %c0_67 = arith.constant 0 : index
    %c0_68 = arith.constant 0 : index
    %50 = vector.load %arg7[%49, %c0_67, %c0_68] : memref<18x18x4xf32, #tpu.memory_space<vmem>>, vector<16x16x4xf32>
    %c0_69 = arith.constant 0 : index
    %c0_70 = arith.constant 0 : index
    %c24 = arith.constant 24 : index
    %51 = vector.load %arg8[%c0_69, %c0_70, %c24] : memref<16x16x36xf32, #tpu.memory_space<vmem>>, vector<16x16x4xf32>
    tpu.vector_store %arg8[%c0_69, %c0_70, %c24], %50 {strides = array<i32>} : memref<16x16x36xf32, #tpu.memory_space<vmem>>, vector<16x16x4xf32>,
    %c2_i32_71 = arith.constant 2 : i32
    %52 = arith.addi %23, %c2_i32_71 : i32
    %53 = arith.index_cast %52 : i32 to index
    %c1_72 = arith.constant 1 : index
    %c0_73 = arith.constant 0 : index
    %54 = vector.load %arg7[%53, %c1_72, %c0_73] : memref<18x18x4xf32, #tpu.memory_space<vmem>>, vector<16x16x4xf32>
    %c0_74 = arith.constant 0 : index
    %c0_75 = arith.constant 0 : index
    %c28 = arith.constant 28 : index
    %55 = vector.load %arg8[%c0_74, %c0_75, %c28] : memref<16x16x36xf32, #tpu.memory_space<vmem>>, vector<16x16x4xf32>
    tpu.vector_store %arg8[%c0_74, %c0_75, %c28], %54 {strides = array<i32>} : memref<16x16x36xf32, #tpu.memory_space<vmem>>, vector<16x16x4xf32>,
    %c2_i32_76 = arith.constant 2 : i32
    %56 = arith.addi %23, %c2_i32_76 : i32
    %57 = arith.index_cast %56 : i32 to index
    %c2_77 = arith.constant 2 : index
    %c0_78 = arith.constant 0 : index
    %58 = vector.load %arg7[%57, %c2_77, %c0_78] : memref<18x18x4xf32, #tpu.memory_space<vmem>>, vector<16x16x4xf32>
    %c0_79 = arith.constant 0 : index
    %c0_80 = arith.constant 0 : index
    %c32 = arith.constant 32 : index
    %59 = vector.load %arg8[%c0_79, %c0_80, %c32] : memref<16x16x36xf32, #tpu.memory_space<vmem>>, vector<16x16x4xf32>
    tpu.vector_store %arg8[%c0_79, %c0_80, %c32], %58 {strides = array<i32>} : memref<16x16x36xf32, #tpu.memory_space<vmem>>, vector<16x16x4xf32>,
    %c0_81 = arith.constant 0 : index
    %c0_82 = arith.constant 0 : index
    %c0_83 = arith.constant 0 : index
    %60 = vector.load %arg8[%c0_81, %c0_82, %c0_83] : memref<16x16x36xf32, #tpu.memory_space<vmem>>, vector<16x16x36xf32>
    %61 = vector.shape_cast %60 : vector<16x16x36xf32> to vector<256x36xf32>
    %c0_84 = arith.constant 0 : index
    %c0_85 = arith.constant 0 : index
    %62 = vector.load %arg2[%c0_84, %c0_85] : memref<36x4xf32, #tpu.memory_space<vmem>>, vector<36x4xf32>
    %cst_86 = arith.constant dense<0.000000e+00> : vector<256x4xf32>
    %63 = tpu.matmul %61, %62, %cst_86 {dimension_numbers = #tpu.dot_dimension_numbers<[1], [0], [0], [1], [0, 0, 1, 1], [], []>} : vector<256x36xf32>, vector<36x4xf32>, vector<256x4xf32> -> vector<256x4xf32>
    %c0_87 = arith.constant 0 : index
    %c0_88 = arith.constant 0 : index
    %64 = vector.load %arg3[%c0_87, %c0_88] : memref<1x4xf32, #tpu.memory_space<vmem>>, vector<1x4xf32>
    %65 = vector.broadcast %64 : vector<1x4xf32> to vector<256x4xf32>
    %66 = arith.addf %63, %65 : vector<256x4xf32>
    %c16_i32_89 = arith.constant 16 : i32
    %67 = arith.muli %23, %c16_i32_89 : i32
    %68 = arith.index_cast %67 : i32 to index
    %c0_90 = arith.constant 0 : index
    %69 = vector.load %arg9[%68, %c0_90] : memref<256x4xf32, #tpu.memory_space<vmem>>, vector<256x4xf32>
    tpu.vector_store %arg9[%68, %c0_90], %66 {strides = array<i32>} : memref<256x4xf32, #tpu.memory_space<vmem>>, vector<256x4xf32>,
    %c0_91 = arith.constant 0 : index
    %c0_92 = arith.constant 0 : index
    %70 = vector.load %arg10[%c0_91, %c0_92] : memref<1x4xf32, #tpu.memory_space<vmem>>, vector<1x4xf32>
    %cst_93 = arith.constant dense<0.000000e+00> : vector<4xf32>
    %71 = vector.multi_reduction <add>, %66, %cst_93 [0] : vector<256x4xf32> to vector<4xf32>
    %72 = vector.shape_cast %71 : vector<4xf32> to vector<1x4xf32>
    %73 = arith.addf %70, %72 : vector<1x4xf32>
    %c0_94 = arith.constant 0 : index
    %c0_95 = arith.constant 0 : index
    %74 = vector.load %arg10[%c0_94, %c0_95] : memref<1x4xf32, #tpu.memory_space<vmem>>, vector<1x4xf32>
    tpu.vector_store %arg10[%c0_94, %c0_95], %73 {strides = array<i32>} : memref<1x4xf32, #tpu.memory_space<vmem>>, vector<1x4xf32>,
    %c0_96 = arith.constant 0 : index
    %c0_97 = arith.constant 0 : index
    %75 = vector.load %arg11[%c0_96, %c0_97] : memref<1x4xf32, #tpu.memory_space<vmem>>, vector<1x4xf32>
    %76 = arith.mulf %66, %66 : vector<256x4xf32>
    %cst_98 = arith.constant dense<0.000000e+00> : vector<4xf32>
    %77 = vector.multi_reduction <add>, %76, %cst_98 [0] : vector<256x4xf32> to vector<4xf32>
    %78 = vector.shape_cast %77 : vector<4xf32> to vector<1x4xf32>
    %79 = arith.addf %75, %78 : vector<1x4xf32>
    %c0_99 = arith.constant 0 : index
    %c0_100 = arith.constant 0 : index
    %80 = vector.load %arg11[%c0_99, %c0_100] : memref<1x4xf32, #tpu.memory_space<vmem>>, vector<1x4xf32>
    tpu.vector_store %arg11[%c0_99, %c0_100], %79 {strides = array<i32>} : memref<1x4xf32, #tpu.memory_space<vmem>>, vector<1x4xf32>,
    %c1_i32_101 = arith.constant 1 : i32
    %c0_102 = arith.constant 0 : index
    %c0_103 = arith.constant 0 : index
    %81 = vector.load %arg10[%c0_102, %c0_103] : memref<1x4xf32, #tpu.memory_space<vmem>>, vector<1x4xf32>
    %cst_104 = arith.constant 3.906250e-03 : f32
    %82 = vector.broadcast %cst_104 : f32 to vector<1x4xf32>
    %83 = arith.mulf %81, %82 : vector<1x4xf32>
    %c0_105 = arith.constant 0 : index
    %c0_106 = arith.constant 0 : index
    %84 = vector.load %arg11[%c0_105, %c0_106] : memref<1x4xf32, #tpu.memory_space<vmem>>, vector<1x4xf32>
    %cst_107 = arith.constant 3.906250e-03 : f32
    %85 = vector.broadcast %cst_107 : f32 to vector<1x4xf32>
    %86 = arith.mulf %84, %85 : vector<1x4xf32>
    %87 = arith.mulf %83, %83 : vector<1x4xf32>
    %88 = arith.subf %86, %87 : vector<1x4xf32>
    %cst_108 = arith.constant 0.000000e+00 : f32
    %89 = vector.broadcast %cst_108 : f32 to vector<1x4xf32>
    %90 = arith.maximumf %88, %89 : vector<1x4xf32>
    %cst_109 = arith.constant 9.99999974E-6 : f32
    %91 = vector.broadcast %cst_109 : f32 to vector<1x4xf32>
    %92 = arith.addf %90, %91 : vector<1x4xf32>
    %93 = math.rsqrt %92 : vector<1x4xf32>
    %c0_i32_110 = arith.constant 0 : i32
    %c1_i32_111 = arith.constant 1 : i32
    %94 = arith.muli %c0_i32_110, %c1_i32_111 : i32
    %c0_i32_112 = arith.constant 0 : i32
    %95 = arith.addi %c0_i32_112, %94 : i32
    %c16_i32_113 = arith.constant 16 : i32
    %96 = arith.muli %95, %c16_i32_113 : i32
    %c16_i32_114 = arith.constant 16 : i32
    %97 = arith.muli %96, %c16_i32_114 : i32
    %98 = arith.index_cast %97 : i32 to index
    %c0_115 = arith.constant 0 : index
    %99 = vector.load %arg9[%98, %c0_115] : memref<256x4xf32, #tpu.memory_space<vmem>>, vector<256x4xf32>
    %100 = vector.broadcast %83 : vector<1x4xf32> to vector<256x4xf32>
    %101 = arith.subf %99, %100 : vector<256x4xf32>
    %102 = vector.broadcast %93 : vector<1x4xf32> to vector<256x4xf32>
    %103 = arith.mulf %101, %102 : vector<256x4xf32>
    %cst_116 = arith.constant 0.000000e+00 : f32
    %104 = vector.broadcast %cst_116 : f32 to vector<256x4xf32>
    %105 = arith.maximumf %103, %104 : vector<256x4xf32>
    %106 = vector.shape_cast %105 : vector<256x4xf32> to vector<16x16x4xf32>
    %c1_i32_117 = arith.constant 1 : i32
    %107 = arith.addi %96, %c1_i32_117 : i32
    %108 = arith.index_cast %107 : i32 to index
    %c1_118 = arith.constant 1 : index
    %c0_119 = arith.constant 0 : index
    %109 = vector.load %arg7[%108, %c1_118, %c0_119] : memref<18x18x4xf32, #tpu.memory_space<vmem>>, vector<16x16x4xf32>
    tpu.vector_store %arg7[%108, %c1_118, %c0_119], %106 {strides = array<i32>} : memref<18x18x4xf32, #tpu.memory_space<vmem>>, vector<16x16x4xf32>,
    %c1_i32_120 = arith.constant 1 : i32
    %c2_121 = arith.constant 2 : index
    %c1_122 = arith.constant 1 : index
    %c0_123 = arith.constant 0 : index
    %110 = vector.load %arg7[%c2_121, %c1_122, %c0_123] : memref<18x18x4xf32, #tpu.memory_space<vmem>>, vector<1x16x4xf32>
    %c0_124 = arith.constant 0 : index
    %c1_125 = arith.constant 1 : index
    %c0_126 = arith.constant 0 : index
    %111 = vector.load %arg7[%c0_124, %c1_125, %c0_126] : memref<18x18x4xf32, #tpu.memory_space<vmem>>, vector<1x16x4xf32>
    tpu.vector_store %arg7[%c0_124, %c1_125, %c0_126], %110 {strides = array<i32>} : memref<18x18x4xf32, #tpu.memory_space<vmem>>, vector<1x16x4xf32>,
    %c15_127 = arith.constant 15 : index
    %c1_128 = arith.constant 1 : index
    %c0_129 = arith.constant 0 : index
    %112 = vector.load %arg7[%c15_127, %c1_128, %c0_129] : memref<18x18x4xf32, #tpu.memory_space<vmem>>, vector<1x16x4xf32>
    %c17_130 = arith.constant 17 : index
    %c1_131 = arith.constant 1 : index
    %c0_132 = arith.constant 0 : index
    %113 = vector.load %arg7[%c17_130, %c1_131, %c0_132] : memref<18x18x4xf32, #tpu.memory_space<vmem>>, vector<1x16x4xf32>
    tpu.vector_store %arg7[%c17_130, %c1_131, %c0_132], %112 {strides = array<i32>} : memref<18x18x4xf32, #tpu.memory_space<vmem>>, vector<1x16x4xf32>,
    %c0_133 = arith.constant 0 : index
    %c2_134 = arith.constant 2 : index
    %c0_135 = arith.constant 0 : index
    %114 = vector.load %arg7[%c0_133, %c2_134, %c0_135] : memref<18x18x4xf32, #tpu.memory_space<vmem>>, vector<18x1x4xf32>
    %c0_136 = arith.constant 0 : index
    %c0_137 = arith.constant 0 : index
    %c0_138 = arith.constant 0 : index
    %115 = vector.load %arg7[%c0_136, %c0_137, %c0_138] : memref<18x18x4xf32, #tpu.memory_space<vmem>>, vector<18x1x4xf32>
    tpu.vector_store %arg7[%c0_136, %c0_137, %c0_138], %114 {strides = array<i32>} : memref<18x18x4xf32, #tpu.memory_space<vmem>>, vector<18x1x4xf32>,
    %c0_139 = arith.constant 0 : index
    %c15_140 = arith.constant 15 : index
    %c0_141 = arith.constant 0 : index
    %116 = vector.load %arg7[%c0_139, %c15_140, %c0_141] : memref<18x18x4xf32, #tpu.memory_space<vmem>>, vector<18x1x4xf32>
    %c0_142 = arith.constant 0 : index
    %c17_143 = arith.constant 17 : index
    %c0_144 = arith.constant 0 : index
    %117 = vector.load %arg7[%c0_142, %c17_143, %c0_144] : memref<18x18x4xf32, #tpu.memory_space<vmem>>, vector<18x1x4xf32>
    tpu.vector_store %arg7[%c0_142, %c17_143, %c0_144], %116 {strides = array<i32>} : memref<18x18x4xf32, #tpu.memory_space<vmem>>, vector<18x1x4xf32>,
    %cst_145 = arith.constant 0.000000e+00 : f32
    %118 = vector.broadcast %cst_145 : f32 to vector<1x4xf32>
    %c0_146 = arith.constant 0 : index
    %c0_147 = arith.constant 0 : index
    %119 = vector.load %arg10[%c0_146, %c0_147] : memref<1x4xf32, #tpu.memory_space<vmem>>, vector<1x4xf32>
    tpu.vector_store %arg10[%c0_146, %c0_147], %118 {strides = array<i32>} : memref<1x4xf32, #tpu.memory_space<vmem>>, vector<1x4xf32>,
    %cst_148 = arith.constant 0.000000e+00 : f32
    %120 = vector.broadcast %cst_148 : f32 to vector<1x4xf32>
    %c0_149 = arith.constant 0 : index
    %c0_150 = arith.constant 0 : index
    %121 = vector.load %arg11[%c0_149, %c0_150] : memref<1x4xf32, #tpu.memory_space<vmem>>, vector<1x4xf32>
    tpu.vector_store %arg11[%c0_149, %c0_150], %120 {strides = array<i32>} : memref<1x4xf32, #tpu.memory_space<vmem>>, vector<1x4xf32>,
    %c0_i32_151 = arith.constant 0 : i32
    %c1_i32_152 = arith.constant 1 : i32
    %122 = arith.muli %c0_i32_151, %c1_i32_152 : i32
    %c0_i32_153 = arith.constant 0 : i32
    %123 = arith.addi %c0_i32_153, %122 : i32
    %c16_i32_154 = arith.constant 16 : i32
    %124 = arith.muli %123, %c16_i32_154 : i32
    %c0_i32_155 = arith.constant 0 : i32
    %125 = arith.addi %124, %c0_i32_155 : i32
    %126 = arith.index_cast %125 : i32 to index
    %c0_156 = arith.constant 0 : index
    %c0_157 = arith.constant 0 : index
    %127 = vector.load %arg7[%126, %c0_156, %c0_157] : memref<18x18x4xf32, #tpu.memory_space<vmem>>, vector<16x16x4xf32>
    %c0_158 = arith.constant 0 : index
    %c0_159 = arith.constant 0 : index
    %c0_160 = arith.constant 0 : index
    %128 = vector.load %arg8[%c0_158, %c0_159, %c0_160] : memref<16x16x36xf32, #tpu.memory_space<vmem>>, vector<16x16x4xf32>
    tpu.vector_store %arg8[%c0_158, %c0_159, %c0_160], %127 {strides = array<i32>} : memref<16x16x36xf32, #tpu.memory_space<vmem>>, vector<16x16x4xf32>,
    %c0_i32_161 = arith.constant 0 : i32
    %129 = arith.addi %124, %c0_i32_161 : i32
    %130 = arith.index_cast %129 : i32 to index
    %c1_162 = arith.constant 1 : index
    %c0_163 = arith.constant 0 : index
    %131 = vector.load %arg7[%130, %c1_162, %c0_163] : memref<18x18x4xf32, #tpu.memory_space<vmem>>, vector<16x16x4xf32>
    %c0_164 = arith.constant 0 : index
    %c0_165 = arith.constant 0 : index
    %c4_166 = arith.constant 4 : index
    %132 = vector.load %arg8[%c0_164, %c0_165, %c4_166] : memref<16x16x36xf32, #tpu.memory_space<vmem>>, vector<16x16x4xf32>
    tpu.vector_store %arg8[%c0_164, %c0_165, %c4_166], %131 {strides = array<i32>} : memref<16x16x36xf32, #tpu.memory_space<vmem>>, vector<16x16x4xf32>,
    %c0_i32_167 = arith.constant 0 : i32
    %133 = arith.addi %124, %c0_i32_167 : i32
    %134 = arith.index_cast %133 : i32 to index
    %c2_168 = arith.constant 2 : index
    %c0_169 = arith.constant 0 : index
    %135 = vector.load %arg7[%134, %c2_168, %c0_169] : memref<18x18x4xf32, #tpu.memory_space<vmem>>, vector<16x16x4xf32>
    %c0_170 = arith.constant 0 : index
    %c0_171 = arith.constant 0 : index
    %c8_172 = arith.constant 8 : index
    %136 = vector.load %arg8[%c0_170, %c0_171, %c8_172] : memref<16x16x36xf32, #tpu.memory_space<vmem>>, vector<16x16x4xf32>
    tpu.vector_store %arg8[%c0_170, %c0_171, %c8_172], %135 {strides = array<i32>} : memref<16x16x36xf32, #tpu.memory_space<vmem>>, vector<16x16x4xf32>,
    %c1_i32_173 = arith.constant 1 : i32
    %137 = arith.addi %124, %c1_i32_173 : i32
    %138 = arith.index_cast %137 : i32 to index
    %c0_174 = arith.constant 0 : index
    %c0_175 = arith.constant 0 : index
    %139 = vector.load %arg7[%138, %c0_174, %c0_175] : memref<18x18x4xf32, #tpu.memory_space<vmem>>, vector<16x16x4xf32>
    %c0_176 = arith.constant 0 : index
    %c0_177 = arith.constant 0 : index
    %c12_178 = arith.constant 12 : index
    %140 = vector.load %arg8[%c0_176, %c0_177, %c12_178] : memref<16x16x36xf32, #tpu.memory_space<vmem>>, vector<16x16x4xf32>
    tpu.vector_store %arg8[%c0_176, %c0_177, %c12_178], %139 {strides = array<i32>} : memref<16x16x36xf32, #tpu.memory_space<vmem>>, vector<16x16x4xf32>,
    %c1_i32_179 = arith.constant 1 : i32
    %141 = arith.addi %124, %c1_i32_179 : i32
    %142 = arith.index_cast %141 : i32 to index
    %c1_180 = arith.constant 1 : index
    %c0_181 = arith.constant 0 : index
    %143 = vector.load %arg7[%142, %c1_180, %c0_181] : memref<18x18x4xf32, #tpu.memory_space<vmem>>, vector<16x16x4xf32>
    %c0_182 = arith.constant 0 : index
    %c0_183 = arith.constant 0 : index
    %c16_184 = arith.constant 16 : index
    %144 = vector.load %arg8[%c0_182, %c0_183, %c16_184] : memref<16x16x36xf32, #tpu.memory_space<vmem>>, vector<16x16x4xf32>
    tpu.vector_store %arg8[%c0_182, %c0_183, %c16_184], %143 {strides = array<i32>} : memref<16x16x36xf32, #tpu.memory_space<vmem>>, vector<16x16x4xf32>,
    %c1_i32_185 = arith.constant 1 : i32
    %145 = arith.addi %124, %c1_i32_185 : i32
    %146 = arith.index_cast %145 : i32 to index
    %c2_186 = arith.constant 2 : index
    %c0_187 = arith.constant 0 : index
    %147 = vector.load %arg7[%146, %c2_186, %c0_187] : memref<18x18x4xf32, #tpu.memory_space<vmem>>, vector<16x16x4xf32>
    %c0_188 = arith.constant 0 : index
    %c0_189 = arith.constant 0 : index
    %c20_190 = arith.constant 20 : index
    %148 = vector.load %arg8[%c0_188, %c0_189, %c20_190] : memref<16x16x36xf32, #tpu.memory_space<vmem>>, vector<16x16x4xf32>
    tpu.vector_store %arg8[%c0_188, %c0_189, %c20_190], %147 {strides = array<i32>} : memref<16x16x36xf32, #tpu.memory_space<vmem>>, vector<16x16x4xf32>,
    %c2_i32_191 = arith.constant 2 : i32
    %149 = arith.addi %124, %c2_i32_191 : i32
    %150 = arith.index_cast %149 : i32 to index
    %c0_192 = arith.constant 0 : index
    %c0_193 = arith.constant 0 : index
    %151 = vector.load %arg7[%150, %c0_192, %c0_193] : memref<18x18x4xf32, #tpu.memory_space<vmem>>, vector<16x16x4xf32>
    %c0_194 = arith.constant 0 : index
    %c0_195 = arith.constant 0 : index
    %c24_196 = arith.constant 24 : index
    %152 = vector.load %arg8[%c0_194, %c0_195, %c24_196] : memref<16x16x36xf32, #tpu.memory_space<vmem>>, vector<16x16x4xf32>
    tpu.vector_store %arg8[%c0_194, %c0_195, %c24_196], %151 {strides = array<i32>} : memref<16x16x36xf32, #tpu.memory_space<vmem>>, vector<16x16x4xf32>,
    %c2_i32_197 = arith.constant 2 : i32
    %153 = arith.addi %124, %c2_i32_197 : i32
    %154 = arith.index_cast %153 : i32 to index
    %c1_198 = arith.constant 1 : index
    %c0_199 = arith.constant 0 : index
    %155 = vector.load %arg7[%154, %c1_198, %c0_199] : memref<18x18x4xf32, #tpu.memory_space<vmem>>, vector<16x16x4xf32>
    %c0_200 = arith.constant 0 : index
    %c0_201 = arith.constant 0 : index
    %c28_202 = arith.constant 28 : index
    %156 = vector.load %arg8[%c0_200, %c0_201, %c28_202] : memref<16x16x36xf32, #tpu.memory_space<vmem>>, vector<16x16x4xf32>
    tpu.vector_store %arg8[%c0_200, %c0_201, %c28_202], %155 {strides = array<i32>} : memref<16x16x36xf32, #tpu.memory_space<vmem>>, vector<16x16x4xf32>,
    %c2_i32_203 = arith.constant 2 : i32
    %157 = arith.addi %124, %c2_i32_203 : i32
    %158 = arith.index_cast %157 : i32 to index
    %c2_204 = arith.constant 2 : index
    %c0_205 = arith.constant 0 : index
    %159 = vector.load %arg7[%158, %c2_204, %c0_205] : memref<18x18x4xf32, #tpu.memory_space<vmem>>, vector<16x16x4xf32>
    %c0_206 = arith.constant 0 : index
    %c0_207 = arith.constant 0 : index
    %c32_208 = arith.constant 32 : index
    %160 = vector.load %arg8[%c0_206, %c0_207, %c32_208] : memref<16x16x36xf32, #tpu.memory_space<vmem>>, vector<16x16x4xf32>
    tpu.vector_store %arg8[%c0_206, %c0_207, %c32_208], %159 {strides = array<i32>} : memref<16x16x36xf32, #tpu.memory_space<vmem>>, vector<16x16x4xf32>,
    %c0_209 = arith.constant 0 : index
    %c0_210 = arith.constant 0 : index
    %c0_211 = arith.constant 0 : index
    %161 = vector.load %arg8[%c0_209, %c0_210, %c0_211] : memref<16x16x36xf32, #tpu.memory_space<vmem>>, vector<16x16x36xf32>
    %162 = vector.shape_cast %161 : vector<16x16x36xf32> to vector<256x36xf32>
    %c0_212 = arith.constant 0 : index
    %c0_213 = arith.constant 0 : index
    %163 = vector.load %arg4[%c0_212, %c0_213] : memref<36x4xf32, #tpu.memory_space<vmem>>, vector<36x4xf32>
    %cst_214 = arith.constant dense<0.000000e+00> : vector<256x4xf32>
    %164 = tpu.matmul %162, %163, %cst_214 {dimension_numbers = #tpu.dot_dimension_numbers<[1], [0], [0], [1], [0, 0, 1, 1], [], []>} : vector<256x36xf32>, vector<36x4xf32>, vector<256x4xf32> -> vector<256x4xf32>
    %c0_215 = arith.constant 0 : index
    %c0_216 = arith.constant 0 : index
    %165 = vector.load %arg5[%c0_215, %c0_216] : memref<1x4xf32, #tpu.memory_space<vmem>>, vector<1x4xf32>
    %166 = vector.broadcast %165 : vector<1x4xf32> to vector<256x4xf32>
    %167 = arith.addf %164, %166 : vector<256x4xf32>
    %c16_i32_217 = arith.constant 16 : i32
    %168 = arith.muli %124, %c16_i32_217 : i32
    %169 = arith.index_cast %168 : i32 to index
    %c0_218 = arith.constant 0 : index
    %170 = vector.load %arg9[%169, %c0_218] : memref<256x4xf32, #tpu.memory_space<vmem>>, vector<256x4xf32>
    tpu.vector_store %arg9[%169, %c0_218], %167 {strides = array<i32>} : memref<256x4xf32, #tpu.memory_space<vmem>>, vector<256x4xf32>,
    %c0_219 = arith.constant 0 : index
    %c0_220 = arith.constant 0 : index
    %171 = vector.load %arg10[%c0_219, %c0_220] : memref<1x4xf32, #tpu.memory_space<vmem>>, vector<1x4xf32>
    %cst_221 = arith.constant dense<0.000000e+00> : vector<4xf32>
    %172 = vector.multi_reduction <add>, %167, %cst_221 [0] : vector<256x4xf32> to vector<4xf32>
    %173 = vector.shape_cast %172 : vector<4xf32> to vector<1x4xf32>
    %174 = arith.addf %171, %173 : vector<1x4xf32>
    %c0_222 = arith.constant 0 : index
    %c0_223 = arith.constant 0 : index
    %175 = vector.load %arg10[%c0_222, %c0_223] : memref<1x4xf32, #tpu.memory_space<vmem>>, vector<1x4xf32>
    tpu.vector_store %arg10[%c0_222, %c0_223], %174 {strides = array<i32>} : memref<1x4xf32, #tpu.memory_space<vmem>>, vector<1x4xf32>,
    %c0_224 = arith.constant 0 : index
    %c0_225 = arith.constant 0 : index
    %176 = vector.load %arg11[%c0_224, %c0_225] : memref<1x4xf32, #tpu.memory_space<vmem>>, vector<1x4xf32>
    %177 = arith.mulf %167, %167 : vector<256x4xf32>
    %cst_226 = arith.constant dense<0.000000e+00> : vector<4xf32>
    %178 = vector.multi_reduction <add>, %177, %cst_226 [0] : vector<256x4xf32> to vector<4xf32>
    %179 = vector.shape_cast %178 : vector<4xf32> to vector<1x4xf32>
    %180 = arith.addf %176, %179 : vector<1x4xf32>
    %c0_227 = arith.constant 0 : index
    %c0_228 = arith.constant 0 : index
    %181 = vector.load %arg11[%c0_227, %c0_228] : memref<1x4xf32, #tpu.memory_space<vmem>>, vector<1x4xf32>
    tpu.vector_store %arg11[%c0_227, %c0_228], %180 {strides = array<i32>} : memref<1x4xf32, #tpu.memory_space<vmem>>, vector<1x4xf32>,
    %c1_i32_229 = arith.constant 1 : i32
    %c0_230 = arith.constant 0 : index
    %c0_231 = arith.constant 0 : index
    %182 = vector.load %arg10[%c0_230, %c0_231] : memref<1x4xf32, #tpu.memory_space<vmem>>, vector<1x4xf32>
    %cst_232 = arith.constant 3.906250e-03 : f32
    %183 = vector.broadcast %cst_232 : f32 to vector<1x4xf32>
    %184 = arith.mulf %182, %183 : vector<1x4xf32>
    %c0_233 = arith.constant 0 : index
    %c0_234 = arith.constant 0 : index
    %185 = vector.load %arg11[%c0_233, %c0_234] : memref<1x4xf32, #tpu.memory_space<vmem>>, vector<1x4xf32>
    %cst_235 = arith.constant 3.906250e-03 : f32
    %186 = vector.broadcast %cst_235 : f32 to vector<1x4xf32>
    %187 = arith.mulf %185, %186 : vector<1x4xf32>
    %188 = arith.mulf %184, %184 : vector<1x4xf32>
    %189 = arith.subf %187, %188 : vector<1x4xf32>
    %cst_236 = arith.constant 0.000000e+00 : f32
    %190 = vector.broadcast %cst_236 : f32 to vector<1x4xf32>
    %191 = arith.maximumf %189, %190 : vector<1x4xf32>
    %cst_237 = arith.constant 9.99999974E-6 : f32
    %192 = vector.broadcast %cst_237 : f32 to vector<1x4xf32>
    %193 = arith.addf %191, %192 : vector<1x4xf32>
    %194 = math.rsqrt %193 : vector<1x4xf32>
    %c0_i32_238 = arith.constant 0 : i32
    %c1_i32_239 = arith.constant 1 : i32
    %195 = arith.muli %c0_i32_238, %c1_i32_239 : i32
    %c0_i32_240 = arith.constant 0 : i32
    %196 = arith.addi %c0_i32_240, %195 : i32
    %c16_i32_241 = arith.constant 16 : i32
    %197 = arith.muli %196, %c16_i32_241 : i32
    %c16_i32_242 = arith.constant 16 : i32
    %198 = arith.muli %197, %c16_i32_242 : i32
    %199 = arith.index_cast %198 : i32 to index
    %c0_243 = arith.constant 0 : index
    %200 = vector.load %arg9[%199, %c0_243] : memref<256x4xf32, #tpu.memory_space<vmem>>, vector<256x4xf32>
    %201 = vector.broadcast %184 : vector<1x4xf32> to vector<256x4xf32>
    %202 = arith.subf %200, %201 : vector<256x4xf32>
    %203 = vector.broadcast %194 : vector<1x4xf32> to vector<256x4xf32>
    %204 = arith.mulf %202, %203 : vector<256x4xf32>
    %c0_244 = arith.constant 0 : index
    %205 = arith.index_cast %197 : i32 to index
    %c0_245 = arith.constant 0 : index
    %c0_246 = arith.constant 0 : index
    %206 = vector.load %arg1[%c0_244, %205, %c0_245, %c0_246] : memref<1x16x16x4xf32, #tpu.memory_space<vmem>>, vector<1x16x16x4xf32>
    %207 = vector.shape_cast %206 : vector<1x16x16x4xf32> to vector<16x16x4xf32>
    %208 = vector.shape_cast %204 : vector<256x4xf32> to vector<16x16x4xf32>
    %209 = arith.addf %207, %208 : vector<16x16x4xf32>
    %c0_247 = arith.constant 0 : index
    %210 = arith.index_cast %197 : i32 to index
    %c0_248 = arith.constant 0 : index
    %c0_249 = arith.constant 0 : index
    %211 = vector.load %arg6[%c0_247, %210, %c0_248, %c0_249] : memref<1x16x16x4xf32, #tpu.memory_space<vmem>>, vector<1x16x16x4xf32>
    %212 = vector.shape_cast %211 : vector<1x16x16x4xf32> to vector<16x16x4xf32>
    %213 = vector.shape_cast %209 : vector<16x16x4xf32> to vector<1x16x16x4xf32>
    tpu.vector_store %arg6[%c0_247, %210, %c0_248, %c0_249], %213 {strides = array<i32>} : memref<1x16x16x4xf32, #tpu.memory_space<vmem>>, vector<1x16x16x4xf32>,
    %c1_i32_250 = arith.constant 1 : i32
    return
  }
  func.func @transform_0(%arg0: i32) -> (i32, i32, i32, i32) {
    %c0_i32 = arith.constant 0 : i32
    %c0_i32_0 = arith.constant 0 : i32
    %c0_i32_1 = arith.constant 0 : i32
    %c0_i32_2 = arith.constant 0 : i32
    return %arg0, %c0_i32, %c0_i32_0, %c0_i32_1 : i32, i32, i32, i32
  }
  func.func @transform_1(%arg0: i32) -> (i32, i32) {
    %c0_i32 = arith.constant 0 : i32
    %c0_i32_0 = arith.constant 0 : i32
    %c0_i32_1 = arith.constant 0 : i32
    return %c0_i32, %c0_i32_0 : i32, i32
  }
  func.func @transform_2(%arg0: i32) -> (i32, i32) {
    %c0_i32 = arith.constant 0 : i32
    %c0_i32_0 = arith.constant 0 : i32
    %c0_i32_1 = arith.constant 0 : i32
    return %c0_i32, %c0_i32_0 : i32, i32
  }
  func.func @transform_3(%arg0: i32) -> (i32, i32) {
    %c0_i32 = arith.constant 0 : i32
    %c0_i32_0 = arith.constant 0 : i32
    %c0_i32_1 = arith.constant 0 : i32
    return %c0_i32, %c0_i32_0 : i32, i32
  }
  func.func @transform_4(%arg0: i32) -> (i32, i32) {
    %c0_i32 = arith.constant 0 : i32
    %c0_i32_0 = arith.constant 0 : i32
    %c0_i32_1 = arith.constant 0 : i32
    return %c0_i32, %c0_i32_0 : i32, i32
  }
  func.func @transform_5(%arg0: i32) -> (i32, i32, i32, i32) {
    %c0_i32 = arith.constant 0 : i32
    %c0_i32_0 = arith.constant 0 : i32
    %c0_i32_1 = arith.constant 0 : i32
    %c0_i32_2 = arith.constant 0 : i32
    return %arg0, %c0_i32, %c0_i32_0, %c0_i32_1 : i32, i32, i32, i32
  }
}

</mosaic_0001>

<llo_original>
// kernel: tpu_custom_call.1
$region0: #{tpu_custom_call.1}
  #allocation0 [shape = 'u32[]', space=smem, size = 0x4, offset = 0x4, fixed_abs, tag = 'smem constant byte address 0x4 - core index']
  #allocation1 [shape = 'u32[144,128]{1,0:T(1,128)}', space=vmem, size = 0x12000, scoped, tag = 'internal scratch']
  #allocation2 [shape = 'f32[18,18,4]{2,1,0:T(8,128)}', space=vmem, size = 0x36000, scoped, tag = 'scratch operand']
  #allocation3 [shape = 'f32[16,16,36]{2,1,0:T(8,128)}', space=vmem, size = 0x20000, scoped, tag = 'scratch operand']
  #allocation4 [shape = 'f32[256,4]{1,0:T(8,128)}', space=vmem, size = 0x20000, scoped, tag = 'scratch operand']
  #allocation5 [shape = 'f32[1,4]{1,0:T(1,128)}', space=vmem, size = 0x200, scoped, tag = 'scratch operand']
  #allocation6 [shape = 'f32[1,4]{1,0:T(1,128)}', space=vmem, size = 0x200, scoped, tag = 'scratch operand']
  %s0 = inlined_call_operand.vmem [shape: f32[2,16,16,4], index: 0, kind: input, shape index: {}]
  %s1 = inlined_call_operand.vmem [shape: f32[36,4], index: 1, kind: input, shape index: {}]
  %s2 = inlined_call_operand.vmem [shape: f32[1,4], index: 2, kind: input, shape index: {}]
  %s3 = inlined_call_operand.vmem [shape: f32[36,4], index: 3, kind: input, shape index: {}]
  %s4 = inlined_call_operand.vmem [shape: f32[1,4], index: 4, kind: input, shape index: {}]
  %s5 = inlined_call_operand.vmem [shape: f32[2,16,16,4], index: 5, kind: output, shape index: {}]
  %s6 = sld [smem:[#allocation0]]
  $region53: #{tpu_custom_call.1} parent=0
    _
  %s8 = ssub.s32 1, %s6
  %s9 = scalar_select 0, %s8, %s6
  loop: start=0, step=1, limit=4
  $region2: #{tpu_custom_call.1} parent=0 // loop_pre_header
    _
  $region3: #{tpu_custom_call.1} parent=0 // loop_header
    %s11 = sphi 0, %s15
    %p12 = scmp.ge.s32.totalorder %s11, 4
    %s21 = sphi 0, %s23
    %s24 = sphi 0, %s21
    %s25 = sphi 0, %s24
    %s41 = sphi 0, %s25
    %s45 = sphi 0, %s45
    %s47 = sphi 0, %s45
    %s48 = sphi 0, %s47
    %s62 = sphi 0, %s48
    %s66 = sphi 0, %s66
    %s68 = sphi 0, %s66
    %s69 = sphi 0, %s68
    %s83 = sphi 0, %s69
    %s87 = sphi 0, %s87
    %s89 = sphi 0, %s87
    %s90 = sphi 0, %s89
    %s104 = sphi 0, %s90
    %s108 = sphi 0, %s108
    %s110 = sphi 0, %s108
    %s111 = sphi 0, %s110
    %s125 = sphi 0, %s111
    %s131 = sphi 0, %s133
    %s134 = sphi 0, %s131
    %s135 = sphi 0, %s134
    %s151 = sphi 0, %s135
  $region4: #{tpu_custom_call.1} parent=0 // loop_header_branch
    %14 = sbr.rel (%p12) target = $region8
  $region5: #{tpu_custom_call.1} parent=0 // loop_body
    %s16 = ssub.s32 %s11, 1
    %s17 = ssub.s32 %s11, 2
    %s18 = sadd.s32 %s11, 1
    %s19 = ssub.s32 %s11, %s18
    %p20 = scmp.eq.s32.totalorder %s19, 0
    %s22 = sadd.s32 %s21, 1
    %s23 = scalar_select %p20, %s21, %s22
    %p26 = pneg %p20
    %p27 = scmp.eq.s32.totalorder %s11, 1
    %p28 = por %p26, %p27
    %p29 = scmp.ne.s32.totalorder %s21, %s24
    %p30 = scmp.eq.s32.totalorder %s11, 0
    %p31 = por %p29, %p30
    %p32 = scmp.ne.s32.totalorder %s21, %s24
    %p33 = scmp.eq.s32.totalorder %s16, 1
    %p34 = por %p32, %p33
    %p35 = scmp.ne.s32.totalorder %s24, %s25
    %p36 = scmp.eq.s32.totalorder %s16, 0
    %p37 = por %p35, %p36
    %p38 = scmp.ne.s32.totalorder %s24, %s25
    %p39 = scmp.eq.s32.totalorder %s17, 1
    %p40 = por %p38, %p39
    %p42 = scmp.ne.s32.totalorder %s25, %s41
    %p43 = scmp.eq.s32.totalorder %s17, 0
    %p44 = por %p42, %p43
    %s46 = sadd.s32 %s45, 1
    %p49 = scmp.eq.s32.totalorder %s11, 1
    %p50 = scmp.ne.s32.totalorder %s45, %s47
    %p51 = scmp.eq.s32.totalorder %s11, 0
    %p52 = por %p50, %p51
    %p53 = scmp.ne.s32.totalorder %s45, %s47
    %p54 = scmp.eq.s32.totalorder %s16, 1
    %p55 = por %p53, %p54
    %p56 = scmp.ne.s32.totalorder %s47, %s48
    %p57 = scmp.eq.s32.totalorder %s16, 0
    %p58 = por %p56, %p57
    %p59 = scmp.ne.s32.totalorder %s47, %s48
    %p60 = scmp.eq.s32.totalorder %s17, 1
    %p61 = por %p59, %p60
    %p63 = scmp.ne.s32.totalorder %s48, %s62
    %p64 = scmp.eq.s32.totalorder %s17, 0
    %p65 = por %p63, %p64
    %s67 = sadd.s32 %s66, 1
    %p70 = scmp.eq.s32.totalorder %s11, 1
    %p71 = scmp.ne.s32.totalorder %s66, %s68
    %p72 = scmp.eq.s32.totalorder %s11, 0
    %p73 = por %p71, %p72
    %p74 = scmp.ne.s32.totalorder %s66, %s68
    %p75 = scmp.eq.s32.totalorder %s16, 1
    %p76 = por %p74, %p75
    %p77 = scmp.ne.s32.totalorder %s68, %s69
    %p78 = scmp.eq.s32.totalorder %s16, 0
    %p79 = por %p77, %p78
    %p80 = scmp.ne.s32.totalorder %s68, %s69
    %p81 = scmp.eq.s32.totalorder %s17, 1
    %p82 = por %p80, %p81
    %p84 = scmp.ne.s32.totalorder %s69, %s83
    %p85 = scmp.eq.s32.totalorder %s17, 0
    %p86 = por %p84, %p85
    %s88 = sadd.s32 %s87, 1
    %p91 = scmp.eq.s32.totalorder %s11, 1
    %p92 = scmp.ne.s32.totalorder %s87, %s89
    %p93 = scmp.eq.s32.totalorder %s11, 0
    %p94 = por %p92, %p93
    %p95 = scmp.ne.s32.totalorder %s87, %s89
    %p96 = scmp.eq.s32.totalorder %s16, 1
    %p97 = por %p95, %p96
    %p98 = scmp.ne.s32.totalorder %s89, %s90
    %p99 = scmp.eq.s32.totalorder %s16, 0
    %p100 = por %p98, %p99
    %p101 = scmp.ne.s32.totalorder %s89, %s90
    %p102 = scmp.eq.s32.totalorder %s17, 1
    %p103 = por %p101, %p102
    %p105 = scmp.ne.s32.totalorder %s90, %s104
    %p106 = scmp.eq.s32.totalorder %s17, 0
    %p107 = por %p105, %p106
    %s109 = sadd.s32 %s108, 1
    %p112 = scmp.eq.s32.totalorder %s11, 1
    %p113 = scmp.ne.s32.totalorder %s108, %s110
    %p114 = scmp.eq.s32.totalorder %s11, 0
    %p115 = por %p113, %p114
    %p116 = scmp.ne.s32.totalorder %s108, %s110
    %p117 = scmp.eq.s32.totalorder %s16, 1
    %p118 = por %p116, %p117
    %p119 = scmp.ne.s32.totalorder %s110, %s111
    %p120 = scmp.eq.s32.totalorder %s16, 0
    %p121 = por %p119, %p120
    %p122 = scmp.ne.s32.totalorder %s110, %s111
    %p123 = scmp.eq.s32.totalorder %s17, 1
    %p124 = por %p122, %p123
    %p126 = scmp.ne.s32.totalorder %s111, %s125
    %p127 = scmp.eq.s32.totalorder %s17, 0
    %p128 = por %p126, %p127
    %s129 = ssub.s32 %s11, %s18
    %p130 = scmp.eq.s32.totalorder %s129, 0
    %s132 = sadd.s32 %s131, 1
    %s133 = scalar_select %p130, %s131, %s132
    %p136 = pneg %p130
    %p137 = scmp.eq.s32.totalorder %s11, 1
    %p138 = por %p136, %p137
    %p139 = scmp.ne.s32.totalorder %s131, %s134
    %p140 = scmp.eq.s32.totalorder %s11, 0
    %p141 = por %p139, %p140
    %p142 = scmp.ne.s32.totalorder %s131, %s134
    %p143 = scmp.eq.s32.totalorder %s16, 1
    %p144 = por %p142, %p143
    %p145 = scmp.ne.s32.totalorder %s134, %s135
    %p146 = scmp.eq.s32.totalorder %s16, 0
    %p147 = por %p145, %p146
    %p148 = scmp.ne.s32.totalorder %s134, %s135
    %p149 = scmp.eq.s32.totalorder %s17, 1
    %p150 = por %p148, %p149
    %p152 = scmp.ne.s32.totalorder %s135, %s151
    %p153 = scmp.eq.s32.totalorder %s17, 0
    %p154 = por %p152, %p153
    %p155 = scmp.le.s32.totalorder 1, %s11
    %p156 = scmp.lt.s32.totalorder %s11, 3
    %p157 = pnand %p155, %p156
    %p158 = pneg %p157
    // Predicated region
    $region9: #{tpu_custom_call.1} parent=5 // pred_check
      _
    $region10: #{tpu_custom_call.1} parent=5 // pred_check_branch
      %160 = sbr.rel (%p157) target = $region12
    $region11: #{tpu_custom_call.1} parent=5 // pred_region
      %s161 = ssub.s32 %s11, 1
      // Predicated region
      $region13: #{tpu_custom_call.1} parent=11 // pred_check
        %p162 = pneg %p58
      $region14: #{tpu_custom_call.1} parent=11 // pred_check_branch
        %164 = sbr.rel (%p162) target = $region16
      $region15: #{tpu_custom_call.1} parent=11 // pred_region
        _
      $region16: #{tpu_custom_call.1} parent=11 // pred_fallthru
        _
      // Predicated region
      $region17: #{tpu_custom_call.1} parent=11 // pred_check
        %p165 = pneg %p79
      $region18: #{tpu_custom_call.1} parent=11 // pred_check_branch
        %167 = sbr.rel (%p165) target = $region20
      $region19: #{tpu_custom_call.1} parent=11 // pred_region
        _
      $region20: #{tpu_custom_call.1} parent=11 // pred_fallthru
        _
      // Predicated region
      $region21: #{tpu_custom_call.1} parent=11 // pred_check
        %p168 = pneg %p100
      $region22: #{tpu_custom_call.1} parent=11 // pred_check_branch
        %170 = sbr.rel (%p168) target = $region24
      $region23: #{tpu_custom_call.1} parent=11 // pred_region
        _
      $region24: #{tpu_custom_call.1} parent=11 // pred_fallthru
        _
      // Predicated region
      $region25: #{tpu_custom_call.1} parent=11 // pred_check
        %p171 = pneg %p121
      $region26: #{tpu_custom_call.1} parent=11 // pred_check_branch
        %173 = sbr.rel (%p171) target = $region28
      $region27: #{tpu_custom_call.1} parent=11 // pred_region
        _
      $region28: #{tpu_custom_call.1} parent=11 // pred_fallthru
        _
    $region12: #{tpu_custom_call.1} parent=5 // pred_fallthru
      _
    %p174 = scmp.lt.s32.totalorder %s11, 2
    // Predicated region
    $region29: #{tpu_custom_call.1} parent=5 // pred_check
      %p175 = pneg %p174
    $region30: #{tpu_custom_call.1} parent=5 // pred_check_branch
      %177 = sbr.rel (%p175) target = $region32
    $region31: #{tpu_custom_call.1} parent=5 // pred_region
      // Predicated region
      $region33: #{tpu_custom_call.1} parent=31 // pred_check
        %p178 = pneg %p31
      $region34: #{tpu_custom_call.1} parent=31 // pred_check_branch
        %180 = sbr.rel (%p178) target = $region36
      $region35: #{tpu_custom_call.1} parent=31 // pred_region
        %p181 = scmp.lt.s32.totalorder %s11, 1
        %s182 = scalar_select %p181, %s11, 1
        %s183 = smul.addr %s182, 32
        %s184 = smul.addr %s183, 8
        %s185 = scalar_lea.vmem %s0, %s184
      $region36: #{tpu_custom_call.1} parent=31 // pred_fallthru
        _
    $region32: #{tpu_custom_call.1} parent=5 // pred_fallthru
      _
    %p186 = scmp.le.s32.totalorder 1, %s11
    %p187 = scmp.lt.s32.totalorder %s11, 3
    %p188 = pnand %p186, %p187
    %p189 = pneg %p188
    // Predicated region
    $region37: #{tpu_custom_call.1} parent=5 // pred_check
      _
    $region38: #{tpu_custom_call.1} parent=5 // pred_check_branch
      %191 = sbr.rel (%p188) target = $region40
    $region39: #{tpu_custom_call.1} parent=5 // pred_region
      %s192 = ssub.s32 %s11, 1
      %p193 = scmp.lt.s32.totalorder %s16, 1
      %s194 = scalar_select %p193, %s16, 1
      %s195 = smul.addr %s194, 32
      %s196 = smul.addr %s195, 8
      %s197 = scalar_lea.vmem %s0, %s196
      %p198 = pneg %p37
      %p199 = pneg %p34
      %p200 = pneg %p58
      %p201 = pneg %p55
      %p202 = pneg %p79
      %p203 = pneg %p76
      %p204 = pneg %p100
      %p205 = pneg %p97
      %p206 = pneg %p121
      %p207 = pneg %p118
      %p208 = pneg %p147
      %p209 = pneg %p144
      %p210 = scmp.lt.s32.totalorder %s16, 1
      %s211 = scalar_select %p210, %s16, 1
      %s212 = smul.addr %s211, 32
      %s213 = smul.addr %s212, 8
      %s214 = scalar_lea.vmem %s5, %s213
      %p215 = scmp.lt.s32.totalorder %s16, 1
      %s216 = scalar_select %p215, %s16, 1
      %s217 = smul.addr %s216, 32
      %s218 = smul.addr %s217, 8
      %s219 = scalar_lea.vmem %s0, %s218
      %p220 = scmp.lt.s32.totalorder %s16, 1
      %s221 = scalar_select %p220, %s16, 1
      %s222 = smul.addr %s221, 32
      %s223 = smul.addr %s222, 8
      %s224 = scalar_lea.vmem %s5, %s223
      %v225 = vld [vmem:[%s219] sm:$0xff]
      %v226 = vld [vmem:[%s219 + $0x8] sm:$0xff]
      %v227 = vld [vmem:[%s219 + $0x10] sm:$0xff]
      %v228 = vld [vmem:[%s219 + $0x18] sm:$0xff]
      %v229 = vld [vmem:[%s219 + $0x20] sm:$0xff]
      %v230 = vld [vmem:[%s219 + $0x28] sm:$0xff]
      %v231 = vld [vmem:[%s219 + $0x30] sm:$0xff]
      %v232 = vld [vmem:[%s219 + $0x38] sm:$0xff]
      %v233 = vld [vmem:[%s219 + $0x40] sm:$0xff]
      %v234 = vld [vmem:[%s219 + $0x48] sm:$0xff]
      %v235 = vld [vmem:[%s219 + $0x50] sm:$0xff]
      %v236 = vld [vmem:[%s219 + $0x58] sm:$0xff]
      %v237 = vld [vmem:[%s219 + $0x60] sm:$0xff]
      %v238 = vld [vmem:[%s219 + $0x68] sm:$0xff]
      %v239 = vld [vmem:[%s219 + $0x70] sm:$0xff]
      %v240 = vld [vmem:[%s219 + $0x78] sm:$0xff]
      %v241 = vld [vmem:[%s219 + $0x80] sm:$0xff]
      %v242 = vld [vmem:[%s219 + $0x88] sm:$0xff]
      %v243 = vld [vmem:[%s219 + $0x90] sm:$0xff]
      %v244 = vld [vmem:[%s219 + $0x98] sm:$0xff]
      %v245 = vld [vmem:[%s219 + $0xa0] sm:$0xff]
      %v246 = vld [vmem:[%s219 + $0xa8] sm:$0xff]
      %v247 = vld [vmem:[%s219 + $0xb0] sm:$0xff]
      %v248 = vld [vmem:[%s219 + $0xb8] sm:$0xff]
      %v249 = vld [vmem:[%s219 + $0xc0] sm:$0xff]
      %v250 = vld [vmem:[%s219 + $0xc8] sm:$0xff]
      %v251 = vld [vmem:[%s219 + $0xd0] sm:$0xff]
      %v252 = vld [vmem:[%s219 + $0xd8] sm:$0xff]
      %v253 = vld [vmem:[%s219 + $0xe0] sm:$0xff]
      %v254 = vld [vmem:[%s219 + $0xe8] sm:$0xff]
      %v255 = vld [vmem:[%s219 + $0xf0] sm:$0xff]
      %v256 = vld [vmem:[%s219 + $0xf8] sm:$0xff]
      %s257 = scalar_lea.vmem [#allocation2], 24
      %vm258 = vcmask 31744
      %259 = vst.msk [vmem:[%s257 + $0x1] sm:$0xff] %vm258, %v225
      %260 = vst.msk [vmem:[%s257 + $0x9] sm:$0xff] %vm258, %v226
      %261 = vst.msk [vmem:[%s257 + $0x19] sm:$0xff] %vm258, %v227
      %262 = vst.msk [vmem:[%s257 + $0x21] sm:$0xff] %vm258, %v228
      %263 = vst.msk [vmem:[%s257 + $0x31] sm:$0xff] %vm258, %v229
      %264 = vst.msk [vmem:[%s257 + $0x39] sm:$0xff] %vm258, %v230
      %265 = vst.msk [vmem:[%s257 + $0x49] sm:$0xff] %vm258, %v231
      %266 = vst.msk [vmem:[%s257 + $0x51] sm:$0xff] %vm258, %v232
      %267 = vst.msk [vmem:[%s257 + $0x61] sm:$0xff] %vm258, %v233
      %268 = vst.msk [vmem:[%s257 + $0x69] sm:$0xff] %vm258, %v234
      %269 = vst.msk [vmem:[%s257 + $0x79] sm:$0xff] %vm258, %v235
      %270 = vst.msk [vmem:[%s257 + $0x81] sm:$0xff] %vm258, %v236
      %271 = vst.msk [vmem:[%s257 + $0x91] sm:$0xff] %vm258, %v237
      %272 = vst.msk [vmem:[%s257 + $0x99] sm:$0xff] %vm258, %v238
      %273 = vst.msk [vmem:[%s257 + $0xa9] sm:$0xff] %vm258, %v239
      %274 = vst.msk [vmem:[%s257 + $0xb1] sm:$0xff] %vm258, %v240
      %275 = vst.msk [vmem:[%s257 + $0xc1] sm:$0xff] %vm258, %v241
      %276 = vst.msk [vmem:[%s257 + $0xc9] sm:$0xff] %vm258, %v242
      %277 = vst.msk [vmem:[%s257 + $0xd9] sm:$0xff] %vm258, %v243
      %278 = vst.msk [vmem:[%s257 + $0xe1] sm:$0xff] %vm258, %v244
      %279 = vst.msk [vmem:[%s257 + $0xf1] sm:$0xff] %vm258, %v245
      %280 = vst.msk [vmem:[%s257 + $0xf9] sm:$0xff] %vm258, %v246
      %281 = vst.msk [vmem:[%s257 + $0x109] sm:$0xff] %vm258, %v247
      %282 = vst.msk [vmem:[%s257 + $0x111] sm:$0xff] %vm258, %v248
      %283 = vst.msk [vmem:[%s257 + $0x121] sm:$0xff] %vm258, %v249
      %284 = vst.msk [vmem:[%s257 + $0x129] sm:$0xff] %vm258, %v250
      %285 = vst.msk [vmem:[%s257 + $0x139] sm:$0xff] %vm258, %v251
      %286 = vst.msk [vmem:[%s257 + $0x141] sm:$0xff] %vm258, %v252
      %287 = vst.msk [vmem:[%s257 + $0x151] sm:$0xff] %vm258, %v253
      %288 = vst.msk [vmem:[%s257 + $0x159] sm:$0xff] %vm258, %v254
      %289 = vst.msk [vmem:[%s257 + $0x169] sm:$0xff] %vm258, %v255
      %290 = vst.msk [vmem:[%s257 + $0x171] sm:$0xff] %vm258, %v256
      %s291 = scalar_lea.vmem [#allocation2], 48
      %v292 = vld [vmem:[%s291 + $0x1] sm:$0xff]
      %v293 = vld [vmem:[%s291 + $0x9] sm:$0xff]
      %294 = vst.msk [vmem:[#allocation2 + $0x1] sm:$0xff] %vm258, %v292
      %295 = vst.msk [vmem:[#allocation2 + $0x9] sm:$0xff] %vm258, %v293
      %s296 = scalar_lea.vmem [#allocation2], 360
      %v297 = vld [vmem:[%s296 + $0x1] sm:$0xff]
      %v298 = vld [vmem:[%s296 + $0x9] sm:$0xff]
      %s299 = scalar_lea.vmem [#allocation2], 408
      %300 = vst.msk [vmem:[%s299 + $0x1] sm:$0xff] %vm258, %v297
      %301 = vst.msk [vmem:[%s299 + $0x9] sm:$0xff] %vm258, %v298
      %v302 = vld [vmem:[#allocation2 + $0x2] sm:$0x1]
      %v303 = vld [vmem:[#allocation2 + $0x1a] sm:$0x1]
      %v304 = vld [vmem:[#allocation2 + $0x32] sm:$0x1]
      %v305 = vld [vmem:[#allocation2 + $0x4a] sm:$0x1]
      %v306 = vld [vmem:[#allocation2 + $0x62] sm:$0x1]
      %v307 = vld [vmem:[#allocation2 + $0x7a] sm:$0x1]
      %v308 = vld [vmem:[#allocation2 + $0x92] sm:$0x1]
      %v309 = vld [vmem:[#allocation2 + $0xaa] sm:$0x1]
      %v310 = vld [vmem:[#allocation2 + $0xc2] sm:$0x1]
      %v311 = vld [vmem:[#allocation2 + $0xda] sm:$0x1]
      %v312 = vld [vmem:[#allocation2 + $0xf2] sm:$0x1]
      %v313 = vld [vmem:[#allocation2 + $0x10a] sm:$0x1]
      %v314 = vld [vmem:[#allocation2 + $0x122] sm:$0x1]
      %v315 = vld [vmem:[#allocation2 + $0x13a] sm:$0x1]
      %v316 = vld [vmem:[#allocation2 + $0x152] sm:$0x1]
      %v317 = vld [vmem:[#allocation2 + $0x16a] sm:$0x1]
      %v318 = vld [vmem:[#allocation2 + $0x182] sm:$0x1]
      %v319 = vld [vmem:[#allocation2 + $0x19a] sm:$0x1]
      %vm320 = vcmask 24576
      %321 = vst.msk [vmem:[#allocation2] sm:$0x1] %vm320, %v302
      %322 = vst.msk [vmem:[#allocation2 + $0x18] sm:$0x1] %vm320, %v303
      %323 = vst.msk [vmem:[#allocation2 + $0x30] sm:$0x1] %vm320, %v304
      %324 = vst.msk [vmem:[#allocation2 + $0x48] sm:$0x1] %vm320, %v305
      %325 = vst.msk [vmem:[#allocation2 + $0x60] sm:$0x1] %vm320, %v306
      %326 = vst.msk [vmem:[#allocation2 + $0x78] sm:$0x1] %vm320, %v307
      %327 = vst.msk [vmem:[#allocation2 + $0x90] sm:$0x1] %vm320, %v308
      %328 = vst.msk [vmem:[#allocation2 + $0xa8] sm:$0x1] %vm320, %v309
      %329 = vst.msk [vmem:[#allocation2 + $0xc0] sm:$0x1] %vm320, %v310
      %330 = vst.msk [vmem:[#allocation2 + $0xd8] sm:$0x1] %vm320, %v311
      %331 = vst.msk [vmem:[#allocation2 + $0xf0] sm:$0x1] %vm320, %v312
      %332 = vst.msk [vmem:[#allocation2 + $0x108] sm:$0x1] %vm320, %v313
      %333 = vst.msk [vmem:[#allocation2 + $0x120] sm:$0x1] %vm320, %v314
      %334 = vst.msk [vmem:[#allocation2 + $0x138] sm:$0x1] %vm320, %v315
      %335 = vst.msk [vmem:[#allocation2 + $0x150] sm:$0x1] %vm320, %v316
      %336 = vst.msk [vmem:[#allocation2 + $0x168] sm:$0x1] %vm320, %v317
      %337 = vst.msk [vmem:[#allocation2 + $0x180] sm:$0x1] %vm320, %v318
      %338 = vst.msk [vmem:[#allocation2 + $0x198] sm:$0x1] %vm320, %v319
      %v339 = vld [vmem:[#allocation2 + $0xf] sm:$0x1]
      %v340 = vld [vmem:[#allocation2 + $0x27] sm:$0x1]
      %v341 = vld [vmem:[#allocation2 + $0x3f] sm:$0x1]
      %v342 = vld [vmem:[#allocation2 + $0x57] sm:$0x1]
      %v343 = vld [vmem:[#allocation2 + $0x6f] sm:$0x1]
      %v344 = vld [vmem:[#allocation2 + $0x87] sm:$0x1]
      %v345 = vld [vmem:[#allocation2 + $0x9f] sm:$0x1]
      %v346 = vld [vmem:[#allocation2 + $0xb7] sm:$0x1]
      %v347 = vld [vmem:[#allocation2 + $0xcf] sm:$0x1]
      %v348 = vld [vmem:[#allocation2 + $0xe7] sm:$0x1]
      %v349 = vld [vmem:[#allocation2 + $0xff] sm:$0x1]
      %v350 = vld [vmem:[#allocation2 + $0x117] sm:$0x1]
      %v351 = vld [vmem:[#allocation2 + $0x12f] sm:$0x1]
      %v352 = vld [vmem:[#allocation2 + $0x147] sm:$0x1]
      %v353 = vld [vmem:[#allocation2 + $0x15f] sm:$0x1]
      %v354 = vld [vmem:[#allocation2 + $0x177] sm:$0x1]
      %v355 = vld [vmem:[#allocation2 + $0x18f] sm:$0x1]
      %v356 = vld [vmem:[#allocation2 + $0x1a7] sm:$0x1]
      %357 = vst.msk [vmem:[#allocation2 + $0x11] sm:$0x1] %vm320, %v339
      %358 = vst.msk [vmem:[#allocation2 + $0x29] sm:$0x1] %vm320, %v340
      %359 = vst.msk [vmem:[#allocation2 + $0x41] sm:$0x1] %vm320, %v341
      %360 = vst.msk [vmem:[#allocation2 + $0x59] sm:$0x1] %vm320, %v342
      %361 = vst.msk [vmem:[#allocation2 + $0x71] sm:$0x1] %vm320, %v343
      %362 = vst.msk [vmem:[#allocation2 + $0x89] sm:$0x1] %vm320, %v344
      %363 = vst.msk [vmem:[#allocation2 + $0xa1] sm:$0x1] %vm320, %v345
      %364 = vst.msk [vmem:[#allocation2 + $0xb9] sm:$0x1] %vm320, %v346
      %365 = vst.msk [vmem:[#allocation2 + $0xd1] sm:$0x1] %vm320, %v347
      %366 = vst.msk [vmem:[#allocation2 + $0xe9] sm:$0x1] %vm320, %v348
      %367 = vst.msk [vmem:[#allocation2 + $0x101] sm:$0x1] %vm320, %v349
      %368 = vst.msk [vmem:[#allocation2 + $0x119] sm:$0x1] %vm320, %v350
      %369 = vst.msk [vmem:[#allocation2 + $0x131] sm:$0x1] %vm320, %v351
      %370 = vst.msk [vmem:[#allocation2 + $0x149] sm:$0x1] %vm320, %v352
      %371 = vst.msk [vmem:[#allocation2 + $0x161] sm:$0x1] %vm320, %v353
      %372 = vst.msk [vmem:[#allocation2 + $0x179] sm:$0x1] %vm320, %v354
      %373 = vst.msk [vmem:[#allocation2 + $0x191] sm:$0x1] %vm320, %v355
      %374 = vst.msk [vmem:[#allocation2 + $0x1a9] sm:$0x1] %vm320, %v356
      %375 = vst.msk [vmem:[#allocation5] sm:$0x1] %vm320, 0.0
      %376 = vst.msk [vmem:[#allocation6] sm:$0x1] %vm320, 0.0
      %v377 = vld [vmem:[#allocation2] sm:$0xff]
      %v378 = vld [vmem:[#allocation2 + $0x8] sm:$0xff]
      %v379 = vld [vmem:[#allocation2 + $0x18] sm:$0xff]
      %v380 = vld [vmem:[#allocation2 + $0x20] sm:$0xff]
      %v381 = vld [vmem:[#allocation2 + $0x30] sm:$0xff]
      %v382 = vld [vmem:[#allocation2 + $0x38] sm:$0xff]
      %v383 = vld [vmem:[#allocation2 + $0x48] sm:$0xff]
      %v384 = vld [vmem:[#allocation2 + $0x50] sm:$0xff]
      %v385 = vld [vmem:[#allocation2 + $0x60] sm:$0xff]
      %v386 = vld [vmem:[#allocation2 + $0x68] sm:$0xff]
      %v387 = vld [vmem:[#allocation2 + $0x78] sm:$0xff]
      %v388 = vld [vmem:[#allocation2 + $0x80] sm:$0xff]
      %v389 = vld [vmem:[#allocation2 + $0x90] sm:$0xff]
      %v390 = vld [vmem:[#allocation2 + $0x98] sm:$0xff]
      %v391 = vld [vmem:[#allocation2 + $0xa8] sm:$0xff]
      %v392 = vld [vmem:[#allocation2 + $0xb0] sm:$0xff]
      %v393 = vld [vmem:[#allocation2 + $0xc0] sm:$0xff]
      %v394 = vld [vmem:[#allocation2 + $0xc8] sm:$0xff]
      %v395 = vld [vmem:[#allocation2 + $0xd8] sm:$0xff]
      %v396 = vld [vmem:[#allocation2 + $0xe0] sm:$0xff]
      %v397 = vld [vmem:[#allocation2 + $0xf0] sm:$0xff]
      %v398 = vld [vmem:[#allocation2 + $0xf8] sm:$0xff]
      %v399 = vld [vmem:[#allocation2 + $0x108] sm:$0xff]
      %v400 = vld [vmem:[#allocation2 + $0x110] sm:$0xff]
      %v401 = vld [vmem:[#allocation2 + $0x120] sm:$0xff]
      %v402 = vld [vmem:[#allocation2 + $0x128] sm:$0xff]
      %v403 = vld [vmem:[#allocation2 + $0x138] sm:$0xff]
      %v404 = vld [vmem:[#allocation2 + $0x140] sm:$0xff]
      %v405 = vld [vmem:[#allocation2 + $0x150] sm:$0xff]
      %v406 = vld [vmem:[#allocation2 + $0x158] sm:$0xff]
      %v407 = vld [vmem:[#allocation2 + $0x168] sm:$0xff]
      %v408 = vld [vmem:[#allocation2 + $0x170] sm:$0xff]
      %409 = vst.msk [vmem:[#allocation3] sm:$0xff] %vm258, %v377
      %410 = vst.msk [vmem:[#allocation3 + $0x8] sm:$0xff] %vm258, %v378
      %411 = vst.msk [vmem:[#allocation3 + $0x10] sm:$0xff] %vm258, %v379
      %412 = vst.msk [vmem:[#allocation3 + $0x18] sm:$0xff] %vm258, %v380
      %413 = vst.msk [vmem:[#allocation3 + $0x20] sm:$0xff] %vm258, %v381
      %414 = vst.msk [vmem:[#allocation3 + $0x28] sm:$0xff] %vm258, %v382
      %415 = vst.msk [vmem:[#allocation3 + $0x30] sm:$0xff] %vm258, %v383
      %416 = vst.msk [vmem:[#allocation3 + $0x38] sm:$0xff] %vm258, %v384
      %417 = vst.msk [vmem:[#allocation3 + $0x40] sm:$0xff] %vm258, %v385
      %418 = vst.msk [vmem:[#allocation3 + $0x48] sm:$0xff] %vm258, %v386
      %419 = vst.msk [vmem:[#allocation3 + $0x50] sm:$0xff] %vm258, %v387
      %420 = vst.msk [vmem:[#allocation3 + $0x58] sm:$0xff] %vm258, %v388
      %421 = vst.msk [vmem:[#allocation3 + $0x60] sm:$0xff] %vm258, %v389
      %422 = vst.msk [vmem:[#allocation3 + $0x68] sm:$0xff] %vm258, %v390
      %423 = vst.msk [vmem:[#allocation3 + $0x70] sm:$0xff] %vm258, %v391
      %424 = vst.msk [vmem:[#allocation3 + $0x78] sm:$0xff] %vm258, %v392
      %425 = vst.msk [vmem:[#allocation3 + $0x80] sm:$0xff] %vm258, %v393
      %426 = vst.msk [vmem:[#allocation3 + $0x88] sm:$0xff] %vm258, %v394
      %427 = vst.msk [vmem:[#allocation3 + $0x90] sm:$0xff] %vm258, %v395
      %428 = vst.msk [vmem:[#allocation3 + $0x98] sm:$0xff] %vm258, %v396
      %429 = vst.msk [vmem:[#allocation3 + $0xa0] sm:$0xff] %vm258, %v397
      %430 = vst.msk [vmem:[#allocation3 + $0xa8] sm:$0xff] %vm258, %v398
      %431 = vst.msk [vmem:[#allocation3 + $0xb0] sm:$0xff] %vm258, %v399
      %432 = vst.msk [vmem:[#allocation3 + $0xb8] sm:$0xff] %vm258, %v400
      %433 = vst.msk [vmem:[#allocation3 + $0xc0] sm:$0xff] %vm258, %v401
      %434 = vst.msk [vmem:[#allocation3 + $0xc8] sm:$0xff] %vm258, %v402
      %435 = vst.msk [vmem:[#allocation3 + $0xd0] sm:$0xff] %vm258, %v403
      %436 = vst.msk [vmem:[#allocation3 + $0xd8] sm:$0xff] %vm258, %v404
      %437 = vst.msk [vmem:[#allocation3 + $0xe0] sm:$0xff] %vm258, %v405
      %438 = vst.msk [vmem:[#allocation3 + $0xe8] sm:$0xff] %vm258, %v406
      %439 = vst.msk [vmem:[#allocation3 + $0xf0] sm:$0xff] %vm258, %v407
      %440 = vst.msk [vmem:[#allocation3 + $0xf8] sm:$0xff] %vm258, %v408
      %v441 = vld [vmem:[#allocation2 + $0x1] sm:$0xff]
      %v442 = vld [vmem:[#allocation2 + $0x9] sm:$0xff]
      %v443 = vld [vmem:[#allocation2 + $0x19] sm:$0xff]
      %v444 = vld [vmem:[#allocation2 + $0x21] sm:$0xff]
      %v445 = vld [vmem:[#allocation2 + $0x31] sm:$0xff]
      %v446 = vld [vmem:[#allocation2 + $0x39] sm:$0xff]
      %v447 = vld [vmem:[#allocation2 + $0x49] sm:$0xff]
      %v448 = vld [vmem:[#allocation2 + $0x51] sm:$0xff]
      %v449 = vld [vmem:[#allocation2 + $0x61] sm:$0xff]
      %v450 = vld [vmem:[#allocation2 + $0x69] sm:$0xff]
      %v451 = vld [vmem:[#allocation2 + $0x79] sm:$0xff]
      %v452 = vld [vmem:[#allocation2 + $0x81] sm:$0xff]
      %v453 = vld [vmem:[#allocation2 + $0x91] sm:$0xff]
      %v454 = vld [vmem:[#allocation2 + $0x99] sm:$0xff]
      %v455 = vld [vmem:[#allocation2 + $0xa9] sm:$0xff]
      %v456 = vld [vmem:[#allocation2 + $0xb1] sm:$0xff]
      %v457 = vld [vmem:[#allocation2 + $0xc1] sm:$0xff]
      %v458 = vld [vmem:[#allocation2 + $0xc9] sm:$0xff]
      %v459 = vld [vmem:[#allocation2 + $0xd9] sm:$0xff]
      %v460 = vld [vmem:[#allocation2 + $0xe1] sm:$0xff]
      %v461 = vld [vmem:[#allocation2 + $0xf1] sm:$0xff]
      %v462 = vld [vmem:[#allocation2 + $0xf9] sm:$0xff]
      %v463 = vld [vmem:[#allocation2 + $0x109] sm:$0xff]
      %v464 = vld [vmem:[#allocation2 + $0x111] sm:$0xff]
      %v465 = vld [vmem:[#allocation2 + $0x121] sm:$0xff]
      %v466 = vld [vmem:[#allocation2 + $0x129] sm:$0xff]
      %v467 = vld [vmem:[#allocation2 + $0x139] sm:$0xff]
      %v468 = vld [vmem:[#allocation2 + $0x141] sm:$0xff]
      %v469 = vld [vmem:[#allocation2 + $0x151] sm:$0xff]
      %v470 = vld [vmem:[#allocation2 + $0x159] sm:$0xff]
      %v471 = vld [vmem:[#allocation2 + $0x169] sm:$0xff]
      %v472 = vld [vmem:[#allocation2 + $0x171] sm:$0xff]
      %505 = vrot.lane.b32.xlu0 %v441, 4
      %v506 = vpop.permute.xlu0 %505
      %507 = vrot.lane.b32.xlu0 %v442, 4
      %v508 = vpop.permute.xlu0 %507
      %509 = vrot.lane.b32.xlu0 %v443, 4
      %v510 = vpop.permute.xlu0 %509
      %511 = vrot.lane.b32.xlu0 %v444, 4
      %v512 = vpop.permute.xlu0 %511
      %513 = vrot.lane.b32.xlu0 %v445, 4
      %v514 = vpop.permute.xlu0 %513
      %515 = vrot.lane.b32.xlu0 %v446, 4
      %v516 = vpop.permute.xlu0 %515
      %517 = vrot.lane.b32.xlu0 %v447, 4
      %v518 = vpop.permute.xlu0 %517
      %519 = vrot.lane.b32.xlu0 %v448, 4
      %v520 = vpop.permute.xlu0 %519
      %521 = vrot.lane.b32.xlu0 %v449, 4
      %v522 = vpop.permute.xlu0 %521
      %523 = vrot.lane.b32.xlu0 %v450, 4
      %v524 = vpop.permute.xlu0 %523
      %525 = vrot.lane.b32.xlu0 %v451, 4
      %v526 = vpop.permute.xlu0 %525
      %527 = vrot.lane.b32.xlu0 %v452, 4
      %v528 = vpop.permute.xlu0 %527
      %529 = vrot.lane.b32.xlu0 %v453, 4
      %v530 = vpop.permute.xlu0 %529
      %531 = vrot.lane.b32.xlu0 %v454, 4
      %v532 = vpop.permute.xlu0 %531
      %533 = vrot.lane.b32.xlu0 %v455, 4
      %v534 = vpop.permute.xlu0 %533
      %535 = vrot.lane.b32.xlu0 %v456, 4
      %v536 = vpop.permute.xlu0 %535
      %537 = vrot.lane.b32.xlu0 %v457, 4
      %v538 = vpop.permute.xlu0 %537
      %539 = vrot.lane.b32.xlu0 %v458, 4
      %v540 = vpop.permute.xlu0 %539
      %541 = vrot.lane.b32.xlu0 %v459, 4
      %v542 = vpop.permute.xlu0 %541
      %543 = vrot.lane.b32.xlu0 %v460, 4
      %v544 = vpop.permute.xlu0 %543
      %545 = vrot.lane.b32.xlu0 %v461, 4
      %v546 = vpop.permute.xlu0 %545
      %547 = vrot.lane.b32.xlu0 %v462, 4
      %v548 = vpop.permute.xlu0 %547
      %549 = vrot.lane.b32.xlu0 %v463, 4
      %v550 = vpop.permute.xlu0 %549
      %551 = vrot.lane.b32.xlu0 %v464, 4
      %v552 = vpop.permute.xlu0 %551
      %553 = vrot.lane.b32.xlu0 %v465, 4
      %v554 = vpop.permute.xlu0 %553
      %555 = vrot.lane.b32.xlu0 %v466, 4
      %v556 = vpop.permute.xlu0 %555
      %557 = vrot.lane.b32.xlu0 %v467, 4
      %v558 = vpop.permute.xlu0 %557
      %559 = vrot.lane.b32.xlu0 %v468, 4
      %v560 = vpop.permute.xlu0 %559
      %561 = vrot.lane.b32.xlu0 %v469, 4
      %v562 = vpop.permute.xlu0 %561
      %563 = vrot.lane.b32.xlu0 %v470, 4
      %v564 = vpop.permute.xlu0 %563
      %565 = vrot.lane.b32.xlu0 %v471, 4
      %v566 = vpop.permute.xlu0 %565
      %567 = vrot.lane.b32.xlu0 %v472, 4
      %v568 = vpop.permute.xlu0 %567
      %vm601 = vcmask 64544
      %602 = vst.msk [vmem:[#allocation3] sm:$0xff] %vm601, %v506
      %603 = vst.msk [vmem:[#allocation3 + $0x8] sm:$0xff] %vm601, %v508
      %604 = vst.msk [vmem:[#allocation3 + $0x10] sm:$0xff] %vm601, %v510
      %605 = vst.msk [vmem:[#allocation3 + $0x18] sm:$0xff] %vm601, %v512
      %606 = vst.msk [vmem:[#allocation3 + $0x20] sm:$0xff] %vm601, %v514
      %607 = vst.msk [vmem:[#allocation3 + $0x28] sm:$0xff] %vm601, %v516
      %608 = vst.msk [vmem:[#allocation3 + $0x30] sm:$0xff] %vm601, %v518
      %609 = vst.msk [vmem:[#allocation3 + $0x38] sm:$0xff] %vm601, %v520
      %610 = vst.msk [vmem:[#allocation3 + $0x40] sm:$0xff] %vm601, %v522
      %611 = vst.msk [vmem:[#allocation3 + $0x48] sm:$0xff] %vm601, %v524
      %612 = vst.msk [vmem:[#allocation3 + $0x50] sm:$0xff] %vm601, %v526
      %613 = vst.msk [vmem:[#allocation3 + $0x58] sm:$0xff] %vm601, %v528
      %614 = vst.msk [vmem:[#allocation3 + $0x60] sm:$0xff] %vm601, %v530
      %615 = vst.msk [vmem:[#allocation3 + $0x68] sm:$0xff] %vm601, %v532
      %616 = vst.msk [vmem:[#allocation3 + $0x70] sm:$0xff] %vm601, %v534
      %617 = vst.msk [vmem:[#allocation3 + $0x78] sm:$0xff] %vm601, %v536
      %618 = vst.msk [vmem:[#allocation3 + $0x80] sm:$0xff] %vm601, %v538
      %619 = vst.msk [vmem:[#allocation3 + $0x88] sm:$0xff] %vm601, %v540
      %620 = vst.msk [vmem:[#allocation3 + $0x90] sm:$0xff] %vm601, %v542
      %621 = vst.msk [vmem:[#allocation3 + $0x98] sm:$0xff] %vm601, %v544
      %622 = vst.msk [vmem:[#allocation3 + $0xa0] sm:$0xff] %vm601, %v546
      %623 = vst.msk [vmem:[#allocation3 + $0xa8] sm:$0xff] %vm601, %v548
      %624 = vst.msk [vmem:[#allocation3 + $0xb0] sm:$0xff] %vm601, %v550
      %625 = vst.msk [vmem:[#allocation3 + $0xb8] sm:$0xff] %vm601, %v552
      %626 = vst.msk [vmem:[#allocation3 + $0xc0] sm:$0xff] %vm601, %v554
      %627 = vst.msk [vmem:[#allocation3 + $0xc8] sm:$0xff] %vm601, %v556
      %628 = vst.msk [vmem:[#allocation3 + $0xd0] sm:$0xff] %vm601, %v558
      %629 = vst.msk [vmem:[#allocation3 + $0xd8] sm:$0xff] %vm601, %v560
      %630 = vst.msk [vmem:[#allocation3 + $0xe0] sm:$0xff] %vm601, %v562
      %631 = vst.msk [vmem:[#allocation3 + $0xe8] sm:$0xff] %vm601, %v564
      %632 = vst.msk [vmem:[#allocation3 + $0xf0] sm:$0xff] %vm601, %v566
      %633 = vst.msk [vmem:[#allocation3 + $0xf8] sm:$0xff] %vm601, %v568
      %v634 = vld [vmem:[#allocation2 + $0x2] sm:$0xff]
      %v635 = vld [vmem:[#allocation2 + $0xa] sm:$0xff]
      %v636 = vld [vmem:[#allocation2 + $0x1a] sm:$0xff]
      %v637 = vld [vmem:[#allocation2 + $0x22] sm:$0xff]
      %v638 = vld [vmem:[#allocation2 + $0x32] sm:$0xff]
      %v639 = vld [vmem:[#allocation2 + $0x3a] sm:$0xff]
      %v640 = vld [vmem:[#allocation2 + $0x4a] sm:$0xff]
      %v641 = vld [vmem:[#allocation2 + $0x52] sm:$0xff]
      %v642 = vld [vmem:[#allocation2 + $0x62] sm:$0xff]
      %v643 = vld [vmem:[#allocation2 + $0x6a] sm:$0xff]
      %v644 = vld [vmem:[#allocation2 + $0x7a] sm:$0xff]
      %v645 = vld [vmem:[#allocation2 + $0x82] sm:$0xff]
      %v646 = vld [vmem:[#allocation2 + $0x92] sm:$0xff]
      %v647 = vld [vmem:[#allocation2 + $0x9a] sm:$0xff]
      %v648 = vld [vmem:[#allocation2 + $0xaa] sm:$0xff]
      %v649 = vld [vmem:[#allocation2 + $0xb2] sm:$0xff]
      %v650 = vld [vmem:[#allocation2 + $0xc2] sm:$0xff]
      %v651 = vld [vmem:[#allocation2 + $0xca] sm:$0xff]
      %v652 = vld [vmem:[#allocation2 + $0xda] sm:$0xff]
      %v653 = vld [vmem:[#allocation2 + $0xe2] sm:$0xff]
      %v654 = vld [vmem:[#allocation2 + $0xf2] sm:$0xff]
      %v655 = vld [vmem:[#allocation2 + $0xfa] sm:$0xff]
      %v656 = vld [vmem:[#allocation2 + $0x10a] sm:$0xff]
      %v657 = vld [vmem:[#allocation2 + $0x112] sm:$0xff]
      %v658 = vld [vmem:[#allocation2 + $0x122] sm:$0xff]
      %v659 = vld [vmem:[#allocation2 + $0x12a] sm:$0xff]
      %v660 = vld [vmem:[#allocation2 + $0x13a] sm:$0xff]
      %v661 = vld [vmem:[#allocation2 + $0x142] sm:$0xff]
      %v662 = vld [vmem:[#allocation2 + $0x152] sm:$0xff]
      %v663 = vld [vmem:[#allocation2 + $0x15a] sm:$0xff]
      %v664 = vld [vmem:[#allocation2 + $0x16a] sm:$0xff]
      %v665 = vld [vmem:[#allocation2 + $0x172] sm:$0xff]
      %698 = vrot.lane.b32.xlu0 %v634, 8
      %v699 = vpop.permute.xlu0 %698
      %700 = vrot.lane.b32.xlu0 %v635, 8
      %v701 = vpop.permute.xlu0 %700
      %702 = vrot.lane.b32.xlu0 %v636, 8
      %v703 = vpop.permute.xlu0 %702
      %704 = vrot.lane.b32.xlu0 %v637, 8
      %v705 = vpop.permute.xlu0 %704
      %706 = vrot.lane.b32.xlu0 %v638, 8
      %v707 = vpop.permute.xlu0 %706
      %708 = vrot.lane.b32.xlu0 %v639, 8
      %v709 = vpop.permute.xlu0 %708
      %710 = vrot.lane.b32.xlu0 %v640, 8
      %v711 = vpop.permute.xlu0 %710
      %712 = vrot.lane.b32.xlu0 %v641, 8
      %v713 = vpop.permute.xlu0 %712
      %714 = vrot.lane.b32.xlu0 %v642, 8
      %v715 = vpop.permute.xlu0 %714
      %716 = vrot.lane.b32.xlu0 %v643, 8
      %v717 = vpop.permute.xlu0 %716
      %718 = vrot.lane.b32.xlu0 %v644, 8
      %v719 = vpop.permute.xlu0 %718
      %720 = vrot.lane.b32.xlu0 %v645, 8
      %v721 = vpop.permute.xlu0 %720
      %722 = vrot.lane.b32.xlu0 %v646, 8
      %v723 = vpop.permute.xlu0 %722
      %724 = vrot.lane.b32.xlu0 %v647, 8
      %v725 = vpop.permute.xlu0 %724
      %726 = vrot.lane.b32.xlu0 %v648, 8
      %v727 = vpop.permute.xlu0 %726
      %728 = vrot.lane.b32.xlu0 %v649, 8
      %v729 = vpop.permute.xlu0 %728
      %730 = vrot.lane.b32.xlu0 %v650, 8
      %v731 = vpop.permute.xlu0 %730
      %732 = vrot.lane.b32.xlu0 %v651, 8
      %v733 = vpop.permute.xlu0 %732
      %734 = vrot.lane.b32.xlu0 %v652, 8
      %v735 = vpop.permute.xlu0 %734
      %736 = vrot.lane.b32.xlu0 %v653, 8
      %v737 = vpop.permute.xlu0 %736
      %738 = vrot.lane.b32.xlu0 %v654, 8
      %v739 = vpop.permute.xlu0 %738
      %740 = vrot.lane.b32.xlu0 %v655, 8
      %v741 = vpop.permute.xlu0 %740
      %742 = vrot.lane.b32.xlu0 %v656, 8
      %v743 = vpop.permute.xlu0 %742
      %744 = vrot.lane.b32.xlu0 %v657, 8
      %v745 = vpop.permute.xlu0 %744
      %746 = vrot.lane.b32.xlu0 %v658, 8
      %v747 = vpop.permute.xlu0 %746
      %748 = vrot.lane.b32.xlu0 %v659, 8
      %v749 = vpop.permute.xlu0 %748
      %750 = vrot.lane.b32.xlu0 %v660, 8
      %v751 = vpop.permute.xlu0 %750
      %752 = vrot.lane.b32.xlu0 %v661, 8
      %v753 = vpop.permute.xlu0 %752
      %754 = vrot.lane.b32.xlu0 %v662, 8
      %v755 = vpop.permute.xlu0 %754
      %756 = vrot.lane.b32.xlu0 %v663, 8
      %v757 = vpop.permute.xlu0 %756
      %758 = vrot.lane.b32.xlu0 %v664, 8
      %v759 = vpop.permute.xlu0 %758
      %760 = vrot.lane.b32.xlu0 %v665, 8
      %v761 = vpop.permute.xlu0 %760
      %vm794 = vcmask 97344
      %795 = vst.msk [vmem:[#allocation3] sm:$0xff] %vm794, %v699
      %796 = vst.msk [vmem:[#allocation3 + $0x8] sm:$0xff] %vm794, %v701
      %797 = vst.msk [vmem:[#allocation3 + $0x10] sm:$0xff] %vm794, %v703
      %798 = vst.msk [vmem:[#allocation3 + $0x18] sm:$0xff] %vm794, %v705
      %799 = vst.msk [vmem:[#allocation3 + $0x20] sm:$0xff] %vm794, %v707
      %800 = vst.msk [vmem:[#allocation3 + $0x28] sm:$0xff] %vm794, %v709
      %801 = vst.msk [vmem:[#allocation3 + $0x30] sm:$0xff] %vm794, %v711
      %802 = vst.msk [vmem:[#allocation3 + $0x38] sm:$0xff] %vm794, %v713
      %803 = vst.msk [vmem:[#allocation3 + $0x40] sm:$0xff] %vm794, %v715
      %804 = vst.msk [vmem:[#allocation3 + $0x48] sm:$0xff] %vm794, %v717
      %805 = vst.msk [vmem:[#allocation3 + $0x50] sm:$0xff] %vm794, %v719
      %806 = vst.msk [vmem:[#allocation3 + $0x58] sm:$0xff] %vm794, %v721
      %807 = vst.msk [vmem:[#allocation3 + $0x60] sm:$0xff] %vm794, %v723
      %808 = vst.msk [vmem:[#allocation3 + $0x68] sm:$0xff] %vm794, %v725
      %809 = vst.msk [vmem:[#allocation3 + $0x70] sm:$0xff] %vm794, %v727
      %810 = vst.msk [vmem:[#allocation3 + $0x78] sm:$0xff] %vm794, %v729
      %811 = vst.msk [vmem:[#allocation3 + $0x80] sm:$0xff] %vm794, %v731
      %812 = vst.msk [vmem:[#allocation3 + $0x88] sm:$0xff] %vm794, %v733
      %813 = vst.msk [vmem:[#allocation3 + $0x90] sm:$0xff] %vm794, %v735
      %814 = vst.msk [vmem:[#allocation3 + $0x98] sm:$0xff] %vm794, %v737
      %815 = vst.msk [vmem:[#allocation3 + $0xa0] sm:$0xff] %vm794, %v739
      %816 = vst.msk [vmem:[#allocation3 + $0xa8] sm:$0xff] %vm794, %v741
      %817 = vst.msk [vmem:[#allocation3 + $0xb0] sm:$0xff] %vm794, %v743
      %818 = vst.msk [vmem:[#allocation3 + $0xb8] sm:$0xff] %vm794, %v745
      %819 = vst.msk [vmem:[#allocation3 + $0xc0] sm:$0xff] %vm794, %v747
      %820 = vst.msk [vmem:[#allocation3 + $0xc8] sm:$0xff] %vm794, %v749
      %821 = vst.msk [vmem:[#allocation3 + $0xd0] sm:$0xff] %vm794, %v751
      %822 = vst.msk [vmem:[#allocation3 + $0xd8] sm:$0xff] %vm794, %v753
      %823 = vst.msk [vmem:[#allocation3 + $0xe0] sm:$0xff] %vm794, %v755
      %824 = vst.msk [vmem:[#allocation3 + $0xe8] sm:$0xff] %vm794, %v757
      %825 = vst.msk [vmem:[#allocation3 + $0xf0] sm:$0xff] %vm794, %v759
      %826 = vst.msk [vmem:[#allocation3 + $0xf8] sm:$0xff] %vm794, %v761
      %v827 = vld [vmem:[%s257] sm:$0xff]
      %v828 = vld [vmem:[%s257 + $0x8] sm:$0xff]
      %v829 = vld [vmem:[%s257 + $0x18] sm:$0xff]
      %v830 = vld [vmem:[%s257 + $0x20] sm:$0xff]
      %v831 = vld [vmem:[%s257 + $0x30] sm:$0xff]
      %v832 = vld [vmem:[%s257 + $0x38] sm:$0xff]
      %v833 = vld [vmem:[%s257 + $0x48] sm:$0xff]
      %v834 = vld [vmem:[%s257 + $0x50] sm:$0xff]
      %v835 = vld [vmem:[%s257 + $0x60] sm:$0xff]
      %v836 = vld [vmem:[%s257 + $0x68] sm:$0xff]
      %v837 = vld [vmem:[%s257 + $0x78] sm:$0xff]
      %v838 = vld [vmem:[%s257 + $0x80] sm:$0xff]
      %v839 = vld [vmem:[%s257 + $0x90] sm:$0xff]
      %v840 = vld [vmem:[%s257 + $0x98] sm:$0xff]
      %v841 = vld [vmem:[%s257 + $0xa8] sm:$0xff]
      %v842 = vld [vmem:[%s257 + $0xb0] sm:$0xff]
      %v843 = vld [vmem:[%s257 + $0xc0] sm:$0xff]
      %v844 = vld [vmem:[%s257 + $0xc8] sm:$0xff]
      %v845 = vld [vmem:[%s257 + $0xd8] sm:$0xff]
      %v846 = vld [vmem:[%s257 + $0xe0] sm:$0xff]
      %v847 = vld [vmem:[%s257 + $0xf0] sm:$0xff]
      %v848 = vld [vmem:[%s257 + $0xf8] sm:$0xff]
      %v849 = vld [vmem:[%s257 + $0x108] sm:$0xff]
      %v850 = vld [vmem:[%s257 + $0x110] sm:$0xff]
      %v851 = vld [vmem:[%s257 + $0x120] sm:$0xff]
      %v852 = vld [vmem:[%s257 + $0x128] sm:$0xff]
      %v853 = vld [vmem:[%s257 + $0x138] sm:$0xff]
      %v854 = vld [vmem:[%s257 + $0x140] sm:$0xff]
      %v855 = vld [vmem:[%s257 + $0x150] sm:$0xff]
      %v856 = vld [vmem:[%s257 + $0x158] sm:$0xff]
      %v857 = vld [vmem:[%s257 + $0x168] sm:$0xff]
      %v858 = vld [vmem:[%s257 + $0x170] sm:$0xff]
      %891 = vrot.lane.b32.xlu0 %v827, 12
      %v892 = vpop.permute.xlu0 %891
      %893 = vrot.lane.b32.xlu0 %v828, 12
      %v894 = vpop.permute.xlu0 %893
      %895 = vrot.lane.b32.xlu0 %v829, 12
      %v896 = vpop.permute.xlu0 %895
      %897 = vrot.lane.b32.xlu0 %v830, 12
      %v898 = vpop.permute.xlu0 %897
      %899 = vrot.lane.b32.xlu0 %v831, 12
      %v900 = vpop.permute.xlu0 %899
      %901 = vrot.lane.b32.xlu0 %v832, 12
      %v902 = vpop.permute.xlu0 %901
      %903 = vrot.lane.b32.xlu0 %v833, 12
      %v904 = vpop.permute.xlu0 %903
      %905 = vrot.lane.b32.xlu0 %v834, 12
      %v906 = vpop.permute.xlu0 %905
      %907 = vrot.lane.b32.xlu0 %v835, 12
      %v908 = vpop.permute.xlu0 %907
      %909 = vrot.lane.b32.xlu0 %v836, 12
      %v910 = vpop.permute.xlu0 %909
      %911 = vrot.lane.b32.xlu0 %v837, 12
      %v912 = vpop.permute.xlu0 %911
      %913 = vrot.lane.b32.xlu0 %v838, 12
      %v914 = vpop.permute.xlu0 %913
      %915 = vrot.lane.b32.xlu0 %v839, 12
      %v916 = vpop.permute.xlu0 %915
      %917 = vrot.lane.b32.xlu0 %v840, 12
      %v918 = vpop.permute.xlu0 %917
      %919 = vrot.lane.b32.xlu0 %v841, 12
      %v920 = vpop.permute.xlu0 %919
      %921 = vrot.lane.b32.xlu0 %v842, 12
      %v922 = vpop.permute.xlu0 %921
      %923 = vrot.lane.b32.xlu0 %v843, 12
      %v924 = vpop.permute.xlu0 %923
      %925 = vrot.lane.b32.xlu0 %v844, 12
      %v926 = vpop.permute.xlu0 %925
      %927 = vrot.lane.b32.xlu0 %v845, 12
      %v928 = vpop.permute.xlu0 %927
      %929 = vrot.lane.b32.xlu0 %v846, 12
      %v930 = vpop.permute.xlu0 %929
      %931 = vrot.lane.b32.xlu0 %v847, 12
      %v932 = vpop.permute.xlu0 %931
      %933 = vrot.lane.b32.xlu0 %v848, 12
      %v934 = vpop.permute.xlu0 %933
      %935 = vrot.lane.b32.xlu0 %v849, 12
      %v936 = vpop.permute.xlu0 %935
      %937 = vrot.lane.b32.xlu0 %v850, 12
      %v938 = vpop.permute.xlu0 %937
      %939 = vrot.lane.b32.xlu0 %v851, 12
      %v940 = vpop.permute.xlu0 %939
      %941 = vrot.lane.b32.xlu0 %v852, 12
      %v942 = vpop.permute.xlu0 %941
      %943 = vrot.lane.b32.xlu0 %v853, 12
      %v944 = vpop.permute.xlu0 %943
      %945 = vrot.lane.b32.xlu0 %v854, 12
      %v946 = vpop.permute.xlu0 %945
      %947 = vrot.lane.b32.xlu0 %v855, 12
      %v948 = vpop.permute.xlu0 %947
      %949 = vrot.lane.b32.xlu0 %v856, 12
      %v950 = vpop.permute.xlu0 %949
      %951 = vrot.lane.b32.xlu0 %v857, 12
      %v952 = vpop.permute.xlu0 %951
      %953 = vrot.lane.b32.xlu0 %v858, 12
      %v954 = vpop.permute.xlu0 %953
      %vm987 = vcmask 130144
      %988 = vst.msk [vmem:[#allocation3] sm:$0xff] %vm987, %v892
      %989 = vst.msk [vmem:[#allocation3 + $0x8] sm:$0xff] %vm987, %v894
      %990 = vst.msk [vmem:[#allocation3 + $0x10] sm:$0xff] %vm987, %v896
      %991 = vst.msk [vmem:[#allocation3 + $0x18] sm:$0xff] %vm987, %v898
      %992 = vst.msk [vmem:[#allocation3 + $0x20] sm:$0xff] %vm987, %v900
      %993 = vst.msk [vmem:[#allocation3 + $0x28] sm:$0xff] %vm987, %v902
      %994 = vst.msk [vmem:[#allocation3 + $0x30] sm:$0xff] %vm987, %v904
      %995 = vst.msk [vmem:[#allocation3 + $0x38] sm:$0xff] %vm987, %v906
      %996 = vst.msk [vmem:[#allocation3 + $0x40] sm:$0xff] %vm987, %v908
      %997 = vst.msk [vmem:[#allocation3 + $0x48] sm:$0xff] %vm987, %v910
      %998 = vst.msk [vmem:[#allocation3 + $0x50] sm:$0xff] %vm987, %v912
      %999 = vst.msk [vmem:[#allocation3 + $0x58] sm:$0xff] %vm987, %v914
      %1000 = vst.msk [vmem:[#allocation3 + $0x60] sm:$0xff] %vm987, %v916
      %1001 = vst.msk [vmem:[#allocation3 + $0x68] sm:$0xff] %vm987, %v918
      %1002 = vst.msk [vmem:[#allocation3 + $0x70] sm:$0xff] %vm987, %v920
      %1003 = vst.msk [vmem:[#allocation3 + $0x78] sm:$0xff] %vm987, %v922
      %1004 = vst.msk [vmem:[#allocation3 + $0x80] sm:$0xff] %vm987, %v924
      %1005 = vst.msk [vmem:[#allocation3 + $0x88] sm:$0xff] %vm987, %v926
      %1006 = vst.msk [vmem:[#allocation3 + $0x90] sm:$0xff] %vm987, %v928
      %1007 = vst.msk [vmem:[#allocation3 + $0x98] sm:$0xff] %vm987, %v930
      %1008 = vst.msk [vmem:[#allocation3 + $0xa0] sm:$0xff] %vm987, %v932
      %1009 = vst.msk [vmem:[#allocation3 + $0xa8] sm:$0xff] %vm987, %v934
      %1010 = vst.msk [vmem:[#allocation3 + $0xb0] sm:$0xff] %vm987, %v936
      %1011 = vst.msk [vmem:[#allocation3 + $0xb8] sm:$0xff] %vm987, %v938
      %1012 = vst.msk [vmem:[#allocation3 + $0xc0] sm:$0xff] %vm987, %v940
      %1013 = vst.msk [vmem:[#allocation3 + $0xc8] sm:$0xff] %vm987, %v942
      %1014 = vst.msk [vmem:[#allocation3 + $0xd0] sm:$0xff] %vm987, %v944
      %1015 = vst.msk [vmem:[#allocation3 + $0xd8] sm:$0xff] %vm987, %v946
      %1016 = vst.msk [vmem:[#allocation3 + $0xe0] sm:$0xff] %vm987, %v948
      %1017 = vst.msk [vmem:[#allocation3 + $0xe8] sm:$0xff] %vm987, %v950
      %1018 = vst.msk [vmem:[#allocation3 + $0xf0] sm:$0xff] %vm987, %v952
      %1019 = vst.msk [vmem:[#allocation3 + $0xf8] sm:$0xff] %vm987, %v954
      %v1020 = vld [vmem:[%s257 + $0x1] sm:$0xff]
      %v1021 = vld [vmem:[%s257 + $0x9] sm:$0xff]
      %v1022 = vld [vmem:[%s257 + $0x19] sm:$0xff]
      %v1023 = vld [vmem:[%s257 + $0x21] sm:$0xff]
      %v1024 = vld [vmem:[%s257 + $0x31] sm:$0xff]
      %v1025 = vld [vmem:[%s257 + $0x39] sm:$0xff]
      %v1026 = vld [vmem:[%s257 + $0x49] sm:$0xff]
      %v1027 = vld [vmem:[%s257 + $0x51] sm:$0xff]
      %v1028 = vld [vmem:[%s257 + $0x61] sm:$0xff]
      %v1029 = vld [vmem:[%s257 + $0x69] sm:$0xff]
      %v1030 = vld [vmem:[%s257 + $0x79] sm:$0xff]
      %v1031 = vld [vmem:[%s257 + $0x81] sm:$0xff]
      %v1032 = vld [vmem:[%s257 + $0x91] sm:$0xff]
      %v1033 = vld [vmem:[%s257 + $0x99] sm:$0xff]
      %v1034 = vld [vmem:[%s257 + $0xa9] sm:$0xff]
      %v1035 = vld [vmem:[%s257 + $0xb1] sm:$0xff]
      %v1036 = vld [vmem:[%s257 + $0xc1] sm:$0xff]
      %v1037 = vld [vmem:[%s257 + $0xc9] sm:$0xff]
      %v1038 = vld [vmem:[%s257 + $0xd9] sm:$0xff]
      %v1039 = vld [vmem:[%s257 + $0xe1] sm:$0xff]
      %v1040 = vld [vmem:[%s257 + $0xf1] sm:$0xff]
      %v1041 = vld [vmem:[%s257 + $0xf9] sm:$0xff]
      %v1042 = vld [vmem:[%s257 + $0x109] sm:$0xff]
      %v1043 = vld [vmem:[%s257 + $0x111] sm:$0xff]
      %v1044 = vld [vmem:[%s257 + $0x121] sm:$0xff]
      %v1045 = vld [vmem:[%s257 + $0x129] sm:$0xff]
      %v1046 = vld [vmem:[%s257 + $0x139] sm:$0xff]
      %v1047 = vld [vmem:[%s257 + $0x141] sm:$0xff]
      %v1048 = vld [vmem:[%s257 + $0x151] sm:$0xff]
      %v1049 = vld [vmem:[%s257 + $0x159] sm:$0xff]
      %v1050 = vld [vmem:[%s257 + $0x169] sm:$0xff]
      %v1051 = vld [vmem:[%s257 + $0x171] sm:$0xff]
      %1084 = vrot.lane.b32.xlu0 %v1020, 16
      %v1085 = vpop.permute.xlu0 %1084
      %1086 = vrot.lane.b32.xlu0 %v1021, 16
      %v1087 = vpop.permute.xlu0 %1086
      %1088 = vrot.lane.b32.xlu0 %v1022, 16
      %v1089 = vpop.permute.xlu0 %1088
      %1090 = vrot.lane.b32.xlu0 %v1023, 16
      %v1091 = vpop.permute.xlu0 %1090
      %1092 = vrot.lane.b32.xlu0 %v1024, 16
      %v1093 = vpop.permute.xlu0 %1092
      %1094 = vrot.lane.b32.xlu0 %v1025, 16
      %v1095 = vpop.permute.xlu0 %1094
      %1096 = vrot.lane.b32.xlu0 %v1026, 16
      %v1097 = vpop.permute.xlu0 %1096
      %1098 = vrot.lane.b32.xlu0 %v1027, 16
      %v1099 = vpop.permute.xlu0 %1098
      %1100 = vrot.lane.b32.xlu0 %v1028, 16
      %v1101 = vpop.permute.xlu0 %1100
      %1102 = vrot.lane.b32.xlu0 %v1029, 16
      %v1103 = vpop.permute.xlu0 %1102
      %1104 = vrot.lane.b32.xlu0 %v1030, 16
      %v1105 = vpop.permute.xlu0 %1104
      %1106 = vrot.lane.b32.xlu0 %v1031, 16
      %v1107 = vpop.permute.xlu0 %1106
      %1108 = vrot.lane.b32.xlu0 %v1032, 16
      %v1109 = vpop.permute.xlu0 %1108
      %1110 = vrot.lane.b32.xlu0 %v1033, 16
      %v1111 = vpop.permute.xlu0 %1110
      %1112 = vrot.lane.b32.xlu0 %v1034, 16
      %v1113 = vpop.permute.xlu0 %1112
      %1114 = vrot.lane.b32.xlu0 %v1035, 16
      %v1115 = vpop.permute.xlu0 %1114
      %1116 = vrot.lane.b32.xlu0 %v1036, 16
      %v1117 = vpop.permute.xlu0 %1116
      %1118 = vrot.lane.b32.xlu0 %v1037, 16
      %v1119 = vpop.permute.xlu0 %1118
      %1120 = vrot.lane.b32.xlu0 %v1038, 16
      %v1121 = vpop.permute.xlu0 %1120
      %1122 = vrot.lane.b32.xlu0 %v1039, 16
      %v1123 = vpop.permute.xlu0 %1122
      %1124 = vrot.lane.b32.xlu0 %v1040, 16
      %v1125 = vpop.permute.xlu0 %1124
      %1126 = vrot.lane.b32.xlu0 %v1041, 16
      %v1127 = vpop.permute.xlu0 %1126
      %1128 = vrot.lane.b32.xlu0 %v1042, 16
      %v1129 = vpop.permute.xlu0 %1128
      %1130 = vrot.lane.b32.xlu0 %v1043, 16
      %v1131 = vpop.permute.xlu0 %1130
      %1132 = vrot.lane.b32.xlu0 %v1044, 16
      %v1133 = vpop.permute.xlu0 %1132
      %1134 = vrot.lane.b32.xlu0 %v1045, 16
      %v1135 = vpop.permute.xlu0 %1134
      %1136 = vrot.lane.b32.xlu0 %v1046, 16
      %v1137 = vpop.permute.xlu0 %1136
      %1138 = vrot.lane.b32.xlu0 %v1047, 16
      %v1139 = vpop.permute.xlu0 %1138
      %1140 = vrot.lane.b32.xlu0 %v1048, 16
      %v1141 = vpop.permute.xlu0 %1140
      %1142 = vrot.lane.b32.xlu0 %v1049, 16
      %v1143 = vpop.permute.xlu0 %1142
      %1144 = vrot.lane.b32.xlu0 %v1050, 16
      %v1145 = vpop.permute.xlu0 %1144
      %1146 = vrot.lane.b32.xlu0 %v1051, 16
      %v1147 = vpop.permute.xlu0 %1146
      %vm1180 = vcmask 162944
      %1181 = vst.msk [vmem:[#allocation3] sm:$0xff] %vm1180, %v1085
      %1182 = vst.msk [vmem:[#allocation3 + $0x8] sm:$0xff] %vm1180, %v1087
      %1183 = vst.msk [vmem:[#allocation3 + $0x10] sm:$0xff] %vm1180, %v1089
      %1184 = vst.msk [vmem:[#allocation3 + $0x18] sm:$0xff] %vm1180, %v1091
      %1185 = vst.msk [vmem:[#allocation3 + $0x20] sm:$0xff] %vm1180, %v1093
      %1186 = vst.msk [vmem:[#allocation3 + $0x28] sm:$0xff] %vm1180, %v1095
      %1187 = vst.msk [vmem:[#allocation3 + $0x30] sm:$0xff] %vm1180, %v1097
      %1188 = vst.msk [vmem:[#allocation3 + $0x38] sm:$0xff] %vm1180, %v1099
      %1189 = vst.msk [vmem:[#allocation3 + $0x40] sm:$0xff] %vm1180, %v1101
      %1190 = vst.msk [vmem:[#allocation3 + $0x48] sm:$0xff] %vm1180, %v1103
      %1191 = vst.msk [vmem:[#allocation3 + $0x50] sm:$0xff] %vm1180, %v1105
      %1192 = vst.msk [vmem:[#allocation3 + $0x58] sm:$0xff] %vm1180, %v1107
      %1193 = vst.msk [vmem:[#allocation3 + $0x60] sm:$0xff] %vm1180, %v1109
      %1194 = vst.msk [vmem:[#allocation3 + $0x68] sm:$0xff] %vm1180, %v1111
      %1195 = vst.msk [vmem:[#allocation3 + $0x70] sm:$0xff] %vm1180, %v1113
      %1196 = vst.msk [vmem:[#allocation3 + $0x78] sm:$0xff] %vm1180, %v1115
      %1197 = vst.msk [vmem:[#allocation3 + $0x80] sm:$0xff] %vm1180, %v1117
      %1198 = vst.msk [vmem:[#allocation3 + $0x88] sm:$0xff] %vm1180, %v1119
      %1199 = vst.msk [vmem:[#allocation3 + $0x90] sm:$0xff] %vm1180, %v1121
      %1200 = vst.msk [vmem:[#allocation3 + $0x98] sm:$0xff] %vm1180, %v1123
      %1201 = vst.msk [vmem:[#allocation3 + $0xa0] sm:$0xff] %vm1180, %v1125
      %1202 = vst.msk [vmem:[#allocation3 + $0xa8] sm:$0xff] %vm1180, %v1127
      %1203 = vst.msk [vmem:[#allocation3 + $0xb0] sm:$0xff] %vm1180, %v1129
      %1204 = vst.msk [vmem:[#allocation3 + $0xb8] sm:$0xff] %vm1180, %v1131
      %1205 = vst.msk [vmem:[#allocation3 + $0xc0] sm:$0xff] %vm1180, %v1133
      %1206 = vst.msk [vmem:[#allocation3 + $0xc8] sm:$0xff] %vm1180, %v1135
      %1207 = vst.msk [vmem:[#allocation3 + $0xd0] sm:$0xff] %vm1180, %v1137
      %1208 = vst.msk [vmem:[#allocation3 + $0xd8] sm:$0xff] %vm1180, %v1139
      %1209 = vst.msk [vmem:[#allocation3 + $0xe0] sm:$0xff] %vm1180, %v1141
      %1210 = vst.msk [vmem:[#allocation3 + $0xe8] sm:$0xff] %vm1180, %v1143
      %1211 = vst.msk [vmem:[#allocation3 + $0xf0] sm:$0xff] %vm1180, %v1145
      %1212 = vst.msk [vmem:[#allocation3 + $0xf8] sm:$0xff] %vm1180, %v1147
      %v1213 = vld [vmem:[%s257 + $0x2] sm:$0xff]
      %v1214 = vld [vmem:[%s257 + $0xa] sm:$0xff]
      %v1215 = vld [vmem:[%s257 + $0x1a] sm:$0xff]
      %v1216 = vld [vmem:[%s257 + $0x22] sm:$0xff]
      %v1217 = vld [vmem:[%s257 + $0x32] sm:$0xff]
      %v1218 = vld [vmem:[%s257 + $0x3a] sm:$0xff]
      %v1219 = vld [vmem:[%s257 + $0x4a] sm:$0xff]
      %v1220 = vld [vmem:[%s257 + $0x52] sm:$0xff]
      %v1221 = vld [vmem:[%s257 + $0x62] sm:$0xff]
      %v1222 = vld [vmem:[%s257 + $0x6a] sm:$0xff]
      %v1223 = vld [vmem:[%s257 + $0x7a] sm:$0xff]
      %v1224 = vld [vmem:[%s257 + $0x82] sm:$0xff]
      %v1225 = vld [vmem:[%s257 + $0x92] sm:$0xff]
      %v1226 = vld [vmem:[%s257 + $0x9a] sm:$0xff]
      %v1227 = vld [vmem:[%s257 + $0xaa] sm:$0xff]
      %v1228 = vld [vmem:[%s257 + $0xb2] sm:$0xff]
      %v1229 = vld [vmem:[%s257 + $0xc2] sm:$0xff]
      %v1230 = vld [vmem:[%s257 + $0xca] sm:$0xff]
      %v1231 = vld [vmem:[%s257 + $0xda] sm:$0xff]
      %v1232 = vld [vmem:[%s257 + $0xe2] sm:$0xff]
      %v1233 = vld [vmem:[%s257 + $0xf2] sm:$0xff]
      %v1234 = vld [vmem:[%s257 + $0xfa] sm:$0xff]
      %v1235 = vld [vmem:[%s257 + $0x10a] sm:$0xff]
      %v1236 = vld [vmem:[%s257 + $0x112] sm:$0xff]
      %v1237 = vld [vmem:[%s257 + $0x122] sm:$0xff]
      %v1238 = vld [vmem:[%s257 + $0x12a] sm:$0xff]
      %v1239 = vld [vmem:[%s257 + $0x13a] sm:$0xff]
      %v1240 = vld [vmem:[%s257 + $0x142] sm:$0xff]
      %v1241 = vld [vmem:[%s257 + $0x152] sm:$0xff]
      %v1242 = vld [vmem:[%s257 + $0x15a] sm:$0xff]
      %v1243 = vld [vmem:[%s257 + $0x16a] sm:$0xff]
      %v1244 = vld [vmem:[%s257 + $0x172] sm:$0xff]
      %1277 = vrot.lane.b32.xlu0 %v1213, 20
      %v1278 = vpop.permute.xlu0 %1277
      %1279 = vrot.lane.b32.xlu0 %v1214, 20
      %v1280 = vpop.permute.xlu0 %1279
      %1281 = vrot.lane.b32.xlu0 %v1215, 20
      %v1282 = vpop.permute.xlu0 %1281
      %1283 = vrot.lane.b32.xlu0 %v1216, 20
      %v1284 = vpop.permute.xlu0 %1283
      %1285 = vrot.lane.b32.xlu0 %v1217, 20
      %v1286 = vpop.permute.xlu0 %1285
      %1287 = vrot.lane.b32.xlu0 %v1218, 20
      %v1288 = vpop.permute.xlu0 %1287
      %1289 = vrot.lane.b32.xlu0 %v1219, 20
      %v1290 = vpop.permute.xlu0 %1289
      %1291 = vrot.lane.b32.xlu0 %v1220, 20
      %v1292 = vpop.permute.xlu0 %1291
      %1293 = vrot.lane.b32.xlu0 %v1221, 20
      %v1294 = vpop.permute.xlu0 %1293
      %1295 = vrot.lane.b32.xlu0 %v1222, 20
      %v1296 = vpop.permute.xlu0 %1295
      %1297 = vrot.lane.b32.xlu0 %v1223, 20
      %v1298 = vpop.permute.xlu0 %1297
      %1299 = vrot.lane.b32.xlu0 %v1224, 20
      %v1300 = vpop.permute.xlu0 %1299
      %1301 = vrot.lane.b32.xlu0 %v1225, 20
      %v1302 = vpop.permute.xlu0 %1301
      %1303 = vrot.lane.b32.xlu0 %v1226, 20
      %v1304 = vpop.permute.xlu0 %1303
      %1305 = vrot.lane.b32.xlu0 %v1227, 20
      %v1306 = vpop.permute.xlu0 %1305
      %1307 = vrot.lane.b32.xlu0 %v1228, 20
      %v1308 = vpop.permute.xlu0 %1307
      %1309 = vrot.lane.b32.xlu0 %v1229, 20
      %v1310 = vpop.permute.xlu0 %1309
      %1311 = vrot.lane.b32.xlu0 %v1230, 20
      %v1312 = vpop.permute.xlu0 %1311
      %1313 = vrot.lane.b32.xlu0 %v1231, 20
      %v1314 = vpop.permute.xlu0 %1313
      %1315 = vrot.lane.b32.xlu0 %v1232, 20
      %v1316 = vpop.permute.xlu0 %1315
      %1317 = vrot.lane.b32.xlu0 %v1233, 20
      %v1318 = vpop.permute.xlu0 %1317
      %1319 = vrot.lane.b32.xlu0 %v1234, 20
      %v1320 = vpop.permute.xlu0 %1319
      %1321 = vrot.lane.b32.xlu0 %v1235, 20
      %v1322 = vpop.permute.xlu0 %1321
      %1323 = vrot.lane.b32.xlu0 %v1236, 20
      %v1324 = vpop.permute.xlu0 %1323
      %1325 = vrot.lane.b32.xlu0 %v1237, 20
      %v1326 = vpop.permute.xlu0 %1325
      %1327 = vrot.lane.b32.xlu0 %v1238, 20
      %v1328 = vpop.permute.xlu0 %1327
      %1329 = vrot.lane.b32.xlu0 %v1239, 20
      %v1330 = vpop.permute.xlu0 %1329
      %1331 = vrot.lane.b32.xlu0 %v1240, 20
      %v1332 = vpop.permute.xlu0 %1331
      %1333 = vrot.lane.b32.xlu0 %v1241, 20
      %v1334 = vpop.permute.xlu0 %1333
      %1335 = vrot.lane.b32.xlu0 %v1242, 20
      %v1336 = vpop.permute.xlu0 %1335
      %1337 = vrot.lane.b32.xlu0 %v1243, 20
      %v1338 = vpop.permute.xlu0 %1337
      %1339 = vrot.lane.b32.xlu0 %v1244, 20
      %v1340 = vpop.permute.xlu0 %1339
      %vm1373 = vcmask 195744
      %1374 = vst.msk [vmem:[#allocation3] sm:$0xff] %vm1373, %v1278
      %1375 = vst.msk [vmem:[#allocation3 + $0x8] sm:$0xff] %vm1373, %v1280
      %1376 = vst.msk [vmem:[#allocation3 + $0x10] sm:$0xff] %vm1373, %v1282
      %1377 = vst.msk [vmem:[#allocation3 + $0x18] sm:$0xff] %vm1373, %v1284
      %1378 = vst.msk [vmem:[#allocation3 + $0x20] sm:$0xff] %vm1373, %v1286
      %1379 = vst.msk [vmem:[#allocation3 + $0x28] sm:$0xff] %vm1373, %v1288
      %1380 = vst.msk [vmem:[#allocation3 + $0x30] sm:$0xff] %vm1373, %v1290
      %1381 = vst.msk [vmem:[#allocation3 + $0x38] sm:$0xff] %vm1373, %v1292
      %1382 = vst.msk [vmem:[#allocation3 + $0x40] sm:$0xff] %vm1373, %v1294
      %1383 = vst.msk [vmem:[#allocation3 + $0x48] sm:$0xff] %vm1373, %v1296
      %1384 = vst.msk [vmem:[#allocation3 + $0x50] sm:$0xff] %vm1373, %v1298
      %1385 = vst.msk [vmem:[#allocation3 + $0x58] sm:$0xff] %vm1373, %v1300
      %1386 = vst.msk [vmem:[#allocation3 + $0x60] sm:$0xff] %vm1373, %v1302
      %1387 = vst.msk [vmem:[#allocation3 + $0x68] sm:$0xff] %vm1373, %v1304
      %1388 = vst.msk [vmem:[#allocation3 + $0x70] sm:$0xff] %vm1373, %v1306
      %1389 = vst.msk [vmem:[#allocation3 + $0x78] sm:$0xff] %vm1373, %v1308
      %1390 = vst.msk [vmem:[#allocation3 + $0x80] sm:$0xff] %vm1373, %v1310
      %1391 = vst.msk [vmem:[#allocation3 + $0x88] sm:$0xff] %vm1373, %v1312
      %1392 = vst.msk [vmem:[#allocation3 + $0x90] sm:$0xff] %vm1373, %v1314
      %1393 = vst.msk [vmem:[#allocation3 + $0x98] sm:$0xff] %vm1373, %v1316
      %1394 = vst.msk [vmem:[#allocation3 + $0xa0] sm:$0xff] %vm1373, %v1318
      %1395 = vst.msk [vmem:[#allocation3 + $0xa8] sm:$0xff] %vm1373, %v1320
      %1396 = vst.msk [vmem:[#allocation3 + $0xb0] sm:$0xff] %vm1373, %v1322
      %1397 = vst.msk [vmem:[#allocation3 + $0xb8] sm:$0xff] %vm1373, %v1324
      %1398 = vst.msk [vmem:[#allocation3 + $0xc0] sm:$0xff] %vm1373, %v1326
      %1399 = vst.msk [vmem:[#allocation3 + $0xc8] sm:$0xff] %vm1373, %v1328
      %1400 = vst.msk [vmem:[#allocation3 + $0xd0] sm:$0xff] %vm1373, %v1330
      %1401 = vst.msk [vmem:[#allocation3 + $0xd8] sm:$0xff] %vm1373, %v1332
      %1402 = vst.msk [vmem:[#allocation3 + $0xe0] sm:$0xff] %vm1373, %v1334
      %1403 = vst.msk [vmem:[#allocation3 + $0xe8] sm:$0xff] %vm1373, %v1336
      %1404 = vst.msk [vmem:[#allocation3 + $0xf0] sm:$0xff] %vm1373, %v1338
      %1405 = vst.msk [vmem:[#allocation3 + $0xf8] sm:$0xff] %vm1373, %v1340
      %v1406 = vld [vmem:[%s291] sm:$0xff]
      %v1407 = vld [vmem:[%s291 + $0x8] sm:$0xff]
      %v1408 = vld [vmem:[%s291 + $0x18] sm:$0xff]
      %v1409 = vld [vmem:[%s291 + $0x20] sm:$0xff]
      %v1410 = vld [vmem:[%s291 + $0x30] sm:$0xff]
      %v1411 = vld [vmem:[%s291 + $0x38] sm:$0xff]
      %v1412 = vld [vmem:[%s291 + $0x48] sm:$0xff]
      %v1413 = vld [vmem:[%s291 + $0x50] sm:$0xff]
      %v1414 = vld [vmem:[%s291 + $0x60] sm:$0xff]
      %v1415 = vld [vmem:[%s291 + $0x68] sm:$0xff]
      %v1416 = vld [vmem:[%s291 + $0x78] sm:$0xff]
      %v1417 = vld [vmem:[%s291 + $0x80] sm:$0xff]
      %v1418 = vld [vmem:[%s291 + $0x90] sm:$0xff]
      %v1419 = vld [vmem:[%s291 + $0x98] sm:$0xff]
      %v1420 = vld [vmem:[%s291 + $0xa8] sm:$0xff]
      %v1421 = vld [vmem:[%s291 + $0xb0] sm:$0xff]
      %v1422 = vld [vmem:[%s291 + $0xc0] sm:$0xff]
      %v1423 = vld [vmem:[%s291 + $0xc8] sm:$0xff]
      %v1424 = vld [vmem:[%s291 + $0xd8] sm:$0xff]
      %v1425 = vld [vmem:[%s291 + $0xe0] sm:$0xff]
      %v1426 = vld [vmem:[%s291 + $0xf0] sm:$0xff]
      %v1427 = vld [vmem:[%s291 + $0xf8] sm:$0xff]
      %v1428 = vld [vmem:[%s291 + $0x108] sm:$0xff]
      %v1429 = vld [vmem:[%s291 + $0x110] sm:$0xff]
      %v1430 = vld [vmem:[%s291 + $0x120] sm:$0xff]
      %v1431 = vld [vmem:[%s291 + $0x128] sm:$0xff]
      %v1432 = vld [vmem:[%s291 + $0x138] sm:$0xff]
      %v1433 = vld [vmem:[%s291 + $0x140] sm:$0xff]
      %v1434 = vld [vmem:[%s291 + $0x150] sm:$0xff]
      %v1435 = vld [vmem:[%s291 + $0x158] sm:$0xff]
      %v1436 = vld [vmem:[%s291 + $0x168] sm:$0xff]
      %v1437 = vld [vmem:[%s291 + $0x170] sm:$0xff]
      %1470 = vrot.lane.b32.xlu0 %v1406, 24
      %v1471 = vpop.permute.xlu0 %1470
      %1472 = vrot.lane.b32.xlu0 %v1407, 24
      %v1473 = vpop.permute.xlu0 %1472
      %1474 = vrot.lane.b32.xlu0 %v1408, 24
      %v1475 = vpop.permute.xlu0 %1474
      %1476 = vrot.lane.b32.xlu0 %v1409, 24
      %v1477 = vpop.permute.xlu0 %1476
      %1478 = vrot.lane.b32.xlu0 %v1410, 24
      %v1479 = vpop.permute.xlu0 %1478
      %1480 = vrot.lane.b32.xlu0 %v1411, 24
      %v1481 = vpop.permute.xlu0 %1480
      %1482 = vrot.lane.b32.xlu0 %v1412, 24
      %v1483 = vpop.permute.xlu0 %1482
      %1484 = vrot.lane.b32.xlu0 %v1413, 24
      %v1485 = vpop.permute.xlu0 %1484
      %1486 = vrot.lane.b32.xlu0 %v1414, 24
      %v1487 = vpop.permute.xlu0 %1486
      %1488 = vrot.lane.b32.xlu0 %v1415, 24
      %v1489 = vpop.permute.xlu0 %1488
      %1490 = vrot.lane.b32.xlu0 %v1416, 24
      %v1491 = vpop.permute.xlu0 %1490
      %1492 = vrot.lane.b32.xlu0 %v1417, 24
      %v1493 = vpop.permute.xlu0 %1492
      %1494 = vrot.lane.b32.xlu0 %v1418, 24
      %v1495 = vpop.permute.xlu0 %1494
      %1496 = vrot.lane.b32.xlu0 %v1419, 24
      %v1497 = vpop.permute.xlu0 %1496
      %1498 = vrot.lane.b32.xlu0 %v1420, 24
      %v1499 = vpop.permute.xlu0 %1498
      %1500 = vrot.lane.b32.xlu0 %v1421, 24
      %v1501 = vpop.permute.xlu0 %1500
      %1502 = vrot.lane.b32.xlu0 %v1422, 24
      %v1503 = vpop.permute.xlu0 %1502
      %1504 = vrot.lane.b32.xlu0 %v1423, 24
      %v1505 = vpop.permute.xlu0 %1504
      %1506 = vrot.lane.b32.xlu0 %v1424, 24
      %v1507 = vpop.permute.xlu0 %1506
      %1508 = vrot.lane.b32.xlu0 %v1425, 24
      %v1509 = vpop.permute.xlu0 %1508
      %1510 = vrot.lane.b32.xlu0 %v1426, 24
      %v1511 = vpop.permute.xlu0 %1510
      %1512 = vrot.lane.b32.xlu0 %v1427, 24
      %v1513 = vpop.permute.xlu0 %1512
      %1514 = vrot.lane.b32.xlu0 %v1428, 24
      %v1515 = vpop.permute.xlu0 %1514
      %1516 = vrot.lane.b32.xlu0 %v1429, 24
      %v1517 = vpop.permute.xlu0 %1516
      %1518 = vrot.lane.b32.xlu0 %v1430, 24
      %v1519 = vpop.permute.xlu0 %1518
      %1520 = vrot.lane.b32.xlu0 %v1431, 24
      %v1521 = vpop.permute.xlu0 %1520
      %1522 = vrot.lane.b32.xlu0 %v1432, 24
      %v1523 = vpop.permute.xlu0 %1522
      %1524 = vrot.lane.b32.xlu0 %v1433, 24
      %v1525 = vpop.permute.xlu0 %1524
      %1526 = vrot.lane.b32.xlu0 %v1434, 24
      %v1527 = vpop.permute.xlu0 %1526
      %1528 = vrot.lane.b32.xlu0 %v1435, 24
      %v1529 = vpop.permute.xlu0 %1528
      %1530 = vrot.lane.b32.xlu0 %v1436, 24
      %v1531 = vpop.permute.xlu0 %1530
      %1532 = vrot.lane.b32.xlu0 %v1437, 24
      %v1533 = vpop.permute.xlu0 %1532
      %vm1566 = vcmask 228544
      %1567 = vst.msk [vmem:[#allocation3] sm:$0xff] %vm1566, %v1471
      %1568 = vst.msk [vmem:[#allocation3 + $0x8] sm:$0xff] %vm1566, %v1473
      %1569 = vst.msk [vmem:[#allocation3 + $0x10] sm:$0xff] %vm1566, %v1475
      %1570 = vst.msk [vmem:[#allocation3 + $0x18] sm:$0xff] %vm1566, %v1477
      %1571 = vst.msk [vmem:[#allocation3 + $0x20] sm:$0xff] %vm1566, %v1479
      %1572 = vst.msk [vmem:[#allocation3 + $0x28] sm:$0xff] %vm1566, %v1481
      %1573 = vst.msk [vmem:[#allocation3 + $0x30] sm:$0xff] %vm1566, %v1483
      %1574 = vst.msk [vmem:[#allocation3 + $0x38] sm:$0xff] %vm1566, %v1485
      %1575 = vst.msk [vmem:[#allocation3 + $0x40] sm:$0xff] %vm1566, %v1487
      %1576 = vst.msk [vmem:[#allocation3 + $0x48] sm:$0xff] %vm1566, %v1489
      %1577 = vst.msk [vmem:[#allocation3 + $0x50] sm:$0xff] %vm1566, %v1491
      %1578 = vst.msk [vmem:[#allocation3 + $0x58] sm:$0xff] %vm1566, %v1493
      %1579 = vst.msk [vmem:[#allocation3 + $0x60] sm:$0xff] %vm1566, %v1495
      %1580 = vst.msk [vmem:[#allocation3 + $0x68] sm:$0xff] %vm1566, %v1497
      %1581 = vst.msk [vmem:[#allocation3 + $0x70] sm:$0xff] %vm1566, %v1499
      %1582 = vst.msk [vmem:[#allocation3 + $0x78] sm:$0xff] %vm1566, %v1501
      %1583 = vst.msk [vmem:[#allocation3 + $0x80] sm:$0xff] %vm1566, %v1503
      %1584 = vst.msk [vmem:[#allocation3 + $0x88] sm:$0xff] %vm1566, %v1505
      %1585 = vst.msk [vmem:[#allocation3 + $0x90] sm:$0xff] %vm1566, %v1507
      %1586 = vst.msk [vmem:[#allocation3 + $0x98] sm:$0xff] %vm1566, %v1509
      %1587 = vst.msk [vmem:[#allocation3 + $0xa0] sm:$0xff] %vm1566, %v1511
      %1588 = vst.msk [vmem:[#allocation3 + $0xa8] sm:$0xff] %vm1566, %v1513
      %1589 = vst.msk [vmem:[#allocation3 + $0xb0] sm:$0xff] %vm1566, %v1515
      %1590 = vst.msk [vmem:[#allocation3 + $0xb8] sm:$0xff] %vm1566, %v1517
      %1591 = vst.msk [vmem:[#allocation3 + $0xc0] sm:$0xff] %vm1566, %v1519
      %1592 = vst.msk [vmem:[#allocation3 + $0xc8] sm:$0xff] %vm1566, %v1521
      %1593 = vst.msk [vmem:[#allocation3 + $0xd0] sm:$0xff] %vm1566, %v1523
      %1594 = vst.msk [vmem:[#allocation3 + $0xd8] sm:$0xff] %vm1566, %v1525
      %1595 = vst.msk [vmem:[#allocation3 + $0xe0] sm:$0xff] %vm1566, %v1527
      %1596 = vst.msk [vmem:[#allocation3 + $0xe8] sm:$0xff] %vm1566, %v1529
      %1597 = vst.msk [vmem:[#allocation3 + $0xf0] sm:$0xff] %vm1566, %v1531
      %1598 = vst.msk [vmem:[#allocation3 + $0xf8] sm:$0xff] %vm1566, %v1533
      %v1599 = vld [vmem:[%s291 + $0x1] sm:$0xff]
      %v1600 = vld [vmem:[%s291 + $0x9] sm:$0xff]
      %v1601 = vld [vmem:[%s291 + $0x19] sm:$0xff]
      %v1602 = vld [vmem:[%s291 + $0x21] sm:$0xff]
      %v1603 = vld [vmem:[%s291 + $0x31] sm:$0xff]
      %v1604 = vld [vmem:[%s291 + $0x39] sm:$0xff]
      %v1605 = vld [vmem:[%s291 + $0x49] sm:$0xff]
      %v1606 = vld [vmem:[%s291 + $0x51] sm:$0xff]
      %v1607 = vld [vmem:[%s291 + $0x61] sm:$0xff]
      %v1608 = vld [vmem:[%s291 + $0x69] sm:$0xff]
      %v1609 = vld [vmem:[%s291 + $0x79] sm:$0xff]
      %v1610 = vld [vmem:[%s291 + $0x81] sm:$0xff]
      %v1611 = vld [vmem:[%s291 + $0x91] sm:$0xff]
      %v1612 = vld [vmem:[%s291 + $0x99] sm:$0xff]
      %v1613 = vld [vmem:[%s291 + $0xa9] sm:$0xff]
      %v1614 = vld [vmem:[%s291 + $0xb1] sm:$0xff]
      %v1615 = vld [vmem:[%s291 + $0xc1] sm:$0xff]
      %v1616 = vld [vmem:[%s291 + $0xc9] sm:$0xff]
      %v1617 = vld [vmem:[%s291 + $0xd9] sm:$0xff]
      %v1618 = vld [vmem:[%s291 + $0xe1] sm:$0xff]
      %v1619 = vld [vmem:[%s291 + $0xf1] sm:$0xff]
      %v1620 = vld [vmem:[%s291 + $0xf9] sm:$0xff]
      %v1621 = vld [vmem:[%s291 + $0x109] sm:$0xff]
      %v1622 = vld [vmem:[%s291 + $0x111] sm:$0xff]
      %v1623 = vld [vmem:[%s291 + $0x121] sm:$0xff]
      %v1624 = vld [vmem:[%s291 + $0x129] sm:$0xff]
      %v1625 = vld [vmem:[%s291 + $0x139] sm:$0xff]
      %v1626 = vld [vmem:[%s291 + $0x141] sm:$0xff]
      %v1627 = vld [vmem:[%s291 + $0x151] sm:$0xff]
      %v1628 = vld [vmem:[%s291 + $0x159] sm:$0xff]
      %v1629 = vld [vmem:[%s291 + $0x169] sm:$0xff]
      %v1630 = vld [vmem:[%s291 + $0x171] sm:$0xff]
      %1663 = vrot.lane.b32.xlu0 %v1599, 28
      %v1664 = vpop.permute.xlu0 %1663
      %1665 = vrot.lane.b32.xlu0 %v1600, 28
      %v1666 = vpop.permute.xlu0 %1665
      %1667 = vrot.lane.b32.xlu0 %v1601, 28
      %v1668 = vpop.permute.xlu0 %1667
      %1669 = vrot.lane.b32.xlu0 %v1602, 28
      %v1670 = vpop.permute.xlu0 %1669
      %1671 = vrot.lane.b32.xlu0 %v1603, 28
      %v1672 = vpop.permute.xlu0 %1671
      %1673 = vrot.lane.b32.xlu0 %v1604, 28
      %v1674 = vpop.permute.xlu0 %1673
      %1675 = vrot.lane.b32.xlu0 %v1605, 28
      %v1676 = vpop.permute.xlu0 %1675
      %1677 = vrot.lane.b32.xlu0 %v1606, 28
      %v1678 = vpop.permute.xlu0 %1677
      %1679 = vrot.lane.b32.xlu0 %v1607, 28
      %v1680 = vpop.permute.xlu0 %1679
      %1681 = vrot.lane.b32.xlu0 %v1608, 28
      %v1682 = vpop.permute.xlu0 %1681
      %1683 = vrot.lane.b32.xlu0 %v1609, 28
      %v1684 = vpop.permute.xlu0 %1683
      %1685 = vrot.lane.b32.xlu0 %v1610, 28
      %v1686 = vpop.permute.xlu0 %1685
      %1687 = vrot.lane.b32.xlu0 %v1611, 28
      %v1688 = vpop.permute.xlu0 %1687
      %1689 = vrot.lane.b32.xlu0 %v1612, 28
      %v1690 = vpop.permute.xlu0 %1689
      %1691 = vrot.lane.b32.xlu0 %v1613, 28
      %v1692 = vpop.permute.xlu0 %1691
      %1693 = vrot.lane.b32.xlu0 %v1614, 28
      %v1694 = vpop.permute.xlu0 %1693
      %1695 = vrot.lane.b32.xlu0 %v1615, 28
      %v1696 = vpop.permute.xlu0 %1695
      %1697 = vrot.lane.b32.xlu0 %v1616, 28
      %v1698 = vpop.permute.xlu0 %1697
      %1699 = vrot.lane.b32.xlu0 %v1617, 28
      %v1700 = vpop.permute.xlu0 %1699
      %1701 = vrot.lane.b32.xlu0 %v1618, 28
      %v1702 = vpop.permute.xlu0 %1701
      %1703 = vrot.lane.b32.xlu0 %v1619, 28
      %v1704 = vpop.permute.xlu0 %1703
      %1705 = vrot.lane.b32.xlu0 %v1620, 28
      %v1706 = vpop.permute.xlu0 %1705
      %1707 = vrot.lane.b32.xlu0 %v1621, 28
      %v1708 = vpop.permute.xlu0 %1707
      %1709 = vrot.lane.b32.xlu0 %v1622, 28
      %v1710 = vpop.permute.xlu0 %1709
      %1711 = vrot.lane.b32.xlu0 %v1623, 28
      %v1712 = vpop.permute.xlu0 %1711
      %1713 = vrot.lane.b32.xlu0 %v1624, 28
      %v1714 = vpop.permute.xlu0 %1713
      %1715 = vrot.lane.b32.xlu0 %v1625, 28
      %v1716 = vpop.permute.xlu0 %1715
      %1717 = vrot.lane.b32.xlu0 %v1626, 28
      %v1718 = vpop.permute.xlu0 %1717
      %1719 = vrot.lane.b32.xlu0 %v1627, 28
      %v1720 = vpop.permute.xlu0 %1719
      %1721 = vrot.lane.b32.xlu0 %v1628, 28
      %v1722 = vpop.permute.xlu0 %1721
      %1723 = vrot.lane.b32.xlu0 %v1629, 28
      %v1724 = vpop.permute.xlu0 %1723
      %1725 = vrot.lane.b32.xlu0 %v1630, 28
      %v1726 = vpop.permute.xlu0 %1725
      %vm1759 = vcmask 261344
      %1760 = vst.msk [vmem:[#allocation3] sm:$0xff] %vm1759, %v1664
      %1761 = vst.msk [vmem:[#allocation3 + $0x8] sm:$0xff] %vm1759, %v1666
      %1762 = vst.msk [vmem:[#allocation3 + $0x10] sm:$0xff] %vm1759, %v1668
      %1763 = vst.msk [vmem:[#allocation3 + $0x18] sm:$0xff] %vm1759, %v1670
      %1764 = vst.msk [vmem:[#allocation3 + $0x20] sm:$0xff] %vm1759, %v1672
      %1765 = vst.msk [vmem:[#allocation3 + $0x28] sm:$0xff] %vm1759, %v1674
      %1766 = vst.msk [vmem:[#allocation3 + $0x30] sm:$0xff] %vm1759, %v1676
      %1767 = vst.msk [vmem:[#allocation3 + $0x38] sm:$0xff] %vm1759, %v1678
      %1768 = vst.msk [vmem:[#allocation3 + $0x40] sm:$0xff] %vm1759, %v1680
      %1769 = vst.msk [vmem:[#allocation3 + $0x48] sm:$0xff] %vm1759, %v1682
      %1770 = vst.msk [vmem:[#allocation3 + $0x50] sm:$0xff] %vm1759, %v1684
      %1771 = vst.msk [vmem:[#allocation3 + $0x58] sm:$0xff] %vm1759, %v1686
      %1772 = vst.msk [vmem:[#allocation3 + $0x60] sm:$0xff] %vm1759, %v1688
      %1773 = vst.msk [vmem:[#allocation3 + $0x68] sm:$0xff] %vm1759, %v1690
      %1774 = vst.msk [vmem:[#allocation3 + $0x70] sm:$0xff] %vm1759, %v1692
      %1775 = vst.msk [vmem:[#allocation3 + $0x78] sm:$0xff] %vm1759, %v1694
      %1776 = vst.msk [vmem:[#allocation3 + $0x80] sm:$0xff] %vm1759, %v1696
      %1777 = vst.msk [vmem:[#allocation3 + $0x88] sm:$0xff] %vm1759, %v1698
      %1778 = vst.msk [vmem:[#allocation3 + $0x90] sm:$0xff] %vm1759, %v1700
      %1779 = vst.msk [vmem:[#allocation3 + $0x98] sm:$0xff] %vm1759, %v1702
      %1780 = vst.msk [vmem:[#allocation3 + $0xa0] sm:$0xff] %vm1759, %v1704
      %1781 = vst.msk [vmem:[#allocation3 + $0xa8] sm:$0xff] %vm1759, %v1706
      %1782 = vst.msk [vmem:[#allocation3 + $0xb0] sm:$0xff] %vm1759, %v1708
      %1783 = vst.msk [vmem:[#allocation3 + $0xb8] sm:$0xff] %vm1759, %v1710
      %1784 = vst.msk [vmem:[#allocation3 + $0xc0] sm:$0xff] %vm1759, %v1712
      %1785 = vst.msk [vmem:[#allocation3 + $0xc8] sm:$0xff] %vm1759, %v1714
      %1786 = vst.msk [vmem:[#allocation3 + $0xd0] sm:$0xff] %vm1759, %v1716
      %1787 = vst.msk [vmem:[#allocation3 + $0xd8] sm:$0xff] %vm1759, %v1718
      %1788 = vst.msk [vmem:[#allocation3 + $0xe0] sm:$0xff] %vm1759, %v1720
      %1789 = vst.msk [vmem:[#allocation3 + $0xe8] sm:$0xff] %vm1759, %v1722
      %1790 = vst.msk [vmem:[#allocation3 + $0xf0] sm:$0xff] %vm1759, %v1724
      %1791 = vst.msk [vmem:[#allocation3 + $0xf8] sm:$0xff] %vm1759, %v1726
      %v1792 = vld [vmem:[%s291 + $0x2] sm:$0xff]
      %v1793 = vld [vmem:[%s291 + $0xa] sm:$0xff]
      %v1794 = vld [vmem:[%s291 + $0x1a] sm:$0xff]
      %v1795 = vld [vmem:[%s291 + $0x22] sm:$0xff]
      %v1796 = vld [vmem:[%s291 + $0x32] sm:$0xff]
      %v1797 = vld [vmem:[%s291 + $0x3a] sm:$0xff]
      %v1798 = vld [vmem:[%s291 + $0x4a] sm:$0xff]
      %v1799 = vld [vmem:[%s291 + $0x52] sm:$0xff]
      %v1800 = vld [vmem:[%s291 + $0x62] sm:$0xff]
      %v1801 = vld [vmem:[%s291 + $0x6a] sm:$0xff]
      %v1802 = vld [vmem:[%s291 + $0x7a] sm:$0xff]
      %v1803 = vld [vmem:[%s291 + $0x82] sm:$0xff]
      %v1804 = vld [vmem:[%s291 + $0x92] sm:$0xff]
      %v1805 = vld [vmem:[%s291 + $0x9a] sm:$0xff]
      %v1806 = vld [vmem:[%s291 + $0xaa] sm:$0xff]
      %v1807 = vld [vmem:[%s291 + $0xb2] sm:$0xff]
      %v1808 = vld [vmem:[%s291 + $0xc2] sm:$0xff]
      %v1809 = vld [vmem:[%s291 + $0xca] sm:$0xff]
      %v1810 = vld [vmem:[%s291 + $0xda] sm:$0xff]
      %v1811 = vld [vmem:[%s291 + $0xe2] sm:$0xff]
      %v1812 = vld [vmem:[%s291 + $0xf2] sm:$0xff]
      %v1813 = vld [vmem:[%s291 + $0xfa] sm:$0xff]
      %v1814 = vld [vmem:[%s291 + $0x10a] sm:$0xff]
      %v1815 = vld [vmem:[%s291 + $0x112] sm:$0xff]
      %v1816 = vld [vmem:[%s291 + $0x122] sm:$0xff]
      %v1817 = vld [vmem:[%s291 + $0x12a] sm:$0xff]
      %v1818 = vld [vmem:[%s291 + $0x13a] sm:$0xff]
      %v1819 = vld [vmem:[%s291 + $0x142] sm:$0xff]
      %v1820 = vld [vmem:[%s291 + $0x152] sm:$0xff]
      %v1821 = vld [vmem:[%s291 + $0x15a] sm:$0xff]
      %v1822 = vld [vmem:[%s291 + $0x16a] sm:$0xff]
      %v1823 = vld [vmem:[%s291 + $0x172] sm:$0xff]
      %1856 = vrot.lane.b32.xlu0 %v1792, 32
      %v1857 = vpop.permute.xlu0 %1856
      %1858 = vrot.lane.b32.xlu0 %v1793, 32
      %v1859 = vpop.permute.xlu0 %1858
      %1860 = vrot.lane.b32.xlu0 %v1794, 32
      %v1861 = vpop.permute.xlu0 %1860
      %1862 = vrot.lane.b32.xlu0 %v1795, 32
      %v1863 = vpop.permute.xlu0 %1862
      %1864 = vrot.lane.b32.xlu0 %v1796, 32
      %v1865 = vpop.permute.xlu0 %1864
      %1866 = vrot.lane.b32.xlu0 %v1797, 32
      %v1867 = vpop.permute.xlu0 %1866
      %1868 = vrot.lane.b32.xlu0 %v1798, 32
      %v1869 = vpop.permute.xlu0 %1868
      %1870 = vrot.lane.b32.xlu0 %v1799, 32
      %v1871 = vpop.permute.xlu0 %1870
      %1872 = vrot.lane.b32.xlu0 %v1800, 32
      %v1873 = vpop.permute.xlu0 %1872
      %1874 = vrot.lane.b32.xlu0 %v1801, 32
      %v1875 = vpop.permute.xlu0 %1874
      %1876 = vrot.lane.b32.xlu0 %v1802, 32
      %v1877 = vpop.permute.xlu0 %1876
      %1878 = vrot.lane.b32.xlu0 %v1803, 32
      %v1879 = vpop.permute.xlu0 %1878
      %1880 = vrot.lane.b32.xlu0 %v1804, 32
      %v1881 = vpop.permute.xlu0 %1880
      %1882 = vrot.lane.b32.xlu0 %v1805, 32
      %v1883 = vpop.permute.xlu0 %1882
      %1884 = vrot.lane.b32.xlu0 %v1806, 32
      %v1885 = vpop.permute.xlu0 %1884
      %1886 = vrot.lane.b32.xlu0 %v1807, 32
      %v1887 = vpop.permute.xlu0 %1886
      %1888 = vrot.lane.b32.xlu0 %v1808, 32
      %v1889 = vpop.permute.xlu0 %1888
      %1890 = vrot.lane.b32.xlu0 %v1809, 32
      %v1891 = vpop.permute.xlu0 %1890
      %1892 = vrot.lane.b32.xlu0 %v1810, 32
      %v1893 = vpop.permute.xlu0 %1892
      %1894 = vrot.lane.b32.xlu0 %v1811, 32
      %v1895 = vpop.permute.xlu0 %1894
      %1896 = vrot.lane.b32.xlu0 %v1812, 32
      %v1897 = vpop.permute.xlu0 %1896
      %1898 = vrot.lane.b32.xlu0 %v1813, 32
      %v1899 = vpop.permute.xlu0 %1898
      %1900 = vrot.lane.b32.xlu0 %v1814, 32
      %v1901 = vpop.permute.xlu0 %1900
      %1902 = vrot.lane.b32.xlu0 %v1815, 32
      %v1903 = vpop.permute.xlu0 %1902
      %1904 = vrot.lane.b32.xlu0 %v1816, 32
      %v1905 = vpop.permute.xlu0 %1904
      %1906 = vrot.lane.b32.xlu0 %v1817, 32
      %v1907 = vpop.permute.xlu0 %1906
      %1908 = vrot.lane.b32.xlu0 %v1818, 32
      %v1909 = vpop.permute.xlu0 %1908
      %1910 = vrot.lane.b32.xlu0 %v1819, 32
      %v1911 = vpop.permute.xlu0 %1910
      %1912 = vrot.lane.b32.xlu0 %v1820, 32
      %v1913 = vpop.permute.xlu0 %1912
      %1914 = vrot.lane.b32.xlu0 %v1821, 32
      %v1915 = vpop.permute.xlu0 %1914
      %1916 = vrot.lane.b32.xlu0 %v1822, 32
      %v1917 = vpop.permute.xlu0 %1916
      %1918 = vrot.lane.b32.xlu0 %v1823, 32
      %v1919 = vpop.permute.xlu0 %1918
      %vm1952 = vcmask 294144
      %1953 = vst.msk [vmem:[#allocation3] sm:$0xff] %vm1952, %v1857
      %1954 = vst.msk [vmem:[#allocation3 + $0x8] sm:$0xff] %vm1952, %v1859
      %1955 = vst.msk [vmem:[#allocation3 + $0x10] sm:$0xff] %vm1952, %v1861
      %1956 = vst.msk [vmem:[#allocation3 + $0x18] sm:$0xff] %vm1952, %v1863
      %1957 = vst.msk [vmem:[#allocation3 + $0x20] sm:$0xff] %vm1952, %v1865
      %1958 = vst.msk [vmem:[#allocation3 + $0x28] sm:$0xff] %vm1952, %v1867
      %1959 = vst.msk [vmem:[#allocation3 + $0x30] sm:$0xff] %vm1952, %v1869
      %1960 = vst.msk [vmem:[#allocation3 + $0x38] sm:$0xff] %vm1952, %v1871
      %1961 = vst.msk [vmem:[#allocation3 + $0x40] sm:$0xff] %vm1952, %v1873
      %1962 = vst.msk [vmem:[#allocation3 + $0x48] sm:$0xff] %vm1952, %v1875
      %1963 = vst.msk [vmem:[#allocation3 + $0x50] sm:$0xff] %vm1952, %v1877
      %1964 = vst.msk [vmem:[#allocation3 + $0x58] sm:$0xff] %vm1952, %v1879
      %1965 = vst.msk [vmem:[#allocation3 + $0x60] sm:$0xff] %vm1952, %v1881
      %1966 = vst.msk [vmem:[#allocation3 + $0x68] sm:$0xff] %vm1952, %v1883
      %1967 = vst.msk [vmem:[#allocation3 + $0x70] sm:$0xff] %vm1952, %v1885
      %1968 = vst.msk [vmem:[#allocation3 + $0x78] sm:$0xff] %vm1952, %v1887
      %1969 = vst.msk [vmem:[#allocation3 + $0x80] sm:$0xff] %vm1952, %v1889
      %1970 = vst.msk [vmem:[#allocation3 + $0x88] sm:$0xff] %vm1952, %v1891
      %1971 = vst.msk [vmem:[#allocation3 + $0x90] sm:$0xff] %vm1952, %v1893
      %1972 = vst.msk [vmem:[#allocation3 + $0x98] sm:$0xff] %vm1952, %v1895
      %1973 = vst.msk [vmem:[#allocation3 + $0xa0] sm:$0xff] %vm1952, %v1897
      %1974 = vst.msk [vmem:[#allocation3 + $0xa8] sm:$0xff] %vm1952, %v1899
      %1975 = vst.msk [vmem:[#allocation3 + $0xb0] sm:$0xff] %vm1952, %v1901
      %1976 = vst.msk [vmem:[#allocation3 + $0xb8] sm:$0xff] %vm1952, %v1903
      %1977 = vst.msk [vmem:[#allocation3 + $0xc0] sm:$0xff] %vm1952, %v1905
      %1978 = vst.msk [vmem:[#allocation3 + $0xc8] sm:$0xff] %vm1952, %v1907
      %1979 = vst.msk [vmem:[#allocation3 + $0xd0] sm:$0xff] %vm1952, %v1909
      %1980 = vst.msk [vmem:[#allocation3 + $0xd8] sm:$0xff] %vm1952, %v1911
      %1981 = vst.msk [vmem:[#allocation3 + $0xe0] sm:$0xff] %vm1952, %v1913
      %1982 = vst.msk [vmem:[#allocation3 + $0xe8] sm:$0xff] %vm1952, %v1915
      %1983 = vst.msk [vmem:[#allocation3 + $0xf0] sm:$0xff] %vm1952, %v1917
      %1984 = vst.msk [vmem:[#allocation3 + $0xf8] sm:$0xff] %vm1952, %v1919
      %v1985 = vld [vmem:[#allocation3] sm:$0xff]
      %v1986 = vld [vmem:[#allocation3 + $0x8] sm:$0xff]
      %v1987 = vld [vmem:[#allocation3 + $0x10] sm:$0xff]
      %v1988 = vld [vmem:[#allocation3 + $0x18] sm:$0xff]
      %v1989 = vld [vmem:[#allocation3 + $0x20] sm:$0xff]
      %v1990 = vld [vmem:[#allocation3 + $0x28] sm:$0xff]
      %v1991 = vld [vmem:[#allocation3 + $0x30] sm:$0xff]
      %v1992 = vld [vmem:[#allocation3 + $0x38] sm:$0xff]
      %v1993 = vld [vmem:[#allocation3 + $0x40] sm:$0xff]
      %v1994 = vld [vmem:[#allocation3 + $0x48] sm:$0xff]
      %v1995 = vld [vmem:[#allocation3 + $0x50] sm:$0xff]
      %v1996 = vld [vmem:[#allocation3 + $0x58] sm:$0xff]
      %v1997 = vld [vmem:[#allocation3 + $0x60] sm:$0xff]
      %v1998 = vld [vmem:[#allocation3 + $0x68] sm:$0xff]
      %v1999 = vld [vmem:[#allocation3 + $0x70] sm:$0xff]
      %v2000 = vld [vmem:[#allocation3 + $0x78] sm:$0xff]
      %v2001 = vld [vmem:[#allocation3 + $0x80] sm:$0xff]
      %v2002 = vld [vmem:[#allocation3 + $0x88] sm:$0xff]
      %v2003 = vld [vmem:[#allocation3 + $0x90] sm:$0xff]
      %v2004 = vld [vmem:[#allocation3 + $0x98] sm:$0xff]
      %v2005 = vld [vmem:[#allocation3 + $0xa0] sm:$0xff]
      %v2006 = vld [vmem:[#allocation3 + $0xa8] sm:$0xff]
      %v2007 = vld [vmem:[#allocation3 + $0xb0] sm:$0xff]
      %v2008 = vld [vmem:[#allocation3 + $0xb8] sm:$0xff]
      %v2009 = vld [vmem:[#allocation3 + $0xc0] sm:$0xff]
      %v2010 = vld [vmem:[#allocation3 + $0xc8] sm:$0xff]
      %v2011 = vld [vmem:[#allocation3 + $0xd0] sm:$0xff]
      %v2012 = vld [vmem:[#allocation3 + $0xd8] sm:$0xff]
      %v2013 = vld [vmem:[#allocation3 + $0xe0] sm:$0xff]
      %v2014 = vld [vmem:[#allocation3 + $0xe8] sm:$0xff]
      %v2015 = vld [vmem:[#allocation3 + $0xf0] sm:$0xff]
      %v2016 = vld [vmem:[#allocation3 + $0xf8] sm:$0xff]
      %v2017 = vld [vmem:[%s1] sm:$0xff]
      %v2018 = vld [vmem:[%s1 + $0x8] sm:$0xff]
      %v2019 = vld [vmem:[%s1 + $0x10] sm:$0xff]
      %v2020 = vld [vmem:[%s1 + $0x18] sm:$0xff]
      %v2021 = vld [vmem:[%s1 + $0x20] sm:$0xf]
      %v2022 = vld [vmem:[%s2] sm:$0x1]
      %v2024 = vlaneseq
      %v2025 = vshrl.u32 %v2024, 7
      %v2026 = vsub.s32 0, %v2025
      %v2027 = vrot.slane %v2022, %v2026
      %vm2029 = vcmask 293888
      %v2031 = vsel %vm2029, %v1985, 0
      %v2034 = vsel %vm2029, %v1986, 0
      %v2037 = vsel %vm2029, %v1987, 0
      %v2040 = vsel %vm2029, %v1988, 0
      %v2043 = vsel %vm2029, %v1989, 0
      %v2046 = vsel %vm2029, %v1990, 0
      %v2049 = vsel %vm2029, %v1991, 0
      %v2052 = vsel %vm2029, %v1992, 0
      %v2055 = vsel %vm2029, %v1993, 0
      %v2058 = vsel %vm2029, %v1994, 0
      %v2061 = vsel %vm2029, %v1995, 0
      %v2064 = vsel %vm2029, %v1996, 0
      %v2067 = vsel %vm2029, %v1997, 0
      %v2070 = vsel %vm2029, %v1998, 0
      %v2073 = vsel %vm2029, %v1999, 0
      %v2076 = vsel %vm2029, %v2000, 0
      %v2079 = vsel %vm2029, %v2001, 0
      %v2082 = vsel %vm2029, %v2002, 0
      %v2085 = vsel %vm2029, %v2003, 0
      %v2088 = vsel %vm2029, %v2004, 0
      %v2091 = vsel %vm2029, %v2005, 0
      %v2094 = vsel %vm2029, %v2006, 0
      %v2097 = vsel %vm2029, %v2007, 0
      %v2100 = vsel %vm2029, %v2008, 0
      %v2103 = vsel %vm2029, %v2009, 0
      %v2106 = vsel %vm2029, %v2010, 0
      %v2109 = vsel %vm2029, %v2011, 0
      %v2112 = vsel %vm2029, %v2012, 0
      %v2115 = vsel %vm2029, %v2013, 0
      %v2118 = vsel %vm2029, %v2014, 0
      %v2121 = vsel %vm2029, %v2015, 0
      %v2124 = vsel %vm2029, %v2016, 0
      %vm2126 = vcmask 1043456
      %v2128 = vsel %vm2126, %v2021, 0
      %2130 = vmatprep.subr.mxu0 0.0
      %2131 = vmatpush1.msra.mxu0 %v2017
      %2132 = vmatprep.subr.mxu0 0.0
      %2133 = vmatpush1.msra.mxu0 %v2018
      %2134 = vmatprep.subr.mxu0 0.0
      %2135 = vmatpush1.msra.mxu0 %v2019
      %2136 = vmatprep.subr.mxu0 0.0
      %2137 = vmatpush1.msra.mxu0 %v2020
      %2138 = vmatprep.subr.mxu0 0.0
      %2139 = vmatpush1.msra.mxu0 %v2128
      %2140 = vmatprep.subr.mxu0 0.0
      %2141 = vmatpush1.msra.mxu0 0.0
      %2142 = vmatprep.subr.mxu0 0.0
      %2143 = vmatpush1.msra.mxu0 0.0
      %2144 = vmatprep.subr.mxu0 0.0
      %2145 = vmatpush1.msra.mxu0 0.0
      %2146 = vmatprep.subr.mxu0 0.0
      %2147 = vmatpush1.msra.mxu0 0.0
      %2148 = vmatprep.subr.mxu0 0.0
      %2149 = vmatpush1.msra.mxu0 0.0
      %2150 = vmatprep.subr.mxu0 0.0
      %2151 = vmatpush1.msra.mxu0 0.0
      %2152 = vmatprep.subr.mxu0 0.0
      %2153 = vmatpush1.msra.mxu0 0.0
      %2154 = vmatprep.subr.mxu0 0.0
      %2155 = vmatpush1.msra.mxu0 0.0
      %2156 = vmatprep.subr.mxu0 0.0
      %2157 = vmatpush1.msra.mxu0 0.0
      %2158 = vmatprep.subr.mxu0 0.0
      %2159 = vmatpush1.msra.mxu0 0.0
      %2160 = vmatprep.subr.mxu0 0.0
      %2161 = vmatpush1.msra.mxu0 0.0
      %2162 = vmatprep.subr.mxu0 0.0
      %2163 = vmatpush1.msra.mxu0 0.0
      %2164 = vmatprep.subr.mxu0 0.0
      %2165 = vmatpush1.msra.mxu0 0.0
      %2166 = vmatprep.subr.mxu0 0.0
      %2167 = vmatpush1.msra.mxu0 0.0
      %2168 = vmatprep.subr.mxu0 0.0
      %2169 = vmatpush1.msra.mxu0 0.0
      %2170 = vmatprep.subr.mxu0 0.0
      %2171 = vmatpush1.msra.mxu0 0.0
      %2172 = vmatprep.subr.mxu0 0.0
      %2173 = vmatpush1.msra.mxu0 0.0
      %2174 = vmatprep.subr.mxu0 0.0
      %2175 = vmatpush1.msra.mxu0 0.0
      %2176 = vmatprep.subr.mxu0 0.0
      %2177 = vmatpush1.msra.mxu0 0.0
      %2178 = vmatprep.subr.mxu0 0.0
      %2179 = vmatpush1.msra.mxu0 0.0
      %2180 = vmatprep.subr.mxu0 0.0
      %2181 = vmatpush1.msra.mxu0 0.0
      %2182 = vmatprep.subr.mxu0 0.0
      %2183 = vmatpush1.msra.mxu0 0.0
      %2184 = vmatprep.subr.mxu0 0.0
      %2185 = vmatpush1.msra.mxu0 0.0
      %2186 = vmatprep.subr.mxu0 0.0
      %2187 = vmatpush1.msra.mxu0 0.0
      %2188 = vmatprep.subr.mxu0 0.0
      %2189 = vmatpush1.msra.mxu0 0.0
      %2190 = vmatprep.subr.mxu0 0.0
      %2191 = vmatpush1.msra.mxu0 0.0
      %2192 = vmatprep.subr.mxu0 0.0
      %2193 = vmatpush1.msra.mxu0 0.0
      %2194 = vmatprep.mubr.f32.mxu0 0.0
      %2195 = vmatmul.mubr.f32.gmra.mrb[0].mxu0 %v2031
      %v2196 = vpop.f32.mrb[0].mxu0
      %v2197 = vadd.f32 %v2027, %v2196
      %v2198 = vpop.f32.mrb[0].mxu0
      %2199 = vmatprep.mubr.f32.mxu0 0.0
      %2200 = vmatmul.mubr.f32.gmra.mrb[0].mxu0 %v2034
      %v2201 = vpop.f32.mrb[0].mxu0
      %v2202 = vadd.f32 %v2027, %v2201
      %v2203 = vpop.f32.mrb[0].mxu0
      %2204 = vmatprep.mubr.f32.mxu0 0.0
      %2205 = vmatmul.mubr.f32.gmra.mrb[0].mxu0 %v2037
      %v2206 = vpop.f32.mrb[0].mxu0
      %v2207 = vadd.f32 %v2027, %v2206
      %v2208 = vpop.f32.mrb[0].mxu0
      %2209 = vmatprep.mubr.f32.mxu0 0.0
      %2210 = vmatmul.mubr.f32.gmra.mrb[0].mxu0 %v2040
      %v2211 = vpop.f32.mrb[0].mxu0
      %v2212 = vadd.f32 %v2027, %v2211
      %v2213 = vpop.f32.mrb[0].mxu0
      %2214 = vmatprep.mubr.f32.mxu0 0.0
      %2215 = vmatmul.mubr.f32.gmra.mrb[0].mxu0 %v2043
      %v2216 = vpop.f32.mrb[0].mxu0
      %v2217 = vadd.f32 %v2027, %v2216
      %v2218 = vpop.f32.mrb[0].mxu0
      %2219 = vmatprep.mubr.f32.mxu0 0.0
      %2220 = vmatmul.mubr.f32.gmra.mrb[0].mxu0 %v2046
      %v2221 = vpop.f32.mrb[0].mxu0
      %v2222 = vadd.f32 %v2027, %v2221
      %v2223 = vpop.f32.mrb[0].mxu0
      %2224 = vmatprep.mubr.f32.mxu0 0.0
      %2225 = vmatmul.mubr.f32.gmra.mrb[0].mxu0 %v2049
      %v2226 = vpop.f32.mrb[0].mxu0
      %v2227 = vadd.f32 %v2027, %v2226
      %v2228 = vpop.f32.mrb[0].mxu0
      %2229 = vmatprep.mubr.f32.mxu0 0.0
      %2230 = vmatmul.mubr.f32.gmra.mrb[0].mxu0 %v2052
      %v2231 = vpop.f32.mrb[0].mxu0
      %v2232 = vadd.f32 %v2027, %v2231
      %v2233 = vpop.f32.mrb[0].mxu0
      %2234 = vmatprep.mubr.f32.mxu0 0.0
      %2235 = vmatmul.mubr.f32.gmra.mrb[0].mxu0 %v2055
      %v2236 = vpop.f32.mrb[0].mxu0
      %v2237 = vadd.f32 %v2027, %v2236
      %v2238 = vpop.f32.mrb[0].mxu0
      %2239 = vmatprep.mubr.f32.mxu0 0.0
      %2240 = vmatmul.mubr.f32.gmra.mrb[0].mxu0 %v2058
      %v2241 = vpop.f32.mrb[0].mxu0
      %v2242 = vadd.f32 %v2027, %v2241
      %v2243 = vpop.f32.mrb[0].mxu0
      %2244 = vmatprep.mubr.f32.mxu0 0.0
      %2245 = vmatmul.mubr.f32.gmra.mrb[0].mxu0 %v2061
      %v2246 = vpop.f32.mrb[0].mxu0
      %v2247 = vadd.f32 %v2027, %v2246
      %v2248 = vpop.f32.mrb[0].mxu0
      %2249 = vmatprep.mubr.f32.mxu0 0.0
      %2250 = vmatmul.mubr.f32.gmra.mrb[0].mxu0 %v2064
      %v2251 = vpop.f32.mrb[0].mxu0
      %v2252 = vadd.f32 %v2027, %v2251
      %v2253 = vpop.f32.mrb[0].mxu0
      %2254 = vmatprep.mubr.f32.mxu0 0.0
      %2255 = vmatmul.mubr.f32.gmra.mrb[0].mxu0 %v2067
      %v2256 = vpop.f32.mrb[0].mxu0
      %v2257 = vadd.f32 %v2027, %v2256
      %v2258 = vpop.f32.mrb[0].mxu0
      %2259 = vmatprep.mubr.f32.mxu0 0.0
      %2260 = vmatmul.mubr.f32.gmra.mrb[0].mxu0 %v2070
      %v2261 = vpop.f32.mrb[0].mxu0
      %v2262 = vadd.f32 %v2027, %v2261
      %v2263 = vpop.f32.mrb[0].mxu0
      %2264 = vmatprep.mubr.f32.mxu0 0.0
      %2265 = vmatmul.mubr.f32.gmra.mrb[0].mxu0 %v2073
      %v2266 = vpop.f32.mrb[0].mxu0
      %v2267 = vadd.f32 %v2027, %v2266
      %v2268 = vpop.f32.mrb[0].mxu0
      %2269 = vmatprep.mubr.f32.mxu0 0.0
      %2270 = vmatmul.mubr.f32.gmra.mrb[0].mxu0 %v2076
      %v2271 = vpop.f32.mrb[0].mxu0
      %v2272 = vadd.f32 %v2027, %v2271
      %v2273 = vpop.f32.mrb[0].mxu0
      %2274 = vmatprep.mubr.f32.mxu0 0.0
      %2275 = vmatmul.mubr.f32.gmra.mrb[0].mxu0 %v2079
      %v2276 = vpop.f32.mrb[0].mxu0
      %v2277 = vadd.f32 %v2027, %v2276
      %v2278 = vpop.f32.mrb[0].mxu0
      %2279 = vmatprep.mubr.f32.mxu0 0.0
      %2280 = vmatmul.mubr.f32.gmra.mrb[0].mxu0 %v2082
      %v2281 = vpop.f32.mrb[0].mxu0
      %v2282 = vadd.f32 %v2027, %v2281
      %v2283 = vpop.f32.mrb[0].mxu0
      %2284 = vmatprep.mubr.f32.mxu0 0.0
      %2285 = vmatmul.mubr.f32.gmra.mrb[0].mxu0 %v2085
      %v2286 = vpop.f32.mrb[0].mxu0
      %v2287 = vadd.f32 %v2027, %v2286
      %v2288 = vpop.f32.mrb[0].mxu0
      %2289 = vmatprep.mubr.f32.mxu0 0.0
      %2290 = vmatmul.mubr.f32.gmra.mrb[0].mxu0 %v2088
      %v2291 = vpop.f32.mrb[0].mxu0
      %v2292 = vadd.f32 %v2027, %v2291
      %v2293 = vpop.f32.mrb[0].mxu0
      %2294 = vmatprep.mubr.f32.mxu0 0.0
      %2295 = vmatmul.mubr.f32.gmra.mrb[0].mxu0 %v2091
      %v2296 = vpop.f32.mrb[0].mxu0
      %v2297 = vadd.f32 %v2027, %v2296
      %v2298 = vpop.f32.mrb[0].mxu0
      %2299 = vmatprep.mubr.f32.mxu0 0.0
      %2300 = vmatmul.mubr.f32.gmra.mrb[0].mxu0 %v2094
      %v2301 = vpop.f32.mrb[0].mxu0
      %v2302 = vadd.f32 %v2027, %v2301
      %v2303 = vpop.f32.mrb[0].mxu0
      %2304 = vmatprep.mubr.f32.mxu0 0.0
      %2305 = vmatmul.mubr.f32.gmra.mrb[0].mxu0 %v2097
      %v2306 = vpop.f32.mrb[0].mxu0
      %v2307 = vadd.f32 %v2027, %v2306
      %v2308 = vpop.f32.mrb[0].mxu0
      %2309 = vmatprep.mubr.f32.mxu0 0.0
      %2310 = vmatmul.mubr.f32.gmra.mrb[0].mxu0 %v2100
      %v2311 = vpop.f32.mrb[0].mxu0
      %v2312 = vadd.f32 %v2027, %v2311
      %v2313 = vpop.f32.mrb[0].mxu0
      %2314 = vmatprep.mubr.f32.mxu0 0.0
      %2315 = vmatmul.mubr.f32.gmra.mrb[0].mxu0 %v2103
      %v2316 = vpop.f32.mrb[0].mxu0
      %v2317 = vadd.f32 %v2027, %v2316
      %v2318 = vpop.f32.mrb[0].mxu0
      %2319 = vmatprep.mubr.f32.mxu0 0.0
      %2320 = vmatmul.mubr.f32.gmra.mrb[0].mxu0 %v2106
      %v2321 = vpop.f32.mrb[0].mxu0
      %v2322 = vadd.f32 %v2027, %v2321
      %v2323 = vpop.f32.mrb[0].mxu0
      %2324 = vmatprep.mubr.f32.mxu0 0.0
      %2325 = vmatmul.mubr.f32.gmra.mrb[0].mxu0 %v2109
      %v2326 = vpop.f32.mrb[0].mxu0
      %v2327 = vadd.f32 %v2027, %v2326
      %v2328 = vpop.f32.mrb[0].mxu0
      %2329 = vmatprep.mubr.f32.mxu0 0.0
      %2330 = vmatmul.mubr.f32.gmra.mrb[0].mxu0 %v2112
      %v2331 = vpop.f32.mrb[0].mxu0
      %v2332 = vadd.f32 %v2027, %v2331
      %v2333 = vpop.f32.mrb[0].mxu0
      %2334 = vmatprep.mubr.f32.mxu0 0.0
      %2335 = vmatmul.mubr.f32.gmra.mrb[0].mxu0 %v2115
      %v2336 = vpop.f32.mrb[0].mxu0
      %v2337 = vadd.f32 %v2027, %v2336
      %v2338 = vpop.f32.mrb[0].mxu0
      %2339 = vmatprep.mubr.f32.mxu0 0.0
      %2340 = vmatmul.mubr.f32.gmra.mrb[0].mxu0 %v2118
      %v2341 = vpop.f32.mrb[0].mxu0
      %v2342 = vadd.f32 %v2027, %v2341
      %v2343 = vpop.f32.mrb[0].mxu0
      %2344 = vmatprep.mubr.f32.mxu0 0.0
      %2345 = vmatmul.mubr.f32.gmra.mrb[0].mxu0 %v2121
      %v2346 = vpop.f32.mrb[0].mxu0
      %v2347 = vadd.f32 %v2027, %v2346
      %v2348 = vpop.f32.mrb[0].mxu0
      %2349 = vmatprep.mubr.f32.mxu0 0.0
      %2350 = vmatmul.mubr.f32.gmra.mrb[0].mxu0 %v2124
      %v2351 = vpop.f32.mrb[0].mxu0
      %v2352 = vadd.f32 %v2027, %v2351
      %v2353 = vpop.f32.mrb[0].mxu0
      %2354 = vdwg.mxu0
      %2355 = vst.msk [vmem:[#allocation4] sm:$0xff] %vm258, %v2197
      %2356 = vst.msk [vmem:[#allocation4 + $0x8] sm:$0xff] %vm258, %v2202
      %2357 = vst.msk [vmem:[#allocation4 + $0x10] sm:$0xff] %vm258, %v2207
      %2358 = vst.msk [vmem:[#allocation4 + $0x18] sm:$0xff] %vm258, %v2212
      %2359 = vst.msk [vmem:[#allocation4 + $0x20] sm:$0xff] %vm258, %v2217
      %2360 = vst.msk [vmem:[#allocation4 + $0x28] sm:$0xff] %vm258, %v2222
      %2361 = vst.msk [vmem:[#allocation4 + $0x30] sm:$0xff] %vm258, %v2227
      %2362 = vst.msk [vmem:[#allocation4 + $0x38] sm:$0xff] %vm258, %v2232
      %2363 = vst.msk [vmem:[#allocation4 + $0x40] sm:$0xff] %vm258, %v2237
      %2364 = vst.msk [vmem:[#allocation4 + $0x48] sm:$0xff] %vm258, %v2242
      %2365 = vst.msk [vmem:[#allocation4 + $0x50] sm:$0xff] %vm258, %v2247
      %2366 = vst.msk [vmem:[#allocation4 + $0x58] sm:$0xff] %vm258, %v2252
      %2367 = vst.msk [vmem:[#allocation4 + $0x60] sm:$0xff] %vm258, %v2257
      %2368 = vst.msk [vmem:[#allocation4 + $0x68] sm:$0xff] %vm258, %v2262
      %2369 = vst.msk [vmem:[#allocation4 + $0x70] sm:$0xff] %vm258, %v2267
      %2370 = vst.msk [vmem:[#allocation4 + $0x78] sm:$0xff] %vm258, %v2272
      %2371 = vst.msk [vmem:[#allocation4 + $0x80] sm:$0xff] %vm258, %v2277
      %2372 = vst.msk [vmem:[#allocation4 + $0x88] sm:$0xff] %vm258, %v2282
      %2373 = vst.msk [vmem:[#allocation4 + $0x90] sm:$0xff] %vm258, %v2287
      %2374 = vst.msk [vmem:[#allocation4 + $0x98] sm:$0xff] %vm258, %v2292
      %2375 = vst.msk [vmem:[#allocation4 + $0xa0] sm:$0xff] %vm258, %v2297
      %2376 = vst.msk [vmem:[#allocation4 + $0xa8] sm:$0xff] %vm258, %v2302
      %2377 = vst.msk [vmem:[#allocation4 + $0xb0] sm:$0xff] %vm258, %v2307
      %2378 = vst.msk [vmem:[#allocation4 + $0xb8] sm:$0xff] %vm258, %v2312
      %2379 = vst.msk [vmem:[#allocation4 + $0xc0] sm:$0xff] %vm258, %v2317
      %2380 = vst.msk [vmem:[#allocation4 + $0xc8] sm:$0xff] %vm258, %v2322
      %2381 = vst.msk [vmem:[#allocation4 + $0xd0] sm:$0xff] %vm258, %v2327
      %2382 = vst.msk [vmem:[#allocation4 + $0xd8] sm:$0xff] %vm258, %v2332
      %2383 = vst.msk [vmem:[#allocation4 + $0xe0] sm:$0xff] %vm258, %v2337
      %2384 = vst.msk [vmem:[#allocation4 + $0xe8] sm:$0xff] %vm258, %v2342
      %2385 = vst.msk [vmem:[#allocation4 + $0xf0] sm:$0xff] %vm258, %v2347
      %2386 = vst.msk [vmem:[#allocation4 + $0xf8] sm:$0xff] %vm258, %v2352
      %v2387 = vld [vmem:[#allocation5] sm:$0x1]
      %v2388 = vsel %vm258, %v2197, 0.0
      %v2389 = vsel %vm258, %v2202, 0.0
      %v2390 = vadd.f32 %v2388, %v2389
      %v2391 = vsel %vm258, %v2207, 0.0
      %v2392 = vadd.f32 %v2390, %v2391
      %v2393 = vsel %vm258, %v2212, 0.0
      %v2394 = vadd.f32 %v2392, %v2393
      %v2395 = vsel %vm258, %v2217, 0.0
      %v2396 = vadd.f32 %v2394, %v2395
      %v2397 = vsel %vm258, %v2222, 0.0
      %v2398 = vadd.f32 %v2396, %v2397
      %v2399 = vsel %vm258, %v2227, 0.0
      %v2400 = vadd.f32 %v2398, %v2399
      %v2401 = vsel %vm258, %v2232, 0.0
      %v2402 = vadd.f32 %v2400, %v2401
      %v2403 = vsel %vm258, %v2237, 0.0
      %v2404 = vadd.f32 %v2402, %v2403
      %v2405 = vsel %vm258, %v2242, 0.0
      %v2406 = vadd.f32 %v2404, %v2405
      %v2407 = vsel %vm258, %v2247, 0.0
      %v2408 = vadd.f32 %v2406, %v2407
      %v2409 = vsel %vm258, %v2252, 0.0
      %v2410 = vadd.f32 %v2408, %v2409
      %v2411 = vsel %vm258, %v2257, 0.0
      %v2412 = vadd.f32 %v2410, %v2411
      %v2413 = vsel %vm258, %v2262, 0.0
      %v2414 = vadd.f32 %v2412, %v2413
      %v2415 = vsel %vm258, %v2267, 0.0
      %v2416 = vadd.f32 %v2414, %v2415
      %v2417 = vsel %vm258, %v2272, 0.0
      %v2418 = vadd.f32 %v2416, %v2417
      %v2419 = vsel %vm258, %v2277, 0.0
      %v2420 = vadd.f32 %v2418, %v2419
      %v2421 = vsel %vm258, %v2282, 0.0
      %v2422 = vadd.f32 %v2420, %v2421
      %v2423 = vsel %vm258, %v2287, 0.0
      %v2424 = vadd.f32 %v2422, %v2423
      %v2425 = vsel %vm258, %v2292, 0.0
      %v2426 = vadd.f32 %v2424, %v2425
      %v2427 = vsel %vm258, %v2297, 0.0
      %v2428 = vadd.f32 %v2426, %v2427
      %v2429 = vsel %vm258, %v2302, 0.0
      %v2430 = vadd.f32 %v2428, %v2429
      %v2431 = vsel %vm258, %v2307, 0.0
      %v2432 = vadd.f32 %v2430, %v2431
      %v2433 = vsel %vm258, %v2312, 0.0
      %v2434 = vadd.f32 %v2432, %v2433
      %v2435 = vsel %vm258, %v2317, 0.0
      %v2436 = vadd.f32 %v2434, %v2435
      %v2437 = vsel %vm258, %v2322, 0.0
      %v2438 = vadd.f32 %v2436, %v2437
      %v2439 = vsel %vm258, %v2327, 0.0
      %v2440 = vadd.f32 %v2438, %v2439
      %v2441 = vsel %vm258, %v2332, 0.0
      %v2442 = vadd.f32 %v2440, %v2441
      %v2443 = vsel %vm258, %v2337, 0.0
      %v2444 = vadd.f32 %v2442, %v2443
      %v2445 = vsel %vm258, %v2342, 0.0
      %v2446 = vadd.f32 %v2444, %v2445
      %v2447 = vsel %vm258, %v2347, 0.0
      %v2448 = vadd.f32 %v2446, %v2447
      %v2449 = vsel %vm258, %v2352, 0.0
      %v2450 = vadd.f32 %v2448, %v2449
      %v2451 = vrot.slane %v2450, 4
      %v2452 = vadd.f32 %v2450, %v2451
      %v2453 = vrot.slane %v2452, 2
      %v2454 = vadd.f32 %v2452, %v2453
      %v2455 = vrot.slane %v2454, 1
      %v2456 = vadd.f32 %v2454, %v2455
      %v2457 = vadd.f32 %v2387, %v2456
      %2458 = vst.msk [vmem:[#allocation5] sm:$0x1] %vm320, %v2457
      %v2459 = vld [vmem:[#allocation6] sm:$0x1]
      %v2460 = vmul.f32 %v2197, %v2197
      %v2461 = vmul.f32 %v2202, %v2202
      %v2462 = vmul.f32 %v2207, %v2207
      %v2463 = vmul.f32 %v2212, %v2212
      %v2464 = vmul.f32 %v2217, %v2217
      %v2465 = vmul.f32 %v2222, %v2222
      %v2466 = vmul.f32 %v2227, %v2227
      %v2467 = vmul.f32 %v2232, %v2232
      %v2468 = vmul.f32 %v2237, %v2237
      %v2469 = vmul.f32 %v2242, %v2242
      %v2470 = vmul.f32 %v2247, %v2247
      %v2471 = vmul.f32 %v2252, %v2252
      %v2472 = vmul.f32 %v2257, %v2257
      %v2473 = vmul.f32 %v2262, %v2262
      %v2474 = vmul.f32 %v2267, %v2267
      %v2475 = vmul.f32 %v2272, %v2272
      %v2476 = vmul.f32 %v2277, %v2277
      %v2477 = vmul.f32 %v2282, %v2282
      %v2478 = vmul.f32 %v2287, %v2287
      %v2479 = vmul.f32 %v2292, %v2292
      %v2480 = vmul.f32 %v2297, %v2297
      %v2481 = vmul.f32 %v2302, %v2302
      %v2482 = vmul.f32 %v2307, %v2307
      %v2483 = vmul.f32 %v2312, %v2312
      %v2484 = vmul.f32 %v2317, %v2317
      %v2485 = vmul.f32 %v2322, %v2322
      %v2486 = vmul.f32 %v2327, %v2327
      %v2487 = vmul.f32 %v2332, %v2332
      %v2488 = vmul.f32 %v2337, %v2337
      %v2489 = vmul.f32 %v2342, %v2342
      %v2490 = vmul.f32 %v2347, %v2347
      %v2491 = vmul.f32 %v2352, %v2352
      %v2492 = vsel %vm258, %v2460, 0.0
      %v2493 = vsel %vm258, %v2461, 0.0
      %v2494 = vadd.f32 %v2492, %v2493
      %v2495 = vsel %vm258, %v2462, 0.0
      %v2496 = vadd.f32 %v2494, %v2495
      %v2497 = vsel %vm258, %v2463, 0.0
      %v2498 = vadd.f32 %v2496, %v2497
      %v2499 = vsel %vm258, %v2464, 0.0
      %v2500 = vadd.f32 %v2498, %v2499
      %v2501 = vsel %vm258, %v2465, 0.0
      %v2502 = vadd.f32 %v2500, %v2501
      %v2503 = vsel %vm258, %v2466, 0.0
      %v2504 = vadd.f32 %v2502, %v2503
      %v2505 = vsel %vm258, %v2467, 0.0
      %v2506 = vadd.f32 %v2504, %v2505
      %v2507 = vsel %vm258, %v2468, 0.0
      %v2508 = vadd.f32 %v2506, %v2507
      %v2509 = vsel %vm258, %v2469, 0.0
      %v2510 = vadd.f32 %v2508, %v2509
      %v2511 = vsel %vm258, %v2470, 0.0
      %v2512 = vadd.f32 %v2510, %v2511
      %v2513 = vsel %vm258, %v2471, 0.0
      %v2514 = vadd.f32 %v2512, %v2513
      %v2515 = vsel %vm258, %v2472, 0.0
      %v2516 = vadd.f32 %v2514, %v2515
      %v2517 = vsel %vm258, %v2473, 0.0
      %v2518 = vadd.f32 %v2516, %v2517
      %v2519 = vsel %vm258, %v2474, 0.0
      %v2520 = vadd.f32 %v2518, %v2519
      %v2521 = vsel %vm258, %v2475, 0.0
      %v2522 = vadd.f32 %v2520, %v2521
      %v2523 = vsel %vm258, %v2476, 0.0
      %v2524 = vadd.f32 %v2522, %v2523
      %v2525 = vsel %vm258, %v2477, 0.0
      %v2526 = vadd.f32 %v2524, %v2525
      %v2527 = vsel %vm258, %v2478, 0.0
      %v2528 = vadd.f32 %v2526, %v2527
      %v2529 = vsel %vm258, %v2479, 0.0
      %v2530 = vadd.f32 %v2528, %v2529
      %v2531 = vsel %vm258, %v2480, 0.0
      %v2532 = vadd.f32 %v2530, %v2531
      %v2533 = vsel %vm258, %v2481, 0.0
      %v2534 = vadd.f32 %v2532, %v2533
      %v2535 = vsel %vm258, %v2482, 0.0
      %v2536 = vadd.f32 %v2534, %v2535
      %v2537 = vsel %vm258, %v2483, 0.0
      %v2538 = vadd.f32 %v2536, %v2537
      %v2539 = vsel %vm258, %v2484, 0.0
      %v2540 = vadd.f32 %v2538, %v2539
      %v2541 = vsel %vm258, %v2485, 0.0
      %v2542 = vadd.f32 %v2540, %v2541
      %v2543 = vsel %vm258, %v2486, 0.0
      %v2544 = vadd.f32 %v2542, %v2543
      %v2545 = vsel %vm258, %v2487, 0.0
      %v2546 = vadd.f32 %v2544, %v2545
      %v2547 = vsel %vm258, %v2488, 0.0
      %v2548 = vadd.f32 %v2546, %v2547
      %v2549 = vsel %vm258, %v2489, 0.0
      %v2550 = vadd.f32 %v2548, %v2549
      %v2551 = vsel %vm258, %v2490, 0.0
      %v2552 = vadd.f32 %v2550, %v2551
      %v2553 = vsel %vm258, %v2491, 0.0
      %v2554 = vadd.f32 %v2552, %v2553
      %v2555 = vrot.slane %v2554, 4
      %v2556 = vadd.f32 %v2554, %v2555
      %v2557 = vrot.slane %v2556, 2
      %v2558 = vadd.f32 %v2556, %v2557
      %v2559 = vrot.slane %v2558, 1
      %v2560 = vadd.f32 %v2558, %v2559
      %v2561 = vadd.f32 %v2459, %v2560
      %2562 = vst.msk [vmem:[#allocation6] sm:$0x1] %vm320, %v2561
      %v2563 = vld [vmem:[#allocation5] sm:$0x1]
      %v2564 = vmul.f32 %v2563, 0.00390625
      %v2565 = vld [vmem:[#allocation6] sm:$0x1]
      %v2566 = vmul.f32 %v2565, 0.00390625
      %v2567 = vmul.f32 %v2564, %v2564
      %v2568 = vsub.f32 %v2566, %v2567
      %v2569 = vmax.f32 %v2568, 0.0
      %v2570 = vadd.f32 %v2569, 1e-05
      %v2571 = vrsqrt.pop %v2570
      %v2572 = vld [vmem:[#allocation4] sm:$0xff]
      %v2573 = vld [vmem:[#allocation4 + $0x8] sm:$0xff]
      %v2574 = vld [vmem:[#allocation4 + $0x10] sm:$0xff]
      %v2575 = vld [vmem:[#allocation4 + $0x18] sm:$0xff]
      %v2576 = vld [vmem:[#allocation4 + $0x20] sm:$0xff]
      %v2577 = vld [vmem:[#allocation4 + $0x28] sm:$0xff]
      %v2578 = vld [vmem:[#allocation4 + $0x30] sm:$0xff]
      %v2579 = vld [vmem:[#allocation4 + $0x38] sm:$0xff]
      %v2580 = vld [vmem:[#allocation4 + $0x40] sm:$0xff]
      %v2581 = vld [vmem:[#allocation4 + $0x48] sm:$0xff]
      %v2582 = vld [vmem:[#allocation4 + $0x50] sm:$0xff]
      %v2583 = vld [vmem:[#allocation4 + $0x58] sm:$0xff]
      %v2584 = vld [vmem:[#allocation4 + $0x60] sm:$0xff]
      %v2585 = vld [vmem:[#allocation4 + $0x68] sm:$0xff]
      %v2586 = vld [vmem:[#allocation4 + $0x70] sm:$0xff]
      %v2587 = vld [vmem:[#allocation4 + $0x78] sm:$0xff]
      %v2588 = vld [vmem:[#allocation4 + $0x80] sm:$0xff]
      %v2589 = vld [vmem:[#allocation4 + $0x88] sm:$0xff]
      %v2590 = vld [vmem:[#allocation4 + $0x90] sm:$0xff]
      %v2591 = vld [vmem:[#allocation4 + $0x98] sm:$0xff]
      %v2592 = vld [vmem:[#allocation4 + $0xa0] sm:$0xff]
      %v2593 = vld [vmem:[#allocation4 + $0xa8] sm:$0xff]
      %v2594 = vld [vmem:[#allocation4 + $0xb0] sm:$0xff]
      %v2595 = vld [vmem:[#allocation4 + $0xb8] sm:$0xff]
      %v2596 = vld [vmem:[#allocation4 + $0xc0] sm:$0xff]
      %v2597 = vld [vmem:[#allocation4 + $0xc8] sm:$0xff]
      %v2598 = vld [vmem:[#allocation4 + $0xd0] sm:$0xff]
      %v2599 = vld [vmem:[#allocation4 + $0xd8] sm:$0xff]
      %v2600 = vld [vmem:[#allocation4 + $0xe0] sm:$0xff]
      %v2601 = vld [vmem:[#allocation4 + $0xe8] sm:$0xff]
      %v2602 = vld [vmem:[#allocation4 + $0xf0] sm:$0xff]
      %v2603 = vld [vmem:[#allocation4 + $0xf8] sm:$0xff]
      %v2605 = vlaneseq
      %v2606 = vshrl.u32 %v2605, 7
      %v2607 = vsub.s32 0, %v2606
      %v2608 = vrot.slane %v2564, %v2607
      %v2610 = vsub.f32 %v2572, %v2608
      %v2611 = vsub.f32 %v2573, %v2608
      %v2612 = vsub.f32 %v2574, %v2608
      %v2613 = vsub.f32 %v2575, %v2608
      %v2614 = vsub.f32 %v2576, %v2608
      %v2615 = vsub.f32 %v2577, %v2608
      %v2616 = vsub.f32 %v2578, %v2608
      %v2617 = vsub.f32 %v2579, %v2608
      %v2618 = vsub.f32 %v2580, %v2608
      %v2619 = vsub.f32 %v2581, %v2608
      %v2620 = vsub.f32 %v2582, %v2608
      %v2621 = vsub.f32 %v2583, %v2608
      %v2622 = vsub.f32 %v2584, %v2608
      %v2623 = vsub.f32 %v2585, %v2608
      %v2624 = vsub.f32 %v2586, %v2608
      %v2625 = vsub.f32 %v2587, %v2608
      %v2626 = vsub.f32 %v2588, %v2608
      %v2627 = vsub.f32 %v2589, %v2608
      %v2628 = vsub.f32 %v2590, %v2608
      %v2629 = vsub.f32 %v2591, %v2608
      %v2630 = vsub.f32 %v2592, %v2608
      %v2631 = vsub.f32 %v2593, %v2608
      %v2632 = vsub.f32 %v2594, %v2608
      %v2633 = vsub.f32 %v2595, %v2608
      %v2634 = vsub.f32 %v2596, %v2608
      %v2635 = vsub.f32 %v2597, %v2608
      %v2636 = vsub.f32 %v2598, %v2608
      %v2637 = vsub.f32 %v2599, %v2608
      %v2638 = vsub.f32 %v2600, %v2608
      %v2639 = vsub.f32 %v2601, %v2608
      %v2640 = vsub.f32 %v2602, %v2608
      %v2641 = vsub.f32 %v2603, %v2608
      %v2643 = vlaneseq
      %v2644 = vshrl.u32 %v2643, 7
      %v2645 = vsub.s32 0, %v2644
      %v2646 = vrot.slane %v2571, %v2645
      %v2648 = vmul.f32 %v2610, %v2646
      %v2649 = vmul.f32 %v2611, %v2646
      %v2650 = vmul.f32 %v2612, %v2646
      %v2651 = vmul.f32 %v2613, %v2646
      %v2652 = vmul.f32 %v2614, %v2646
      %v2653 = vmul.f32 %v2615, %v2646
      %v2654 = vmul.f32 %v2616, %v2646
      %v2655 = vmul.f32 %v2617, %v2646
      %v2656 = vmul.f32 %v2618, %v2646
      %v2657 = vmul.f32 %v2619, %v2646
      %v2658 = vmul.f32 %v2620, %v2646
      %v2659 = vmul.f32 %v2621, %v2646
      %v2660 = vmul.f32 %v2622, %v2646
      %v2661 = vmul.f32 %v2623, %v2646
      %v2662 = vmul.f32 %v2624, %v2646
      %v2663 = vmul.f32 %v2625, %v2646
      %v2664 = vmul.f32 %v2626, %v2646
      %v2665 = vmul.f32 %v2627, %v2646
      %v2666 = vmul.f32 %v2628, %v2646
      %v2667 = vmul.f32 %v2629, %v2646
      %v2668 = vmul.f32 %v2630, %v2646
      %v2669 = vmul.f32 %v2631, %v2646
      %v2670 = vmul.f32 %v2632, %v2646
      %v2671 = vmul.f32 %v2633, %v2646
      %v2672 = vmul.f32 %v2634, %v2646
      %v2673 = vmul.f32 %v2635, %v2646
      %v2674 = vmul.f32 %v2636, %v2646
      %v2675 = vmul.f32 %v2637, %v2646
      %v2676 = vmul.f32 %v2638, %v2646
      %v2677 = vmul.f32 %v2639, %v2646
      %v2678 = vmul.f32 %v2640, %v2646
      %v2679 = vmul.f32 %v2641, %v2646
      %v2680 = vmax.f32 %v2648, 0.0
      %v2681 = vmax.f32 %v2649, 0.0
      %v2682 = vmax.f32 %v2650, 0.0
      %v2683 = vmax.f32 %v2651, 0.0
      %v2684 = vmax.f32 %v2652, 0.0
      %v2685 = vmax.f32 %v2653, 0.0
      %v2686 = vmax.f32 %v2654, 0.0
      %v2687 = vmax.f32 %v2655, 0.0
      %v2688 = vmax.f32 %v2656, 0.0
      %v2689 = vmax.f32 %v2657, 0.0
      %v2690 = vmax.f32 %v2658, 0.0
      %v2691 = vmax.f32 %v2659, 0.0
      %v2692 = vmax.f32 %v2660, 0.0
      %v2693 = vmax.f32 %v2661, 0.0
      %v2694 = vmax.f32 %v2662, 0.0
      %v2695 = vmax.f32 %v2663, 0.0
      %v2696 = vmax.f32 %v2664, 0.0
      %v2697 = vmax.f32 %v2665, 0.0
      %v2698 = vmax.f32 %v2666, 0.0
      %v2699 = vmax.f32 %v2667, 0.0
      %v2700 = vmax.f32 %v2668, 0.0
      %v2701 = vmax.f32 %v2669, 0.0
      %v2702 = vmax.f32 %v2670, 0.0
      %v2703 = vmax.f32 %v2671, 0.0
      %v2704 = vmax.f32 %v2672, 0.0
      %v2705 = vmax.f32 %v2673, 0.0
      %v2706 = vmax.f32 %v2674, 0.0
      %v2707 = vmax.f32 %v2675, 0.0
      %v2708 = vmax.f32 %v2676, 0.0
      %v2709 = vmax.f32 %v2677, 0.0
      %v2710 = vmax.f32 %v2678, 0.0
      %v2711 = vmax.f32 %v2679, 0.0
      %2712 = vst.msk [vmem:[%s257 + $0x1] sm:$0xff] %vm258, %v2680
      %2713 = vst.msk [vmem:[%s257 + $0x9] sm:$0xff] %vm258, %v2681
      %2714 = vst.msk [vmem:[%s257 + $0x19] sm:$0xff] %vm258, %v2682
      %2715 = vst.msk [vmem:[%s257 + $0x21] sm:$0xff] %vm258, %v2683
      %2716 = vst.msk [vmem:[%s257 + $0x31] sm:$0xff] %vm258, %v2684
      %2717 = vst.msk [vmem:[%s257 + $0x39] sm:$0xff] %vm258, %v2685
      %2718 = vst.msk [vmem:[%s257 + $0x49] sm:$0xff] %vm258, %v2686
      %2719 = vst.msk [vmem:[%s257 + $0x51] sm:$0xff] %vm258, %v2687
      %2720 = vst.msk [vmem:[%s257 + $0x61] sm:$0xff] %vm258, %v2688
      %2721 = vst.msk [vmem:[%s257 + $0x69] sm:$0xff] %vm258, %v2689
      %2722 = vst.msk [vmem:[%s257 + $0x79] sm:$0xff] %vm258, %v2690
      %2723 = vst.msk [vmem:[%s257 + $0x81] sm:$0xff] %vm258, %v2691
      %2724 = vst.msk [vmem:[%s257 + $0x91] sm:$0xff] %vm258, %v2692
      %2725 = vst.msk [vmem:[%s257 + $0x99] sm:$0xff] %vm258, %v2693
      %2726 = vst.msk [vmem:[%s257 + $0xa9] sm:$0xff] %vm258, %v2694
      %2727 = vst.msk [vmem:[%s257 + $0xb1] sm:$0xff] %vm258, %v2695
      %2728 = vst.msk [vmem:[%s257 + $0xc1] sm:$0xff] %vm258, %v2696
      %2729 = vst.msk [vmem:[%s257 + $0xc9] sm:$0xff] %vm258, %v2697
      %2730 = vst.msk [vmem:[%s257 + $0xd9] sm:$0xff] %vm258, %v2698
      %2731 = vst.msk [vmem:[%s257 + $0xe1] sm:$0xff] %vm258, %v2699
      %2732 = vst.msk [vmem:[%s257 + $0xf1] sm:$0xff] %vm258, %v2700
      %2733 = vst.msk [vmem:[%s257 + $0xf9] sm:$0xff] %vm258, %v2701
      %2734 = vst.msk [vmem:[%s257 + $0x109] sm:$0xff] %vm258, %v2702
      %2735 = vst.msk [vmem:[%s257 + $0x111] sm:$0xff] %vm258, %v2703
      %2736 = vst.msk [vmem:[%s257 + $0x121] sm:$0xff] %vm258, %v2704
      %2737 = vst.msk [vmem:[%s257 + $0x129] sm:$0xff] %vm258, %v2705
      %2738 = vst.msk [vmem:[%s257 + $0x139] sm:$0xff] %vm258, %v2706
      %2739 = vst.msk [vmem:[%s257 + $0x141] sm:$0xff] %vm258, %v2707
      %2740 = vst.msk [vmem:[%s257 + $0x151] sm:$0xff] %vm258, %v2708
      %2741 = vst.msk [vmem:[%s257 + $0x159] sm:$0xff] %vm258, %v2709
      %2742 = vst.msk [vmem:[%s257 + $0x169] sm:$0xff] %vm258, %v2710
      %2743 = vst.msk [vmem:[%s257 + $0x171] sm:$0xff] %vm258, %v2711
      %v2744 = vld [vmem:[%s291 + $0x1] sm:$0xff]
      %v2745 = vld [vmem:[%s291 + $0x9] sm:$0xff]
      %2746 = vst.msk [vmem:[#allocation2 + $0x1] sm:$0xff] %vm258, %v2744
      %2747 = vst.msk [vmem:[#allocation2 + $0x9] sm:$0xff] %vm258, %v2745
      %v2748 = vld [vmem:[%s296 + $0x1] sm:$0xff]
      %v2749 = vld [vmem:[%s296 + $0x9] sm:$0xff]
      %2750 = vst.msk [vmem:[%s299 + $0x1] sm:$0xff] %vm258, %v2748
      %2751 = vst.msk [vmem:[%s299 + $0x9] sm:$0xff] %vm258, %v2749
      %v2752 = vld [vmem:[#allocation2 + $0x2] sm:$0x1]
      %v2753 = vld [vmem:[#allocation2 + $0x1a] sm:$0x1]
      %v2754 = vld [vmem:[#allocation2 + $0x32] sm:$0x1]
      %v2755 = vld [vmem:[#allocation2 + $0x4a] sm:$0x1]
      %v2756 = vld [vmem:[#allocation2 + $0x62] sm:$0x1]
      %v2757 = vld [vmem:[#allocation2 + $0x7a] sm:$0x1]
      %v2758 = vld [vmem:[#allocation2 + $0x92] sm:$0x1]
      %v2759 = vld [vmem:[#allocation2 + $0xaa] sm:$0x1]
      %v2760 = vld [vmem:[#allocation2 + $0xc2] sm:$0x1]
      %v2761 = vld [vmem:[#allocation2 + $0xda] sm:$0x1]
      %v2762 = vld [vmem:[#allocation2 + $0xf2] sm:$0x1]
      %v2763 = vld [vmem:[#allocation2 + $0x10a] sm:$0x1]
      %v2764 = vld [vmem:[#allocation2 + $0x122] sm:$0x1]
      %v2765 = vld [vmem:[#allocation2 + $0x13a] sm:$0x1]
      %v2766 = vld [vmem:[#allocation2 + $0x152] sm:$0x1]
      %v2767 = vld [vmem:[#allocation2 + $0x16a] sm:$0x1]
      %v2768 = vld [vmem:[#allocation2 + $0x182] sm:$0x1]
      %v2769 = vld [vmem:[#allocation2 + $0x19a] sm:$0x1]
      %2770 = vst.msk [vmem:[#allocation2] sm:$0x1] %vm320, %v2752
      %2771 = vst.msk [vmem:[#allocation2 + $0x18] sm:$0x1] %vm320, %v2753
      %2772 = vst.msk [vmem:[#allocation2 + $0x30] sm:$0x1] %vm320, %v2754
      %2773 = vst.msk [vmem:[#allocation2 + $0x48] sm:$0x1] %vm320, %v2755
      %2774 = vst.msk [vmem:[#allocation2 + $0x60] sm:$0x1] %vm320, %v2756
      %2775 = vst.msk [vmem:[#allocation2 + $0x78] sm:$0x1] %vm320, %v2757
      %2776 = vst.msk [vmem:[#allocation2 + $0x90] sm:$0x1] %vm320, %v2758
      %2777 = vst.msk [vmem:[#allocation2 + $0xa8] sm:$0x1] %vm320, %v2759
      %2778 = vst.msk [vmem:[#allocation2 + $0xc0] sm:$0x1] %vm320, %v2760
      %2779 = vst.msk [vmem:[#allocation2 + $0xd8] sm:$0x1] %vm320, %v2761
      %2780 = vst.msk [vmem:[#allocation2 + $0xf0] sm:$0x1] %vm320, %v2762
      %2781 = vst.msk [vmem:[#allocation2 + $0x108] sm:$0x1] %vm320, %v2763
      %2782 = vst.msk [vmem:[#allocation2 + $0x120] sm:$0x1] %vm320, %v2764
      %2783 = vst.msk [vmem:[#allocation2 + $0x138] sm:$0x1] %vm320, %v2765
      %2784 = vst.msk [vmem:[#allocation2 + $0x150] sm:$0x1] %vm320, %v2766
      %2785 = vst.msk [vmem:[#allocation2 + $0x168] sm:$0x1] %vm320, %v2767
      %2786 = vst.msk [vmem:[#allocation2 + $0x180] sm:$0x1] %vm320, %v2768
      %2787 = vst.msk [vmem:[#allocation2 + $0x198] sm:$0x1] %vm320, %v2769
      %v2788 = vld [vmem:[#allocation2 + $0xf] sm:$0x1]
      %v2789 = vld [vmem:[#allocation2 + $0x27] sm:$0x1]
      %v2790 = vld [vmem:[#allocation2 + $0x3f] sm:$0x1]
      %v2791 = vld [vmem:[#allocation2 + $0x57] sm:$0x1]
      %v2792 = vld [vmem:[#allocation2 + $0x6f] sm:$0x1]
      %v2793 = vld [vmem:[#allocation2 + $0x87] sm:$0x1]
      %v2794 = vld [vmem:[#allocation2 + $0x9f] sm:$0x1]
      %v2795 = vld [vmem:[#allocation2 + $0xb7] sm:$0x1]
      %v2796 = vld [vmem:[#allocation2 + $0xcf] sm:$0x1]
      %v2797 = vld [vmem:[#allocation2 + $0xe7] sm:$0x1]
      %v2798 = vld [vmem:[#allocation2 + $0xff] sm:$0x1]
      %v2799 = vld [vmem:[#allocation2 + $0x117] sm:$0x1]
      %v2800 = vld [vmem:[#allocation2 + $0x12f] sm:$0x1]
      %v2801 = vld [vmem:[#allocation2 + $0x147] sm:$0x1]
      %v2802 = vld [vmem:[#allocation2 + $0x15f] sm:$0x1]
      %v2803 = vld [vmem:[#allocation2 + $0x177] sm:$0x1]
      %v2804 = vld [vmem:[#allocation2 + $0x18f] sm:$0x1]
      %v2805 = vld [vmem:[#allocation2 + $0x1a7] sm:$0x1]
      %2806 = vst.msk [vmem:[#allocation2 + $0x11] sm:$0x1] %vm320, %v2788
      %2807 = vst.msk [vmem:[#allocation2 + $0x29] sm:$0x1] %vm320, %v2789
      %2808 = vst.msk [vmem:[#allocation2 + $0x41] sm:$0x1] %vm320, %v2790
      %2809 = vst.msk [vmem:[#allocation2 + $0x59] sm:$0x1] %vm320, %v2791
      %2810 = vst.msk [vmem:[#allocation2 + $0x71] sm:$0x1] %vm320, %v2792
      %2811 = vst.msk [vmem:[#allocation2 + $0x89] sm:$0x1] %vm320, %v2793
      %2812 = vst.msk [vmem:[#allocation2 + $0xa1] sm:$0x1] %vm320, %v2794
      %2813 = vst.msk [vmem:[#allocation2 + $0xb9] sm:$0x1] %vm320, %v2795
      %2814 = vst.msk [vmem:[#allocation2 + $0xd1] sm:$0x1] %vm320, %v2796
      %2815 = vst.msk [vmem:[#allocation2 + $0xe9] sm:$0x1] %vm320, %v2797
      %2816 = vst.msk [vmem:[#allocation2 + $0x101] sm:$0x1] %vm320, %v2798
      %2817 = vst.msk [vmem:[#allocation2 + $0x119] sm:$0x1] %vm320, %v2799
      %2818 = vst.msk [vmem:[#allocation2 + $0x131] sm:$0x1] %vm320, %v2800
      %2819 = vst.msk [vmem:[#allocation2 + $0x149] sm:$0x1] %vm320, %v2801
      %2820 = vst.msk [vmem:[#allocation2 + $0x161] sm:$0x1] %vm320, %v2802
      %2821 = vst.msk [vmem:[#allocation2 + $0x179] sm:$0x1] %vm320, %v2803
      %2822 = vst.msk [vmem:[#allocation2 + $0x191] sm:$0x1] %vm320, %v2804
      %2823 = vst.msk [vmem:[#allocation2 + $0x1a9] sm:$0x1] %vm320, %v2805
      %2824 = vst.msk [vmem:[#allocation5] sm:$0x1] %vm320, 0.0
      %2825 = vst.msk [vmem:[#allocation6] sm:$0x1] %vm320, 0.0
      %v2826 = vld [vmem:[#allocation2] sm:$0xff]
      %v2827 = vld [vmem:[#allocation2 + $0x8] sm:$0xff]
      %v2828 = vld [vmem:[#allocation2 + $0x18] sm:$0xff]
      %v2829 = vld [vmem:[#allocation2 + $0x20] sm:$0xff]
      %v2830 = vld [vmem:[#allocation2 + $0x30] sm:$0xff]
      %v2831 = vld [vmem:[#allocation2 + $0x38] sm:$0xff]
      %v2832 = vld [vmem:[#allocation2 + $0x48] sm:$0xff]
      %v2833 = vld [vmem:[#allocation2 + $0x50] sm:$0xff]
      %v2834 = vld [vmem:[#allocation2 + $0x60] sm:$0xff]
      %v2835 = vld [vmem:[#allocation2 + $0x68] sm:$0xff]
      %v2836 = vld [vmem:[#allocation2 + $0x78] sm:$0xff]
      %v2837 = vld [vmem:[#allocation2 + $0x80] sm:$0xff]
      %v2838 = vld [vmem:[#allocation2 + $0x90] sm:$0xff]
      %v2839 = vld [vmem:[#allocation2 + $0x98] sm:$0xff]
      %v2840 = vld [vmem:[#allocation2 + $0xa8] sm:$0xff]
      %v2841 = vld [vmem:[#allocation2 + $0xb0] sm:$0xff]
      %v2842 = vld [vmem:[#allocation2 + $0xc0] sm:$0xff]
      %v2843 = vld [vmem:[#allocation2 + $0xc8] sm:$0xff]
      %v2844 = vld [vmem:[#allocation2 + $0xd8] sm:$0xff]
      %v2845 = vld [vmem:[#allocation2 + $0xe0] sm:$0xff]
      %v2846 = vld [vmem:[#allocation2 + $0xf0] sm:$0xff]
      %v2847 = vld [vmem:[#allocation2 + $0xf8] sm:$0xff]
      %v2848 = vld [vmem:[#allocation2 + $0x108] sm:$0xff]
      %v2849 = vld [vmem:[#allocation2 + $0x110] sm:$0xff]
      %v2850 = vld [vmem:[#allocation2 + $0x120] sm:$0xff]
      %v2851 = vld [vmem:[#allocation2 + $0x128] sm:$0xff]
      %v2852 = vld [vmem:[#allocation2 + $0x138] sm:$0xff]
      %v2853 = vld [vmem:[#allocation2 + $0x140] sm:$0xff]
      %v2854 = vld [vmem:[#allocation2 + $0x150] sm:$0xff]
      %v2855 = vld [vmem:[#allocation2 + $0x158] sm:$0xff]
      %v2856 = vld [vmem:[#allocation2 + $0x168] sm:$0xff]
      %v2857 = vld [vmem:[#allocation2 + $0x170] sm:$0xff]
      %2858 = vst.msk [vmem:[#allocation3] sm:$0xff] %vm258, %v2826
      %2859 = vst.msk [vmem:[#allocation3 + $0x8] sm:$0xff] %vm258, %v2827
      %2860 = vst.msk [vmem:[#allocation3 + $0x10] sm:$0xff] %vm258, %v2828
      %2861 = vst.msk [vmem:[#allocation3 + $0x18] sm:$0xff] %vm258, %v2829
      %2862 = vst.msk [vmem:[#allocation3 + $0x20] sm:$0xff] %vm258, %v2830
      %2863 = vst.msk [vmem:[#allocation3 + $0x28] sm:$0xff] %vm258, %v2831
      %2864 = vst.msk [vmem:[#allocation3 + $0x30] sm:$0xff] %vm258, %v2832
      %2865 = vst.msk [vmem:[#allocation3 + $0x38] sm:$0xff] %vm258, %v2833
      %2866 = vst.msk [vmem:[#allocation3 + $0x40] sm:$0xff] %vm258, %v2834
      %2867 = vst.msk [vmem:[#allocation3 + $0x48] sm:$0xff] %vm258, %v2835
      %2868 = vst.msk [vmem:[#allocation3 + $0x50] sm:$0xff] %vm258, %v2836
      %2869 = vst.msk [vmem:[#allocation3 + $0x58] sm:$0xff] %vm258, %v2837
      %2870 = vst.msk [vmem:[#allocation3 + $0x60] sm:$0xff] %vm258, %v2838
      %2871 = vst.msk [vmem:[#allocation3 + $0x68] sm:$0xff] %vm258, %v2839
      %2872 = vst.msk [vmem:[#allocation3 + $0x70] sm:$0xff] %vm258, %v2840
      %2873 = vst.msk [vmem:[#allocation3 + $0x78] sm:$0xff] %vm258, %v2841
      %2874 = vst.msk [vmem:[#allocation3 + $0x80] sm:$0xff] %vm258, %v2842
      %2875 = vst.msk [vmem:[#allocation3 + $0x88] sm:$0xff] %vm258, %v2843
      %2876 = vst.msk [vmem:[#allocation3 + $0x90] sm:$0xff] %vm258, %v2844
      %2877 = vst.msk [vmem:[#allocation3 + $0x98] sm:$0xff] %vm258, %v2845
      %2878 = vst.msk [vmem:[#allocation3 + $0xa0] sm:$0xff] %vm258, %v2846
      %2879 = vst.msk [vmem:[#allocation3 + $0xa8] sm:$0xff] %vm258, %v2847
      %2880 = vst.msk [vmem:[#allocation3 + $0xb0] sm:$0xff] %vm258, %v2848
      %2881 = vst.msk [vmem:[#allocation3 + $0xb8] sm:$0xff] %vm258, %v2849
      %2882 = vst.msk [vmem:[#allocation3 + $0xc0] sm:$0xff] %vm258, %v2850
      %2883 = vst.msk [vmem:[#allocation3 + $0xc8] sm:$0xff] %vm258, %v2851
      %2884 = vst.msk [vmem:[#allocation3 + $0xd0] sm:$0xff] %vm258, %v2852
      %2885 = vst.msk [vmem:[#allocation3 + $0xd8] sm:$0xff] %vm258, %v2853
      %2886 = vst.msk [vmem:[#allocation3 + $0xe0] sm:$0xff] %vm258, %v2854
      %2887 = vst.msk [vmem:[#allocation3 + $0xe8] sm:$0xff] %vm258, %v2855
      %2888 = vst.msk [vmem:[#allocation3 + $0xf0] sm:$0xff] %vm258, %v2856
      %2889 = vst.msk [vmem:[#allocation3 + $0xf8] sm:$0xff] %vm258, %v2857
      %v2890 = vld [vmem:[#allocation2 + $0x1] sm:$0xff]
      %v2891 = vld [vmem:[#allocation2 + $0x9] sm:$0xff]
      %v2892 = vld [vmem:[#allocation2 + $0x19] sm:$0xff]
      %v2893 = vld [vmem:[#allocation2 + $0x21] sm:$0xff]
      %v2894 = vld [vmem:[#allocation2 + $0x31] sm:$0xff]
      %v2895 = vld [vmem:[#allocation2 + $0x39] sm:$0xff]
      %v2896 = vld [vmem:[#allocation2 + $0x49] sm:$0xff]
      %v2897 = vld [vmem:[#allocation2 + $0x51] sm:$0xff]
      %v2898 = vld [vmem:[#allocation2 + $0x61] sm:$0xff]
      %v2899 = vld [vmem:[#allocation2 + $0x69] sm:$0xff]
      %v2900 = vld [vmem:[#allocation2 + $0x79] sm:$0xff]
      %v2901 = vld [vmem:[#allocation2 + $0x81] sm:$0xff]
      %v2902 = vld [vmem:[#allocation2 + $0x91] sm:$0xff]
      %v2903 = vld [vmem:[#allocation2 + $0x99] sm:$0xff]
      %v2904 = vld [vmem:[#allocation2 + $0xa9] sm:$0xff]
      %v2905 = vld [vmem:[#allocation2 + $0xb1] sm:$0xff]
      %v2906 = vld [vmem:[#allocation2 + $0xc1] sm:$0xff]
      %v2907 = vld [vmem:[#allocation2 + $0xc9] sm:$0xff]
      %v2908 = vld [vmem:[#allocation2 + $0xd9] sm:$0xff]
      %v2909 = vld [vmem:[#allocation2 + $0xe1] sm:$0xff]
      %v2910 = vld [vmem:[#allocation2 + $0xf1] sm:$0xff]
      %v2911 = vld [vmem:[#allocation2 + $0xf9] sm:$0xff]
      %v2912 = vld [vmem:[#allocation2 + $0x109] sm:$0xff]
      %v2913 = vld [vmem:[#allocation2 + $0x111] sm:$0xff]
      %v2914 = vld [vmem:[#allocation2 + $0x121] sm:$0xff]
      %v2915 = vld [vmem:[#allocation2 + $0x129] sm:$0xff]
      %v2916 = vld [vmem:[#allocation2 + $0x139] sm:$0xff]
      %v2917 = vld [vmem:[#allocation2 + $0x141] sm:$0xff]
      %v2918 = vld [vmem:[#allocation2 + $0x151] sm:$0xff]
      %v2919 = vld [vmem:[#allocation2 + $0x159] sm:$0xff]
      %v2920 = vld [vmem:[#allocation2 + $0x169] sm:$0xff]
      %v2921 = vld [vmem:[#allocation2 + $0x171] sm:$0xff]
      %2954 = vrot.lane.b32.xlu0 %v2890, 4
      %v2955 = vpop.permute.xlu0 %2954
      %2956 = vrot.lane.b32.xlu0 %v2891, 4
      %v2957 = vpop.permute.xlu0 %2956
      %2958 = vrot.lane.b32.xlu0 %v2892, 4
      %v2959 = vpop.permute.xlu0 %2958
      %2960 = vrot.lane.b32.xlu0 %v2893, 4
      %v2961 = vpop.permute.xlu0 %2960
      %2962 = vrot.lane.b32.xlu0 %v2894, 4
      %v2963 = vpop.permute.xlu0 %2962
      %2964 = vrot.lane.b32.xlu0 %v2895, 4
      %v2965 = vpop.permute.xlu0 %2964
      %2966 = vrot.lane.b32.xlu0 %v2896, 4
      %v2967 = vpop.permute.xlu0 %2966
      %2968 = vrot.lane.b32.xlu0 %v2897, 4
      %v2969 = vpop.permute.xlu0 %2968
      %2970 = vrot.lane.b32.xlu0 %v2898, 4
      %v2971 = vpop.permute.xlu0 %2970
      %2972 = vrot.lane.b32.xlu0 %v2899, 4
      %v2973 = vpop.permute.xlu0 %2972
      %2974 = vrot.lane.b32.xlu0 %v2900, 4
      %v2975 = vpop.permute.xlu0 %2974
      %2976 = vrot.lane.b32.xlu0 %v2901, 4
      %v2977 = vpop.permute.xlu0 %2976
      %2978 = vrot.lane.b32.xlu0 %v2902, 4
      %v2979 = vpop.permute.xlu0 %2978
      %2980 = vrot.lane.b32.xlu0 %v2903, 4
      %v2981 = vpop.permute.xlu0 %2980
      %2982 = vrot.lane.b32.xlu0 %v2904, 4
      %v2983 = vpop.permute.xlu0 %2982
      %2984 = vrot.lane.b32.xlu0 %v2905, 4
      %v2985 = vpop.permute.xlu0 %2984
      %2986 = vrot.lane.b32.xlu0 %v2906, 4
      %v2987 = vpop.permute.xlu0 %2986
      %2988 = vrot.lane.b32.xlu0 %v2907, 4
      %v2989 = vpop.permute.xlu0 %2988
      %2990 = vrot.lane.b32.xlu0 %v2908, 4
      %v2991 = vpop.permute.xlu0 %2990
      %2992 = vrot.lane.b32.xlu0 %v2909, 4
      %v2993 = vpop.permute.xlu0 %2992
      %2994 = vrot.lane.b32.xlu0 %v2910, 4
      %v2995 = vpop.permute.xlu0 %2994
      %2996 = vrot.lane.b32.xlu0 %v2911, 4
      %v2997 = vpop.permute.xlu0 %2996
      %2998 = vrot.lane.b32.xlu0 %v2912, 4
      %v2999 = vpop.permute.xlu0 %2998
      %3000 = vrot.lane.b32.xlu0 %v2913, 4
      %v3001 = vpop.permute.xlu0 %3000
      %3002 = vrot.lane.b32.xlu0 %v2914, 4
      %v3003 = vpop.permute.xlu0 %3002
      %3004 = vrot.lane.b32.xlu0 %v2915, 4
      %v3005 = vpop.permute.xlu0 %3004
      %3006 = vrot.lane.b32.xlu0 %v2916, 4
      %v3007 = vpop.permute.xlu0 %3006
      %3008 = vrot.lane.b32.xlu0 %v2917, 4
      %v3009 = vpop.permute.xlu0 %3008
      %3010 = vrot.lane.b32.xlu0 %v2918, 4
      %v3011 = vpop.permute.xlu0 %3010
      %3012 = vrot.lane.b32.xlu0 %v2919, 4
      %v3013 = vpop.permute.xlu0 %3012
      %3014 = vrot.lane.b32.xlu0 %v2920, 4
      %v3015 = vpop.permute.xlu0 %3014
      %3016 = vrot.lane.b32.xlu0 %v2921, 4
      %v3017 = vpop.permute.xlu0 %3016
      %3050 = vst.msk [vmem:[#allocation3] sm:$0xff] %vm601, %v2955
      %3051 = vst.msk [vmem:[#allocation3 + $0x8] sm:$0xff] %vm601, %v2957
      %3052 = vst.msk [vmem:[#allocation3 + $0x10] sm:$0xff] %vm601, %v2959
      %3053 = vst.msk [vmem:[#allocation3 + $0x18] sm:$0xff] %vm601, %v2961
      %3054 = vst.msk [vmem:[#allocation3 + $0x20] sm:$0xff] %vm601, %v2963
      %3055 = vst.msk [vmem:[#allocation3 + $0x28] sm:$0xff] %vm601, %v2965
      %3056 = vst.msk [vmem:[#allocation3 + $0x30] sm:$0xff] %vm601, %v2967
      %3057 = vst.msk [vmem:[#allocation3 + $0x38] sm:$0xff] %vm601, %v2969
      %3058 = vst.msk [vmem:[#allocation3 + $0x40] sm:$0xff] %vm601, %v2971
      %3059 = vst.msk [vmem:[#allocation3 + $0x48] sm:$0xff] %vm601, %v2973
      %3060 = vst.msk [vmem:[#allocation3 + $0x50] sm:$0xff] %vm601, %v2975
      %3061 = vst.msk [vmem:[#allocation3 + $0x58] sm:$0xff] %vm601, %v2977
      %3062 = vst.msk [vmem:[#allocation3 + $0x60] sm:$0xff] %vm601, %v2979
      %3063 = vst.msk [vmem:[#allocation3 + $0x68] sm:$0xff] %vm601, %v2981
      %3064 = vst.msk [vmem:[#allocation3 + $0x70] sm:$0xff] %vm601, %v2983
      %3065 = vst.msk [vmem:[#allocation3 + $0x78] sm:$0xff] %vm601, %v2985
      %3066 = vst.msk [vmem:[#allocation3 + $0x80] sm:$0xff] %vm601, %v2987
      %3067 = vst.msk [vmem:[#allocation3 + $0x88] sm:$0xff] %vm601, %v2989
      %3068 = vst.msk [vmem:[#allocation3 + $0x90] sm:$0xff] %vm601, %v2991
      %3069 = vst.msk [vmem:[#allocation3 + $0x98] sm:$0xff] %vm601, %v2993
      %3070 = vst.msk [vmem:[#allocation3 + $0xa0] sm:$0xff] %vm601, %v2995
      %3071 = vst.msk [vmem:[#allocation3 + $0xa8] sm:$0xff] %vm601, %v2997
      %3072 = vst.msk [vmem:[#allocation3 + $0xb0] sm:$0xff] %vm601, %v2999
      %3073 = vst.msk [vmem:[#allocation3 + $0xb8] sm:$0xff] %vm601, %v3001
      %3074 = vst.msk [vmem:[#allocation3 + $0xc0] sm:$0xff] %vm601, %v3003
      %3075 = vst.msk [vmem:[#allocation3 + $0xc8] sm:$0xff] %vm601, %v3005
      %3076 = vst.msk [vmem:[#allocation3 + $0xd0] sm:$0xff] %vm601, %v3007
      %3077 = vst.msk [vmem:[#allocation3 + $0xd8] sm:$0xff] %vm601, %v3009
      %3078 = vst.msk [vmem:[#allocation3 + $0xe0] sm:$0xff] %vm601, %v3011
      %3079 = vst.msk [vmem:[#allocation3 + $0xe8] sm:$0xff] %vm601, %v3013
      %3080 = vst.msk [vmem:[#allocation3 + $0xf0] sm:$0xff] %vm601, %v3015
      %3081 = vst.msk [vmem:[#allocation3 + $0xf8] sm:$0xff] %vm601, %v3017
      %v3082 = vld [vmem:[#allocation2 + $0x2] sm:$0xff]
      %v3083 = vld [vmem:[#allocation2 + $0xa] sm:$0xff]
      %v3084 = vld [vmem:[#allocation2 + $0x1a] sm:$0xff]
      %v3085 = vld [vmem:[#allocation2 + $0x22] sm:$0xff]
      %v3086 = vld [vmem:[#allocation2 + $0x32] sm:$0xff]
      %v3087 = vld [vmem:[#allocation2 + $0x3a] sm:$0xff]
      %v3088 = vld [vmem:[#allocation2 + $0x4a] sm:$0xff]
      %v3089 = vld [vmem:[#allocation2 + $0x52] sm:$0xff]
      %v3090 = vld [vmem:[#allocation2 + $0x62] sm:$0xff]
      %v3091 = vld [vmem:[#allocation2 + $0x6a] sm:$0xff]
      %v3092 = vld [vmem:[#allocation2 + $0x7a] sm:$0xff]
      %v3093 = vld [vmem:[#allocation2 + $0x82] sm:$0xff]
      %v3094 = vld [vmem:[#allocation2 + $0x92] sm:$0xff]
      %v3095 = vld [vmem:[#allocation2 + $0x9a] sm:$0xff]
      %v3096 = vld [vmem:[#allocation2 + $0xaa] sm:$0xff]
      %v3097 = vld [vmem:[#allocation2 + $0xb2] sm:$0xff]
      %v3098 = vld [vmem:[#allocation2 + $0xc2] sm:$0xff]
      %v3099 = vld [vmem:[#allocation2 + $0xca] sm:$0xff]
      %v3100 = vld [vmem:[#allocation2 + $0xda] sm:$0xff]
      %v3101 = vld [vmem:[#allocation2 + $0xe2] sm:$0xff]
      %v3102 = vld [vmem:[#allocation2 + $0xf2] sm:$0xff]
      %v3103 = vld [vmem:[#allocation2 + $0xfa] sm:$0xff]
      %v3104 = vld [vmem:[#allocation2 + $0x10a] sm:$0xff]
      %v3105 = vld [vmem:[#allocation2 + $0x112] sm:$0xff]
      %v3106 = vld [vmem:[#allocation2 + $0x122] sm:$0xff]
      %v3107 = vld [vmem:[#allocation2 + $0x12a] sm:$0xff]
      %v3108 = vld [vmem:[#allocation2 + $0x13a] sm:$0xff]
      %v3109 = vld [vmem:[#allocation2 + $0x142] sm:$0xff]
      %v3110 = vld [vmem:[#allocation2 + $0x152] sm:$0xff]
      %v3111 = vld [vmem:[#allocation2 + $0x15a] sm:$0xff]
      %v3112 = vld [vmem:[#allocation2 + $0x16a] sm:$0xff]
      %v3113 = vld [vmem:[#allocation2 + $0x172] sm:$0xff]
      %3146 = vrot.lane.b32.xlu0 %v3082, 8
      %v3147 = vpop.permute.xlu0 %3146
      %3148 = vrot.lane.b32.xlu0 %v3083, 8
      %v3149 = vpop.permute.xlu0 %3148
      %3150 = vrot.lane.b32.xlu0 %v3084, 8
      %v3151 = vpop.permute.xlu0 %3150
      %3152 = vrot.lane.b32.xlu0 %v3085, 8
      %v3153 = vpop.permute.xlu0 %3152
      %3154 = vrot.lane.b32.xlu0 %v3086, 8
      %v3155 = vpop.permute.xlu0 %3154
      %3156 = vrot.lane.b32.xlu0 %v3087, 8
      %v3157 = vpop.permute.xlu0 %3156
      %3158 = vrot.lane.b32.xlu0 %v3088, 8
      %v3159 = vpop.permute.xlu0 %3158
      %3160 = vrot.lane.b32.xlu0 %v3089, 8
      %v3161 = vpop.permute.xlu0 %3160
      %3162 = vrot.lane.b32.xlu0 %v3090, 8
      %v3163 = vpop.permute.xlu0 %3162
      %3164 = vrot.lane.b32.xlu0 %v3091, 8
      %v3165 = vpop.permute.xlu0 %3164
      %3166 = vrot.lane.b32.xlu0 %v3092, 8
      %v3167 = vpop.permute.xlu0 %3166
      %3168 = vrot.lane.b32.xlu0 %v3093, 8
      %v3169 = vpop.permute.xlu0 %3168
      %3170 = vrot.lane.b32.xlu0 %v3094, 8
      %v3171 = vpop.permute.xlu0 %3170
      %3172 = vrot.lane.b32.xlu0 %v3095, 8
      %v3173 = vpop.permute.xlu0 %3172
      %3174 = vrot.lane.b32.xlu0 %v3096, 8
      %v3175 = vpop.permute.xlu0 %3174
      %3176 = vrot.lane.b32.xlu0 %v3097, 8
      %v3177 = vpop.permute.xlu0 %3176
      %3178 = vrot.lane.b32.xlu0 %v3098, 8
      %v3179 = vpop.permute.xlu0 %3178
      %3180 = vrot.lane.b32.xlu0 %v3099, 8
      %v3181 = vpop.permute.xlu0 %3180
      %3182 = vrot.lane.b32.xlu0 %v3100, 8
      %v3183 = vpop.permute.xlu0 %3182
      %3184 = vrot.lane.b32.xlu0 %v3101, 8
      %v3185 = vpop.permute.xlu0 %3184
      %3186 = vrot.lane.b32.xlu0 %v3102, 8
      %v3187 = vpop.permute.xlu0 %3186
      %3188 = vrot.lane.b32.xlu0 %v3103, 8
      %v3189 = vpop.permute.xlu0 %3188
      %3190 = vrot.lane.b32.xlu0 %v3104, 8
      %v3191 = vpop.permute.xlu0 %3190
      %3192 = vrot.lane.b32.xlu0 %v3105, 8
      %v3193 = vpop.permute.xlu0 %3192
      %3194 = vrot.lane.b32.xlu0 %v3106, 8
      %v3195 = vpop.permute.xlu0 %3194
      %3196 = vrot.lane.b32.xlu0 %v3107, 8
      %v3197 = vpop.permute.xlu0 %3196
      %3198 = vrot.lane.b32.xlu0 %v3108, 8
      %v3199 = vpop.permute.xlu0 %3198
      %3200 = vrot.lane.b32.xlu0 %v3109, 8
      %v3201 = vpop.permute.xlu0 %3200
      %3202 = vrot.lane.b32.xlu0 %v3110, 8
      %v3203 = vpop.permute.xlu0 %3202
      %3204 = vrot.lane.b32.xlu0 %v3111, 8
      %v3205 = vpop.permute.xlu0 %3204
      %3206 = vrot.lane.b32.xlu0 %v3112, 8
      %v3207 = vpop.permute.xlu0 %3206
      %3208 = vrot.lane.b32.xlu0 %v3113, 8
      %v3209 = vpop.permute.xlu0 %3208
      %3242 = vst.msk [vmem:[#allocation3] sm:$0xff] %vm794, %v3147
      %3243 = vst.msk [vmem:[#allocation3 + $0x8] sm:$0xff] %vm794, %v3149
      %3244 = vst.msk [vmem:[#allocation3 + $0x10] sm:$0xff] %vm794, %v3151
      %3245 = vst.msk [vmem:[#allocation3 + $0x18] sm:$0xff] %vm794, %v3153
      %3246 = vst.msk [vmem:[#allocation3 + $0x20] sm:$0xff] %vm794, %v3155
      %3247 = vst.msk [vmem:[#allocation3 + $0x28] sm:$0xff] %vm794, %v3157
      %3248 = vst.msk [vmem:[#allocation3 + $0x30] sm:$0xff] %vm794, %v3159
      %3249 = vst.msk [vmem:[#allocation3 + $0x38] sm:$0xff] %vm794, %v3161
      %3250 = vst.msk [vmem:[#allocation3 + $0x40] sm:$0xff] %vm794, %v3163
      %3251 = vst.msk [vmem:[#allocation3 + $0x48] sm:$0xff] %vm794, %v3165
      %3252 = vst.msk [vmem:[#allocation3 + $0x50] sm:$0xff] %vm794, %v3167
      %3253 = vst.msk [vmem:[#allocation3 + $0x58] sm:$0xff] %vm794, %v3169
      %3254 = vst.msk [vmem:[#allocation3 + $0x60] sm:$0xff] %vm794, %v3171
      %3255 = vst.msk [vmem:[#allocation3 + $0x68] sm:$0xff] %vm794, %v3173
      %3256 = vst.msk [vmem:[#allocation3 + $0x70] sm:$0xff] %vm794, %v3175
      %3257 = vst.msk [vmem:[#allocation3 + $0x78] sm:$0xff] %vm794, %v3177
      %3258 = vst.msk [vmem:[#allocation3 + $0x80] sm:$0xff] %vm794, %v3179
      %3259 = vst.msk [vmem:[#allocation3 + $0x88] sm:$0xff] %vm794, %v3181
      %3260 = vst.msk [vmem:[#allocation3 + $0x90] sm:$0xff] %vm794, %v3183
      %3261 = vst.msk [vmem:[#allocation3 + $0x98] sm:$0xff] %vm794, %v3185
      %3262 = vst.msk [vmem:[#allocation3 + $0xa0] sm:$0xff] %vm794, %v3187
      %3263 = vst.msk [vmem:[#allocation3 + $0xa8] sm:$0xff] %vm794, %v3189
      %3264 = vst.msk [vmem:[#allocation3 + $0xb0] sm:$0xff] %vm794, %v3191
      %3265 = vst.msk [vmem:[#allocation3 + $0xb8] sm:$0xff] %vm794, %v3193
      %3266 = vst.msk [vmem:[#allocation3 + $0xc0] sm:$0xff] %vm794, %v3195
      %3267 = vst.msk [vmem:[#allocation3 + $0xc8] sm:$0xff] %vm794, %v3197
      %3268 = vst.msk [vmem:[#allocation3 + $0xd0] sm:$0xff] %vm794, %v3199
      %3269 = vst.msk [vmem:[#allocation3 + $0xd8] sm:$0xff] %vm794, %v3201
      %3270 = vst.msk [vmem:[#allocation3 + $0xe0] sm:$0xff] %vm794, %v3203
      %3271 = vst.msk [vmem:[#allocation3 + $0xe8] sm:$0xff] %vm794, %v3205
      %3272 = vst.msk [vmem:[#allocation3 + $0xf0] sm:$0xff] %vm794, %v3207
      %3273 = vst.msk [vmem:[#allocation3 + $0xf8] sm:$0xff] %vm794, %v3209
      %v3274 = vld [vmem:[%s257] sm:$0xff]
      %v3275 = vld [vmem:[%s257 + $0x8] sm:$0xff]
      %v3276 = vld [vmem:[%s257 + $0x18] sm:$0xff]
      %v3277 = vld [vmem:[%s257 + $0x20] sm:$0xff]
      %v3278 = vld [vmem:[%s257 + $0x30] sm:$0xff]
      %v3279 = vld [vmem:[%s257 + $0x38] sm:$0xff]
      %v3280 = vld [vmem:[%s257 + $0x48] sm:$0xff]
      %v3281 = vld [vmem:[%s257 + $0x50] sm:$0xff]
      %v3282 = vld [vmem:[%s257 + $0x60] sm:$0xff]
      %v3283 = vld [vmem:[%s257 + $0x68] sm:$0xff]
      %v3284 = vld [vmem:[%s257 + $0x78] sm:$0xff]
      %v3285 = vld [vmem:[%s257 + $0x80] sm:$0xff]
      %v3286 = vld [vmem:[%s257 + $0x90] sm:$0xff]
      %v3287 = vld [vmem:[%s257 + $0x98] sm:$0xff]
      %v3288 = vld [vmem:[%s257 + $0xa8] sm:$0xff]
      %v3289 = vld [vmem:[%s257 + $0xb0] sm:$0xff]
      %v3290 = vld [vmem:[%s257 + $0xc0] sm:$0xff]
      %v3291 = vld [vmem:[%s257 + $0xc8] sm:$0xff]
      %v3292 = vld [vmem:[%s257 + $0xd8] sm:$0xff]
      %v3293 = vld [vmem:[%s257 + $0xe0] sm:$0xff]
      %v3294 = vld [vmem:[%s257 + $0xf0] sm:$0xff]
      %v3295 = vld [vmem:[%s257 + $0xf8] sm:$0xff]
      %v3296 = vld [vmem:[%s257 + $0x108] sm:$0xff]
      %v3297 = vld [vmem:[%s257 + $0x110] sm:$0xff]
      %v3298 = vld [vmem:[%s257 + $0x120] sm:$0xff]
      %v3299 = vld [vmem:[%s257 + $0x128] sm:$0xff]
      %v3300 = vld [vmem:[%s257 + $0x138] sm:$0xff]
      %v3301 = vld [vmem:[%s257 + $0x140] sm:$0xff]
      %v3302 = vld [vmem:[%s257 + $0x150] sm:$0xff]
      %v3303 = vld [vmem:[%s257 + $0x158] sm:$0xff]
      %v3304 = vld [vmem:[%s257 + $0x168] sm:$0xff]
      %v3305 = vld [vmem:[%s257 + $0x170] sm:$0xff]
      %3338 = vrot.lane.b32.xlu0 %v3274, 12
      %v3339 = vpop.permute.xlu0 %3338
      %3340 = vrot.lane.b32.xlu0 %v3275, 12
      %v3341 = vpop.permute.xlu0 %3340
      %3342 = vrot.lane.b32.xlu0 %v3276, 12
      %v3343 = vpop.permute.xlu0 %3342
      %3344 = vrot.lane.b32.xlu0 %v3277, 12
      %v3345 = vpop.permute.xlu0 %3344
      %3346 = vrot.lane.b32.xlu0 %v3278, 12
      %v3347 = vpop.permute.xlu0 %3346
      %3348 = vrot.lane.b32.xlu0 %v3279, 12
      %v3349 = vpop.permute.xlu0 %3348
      %3350 = vrot.lane.b32.xlu0 %v3280, 12
      %v3351 = vpop.permute.xlu0 %3350
      %3352 = vrot.lane.b32.xlu0 %v3281, 12
      %v3353 = vpop.permute.xlu0 %3352
      %3354 = vrot.lane.b32.xlu0 %v3282, 12
      %v3355 = vpop.permute.xlu0 %3354
      %3356 = vrot.lane.b32.xlu0 %v3283, 12
      %v3357 = vpop.permute.xlu0 %3356
      %3358 = vrot.lane.b32.xlu0 %v3284, 12
      %v3359 = vpop.permute.xlu0 %3358
      %3360 = vrot.lane.b32.xlu0 %v3285, 12
      %v3361 = vpop.permute.xlu0 %3360
      %3362 = vrot.lane.b32.xlu0 %v3286, 12
      %v3363 = vpop.permute.xlu0 %3362
      %3364 = vrot.lane.b32.xlu0 %v3287, 12
      %v3365 = vpop.permute.xlu0 %3364
      %3366 = vrot.lane.b32.xlu0 %v3288, 12
      %v3367 = vpop.permute.xlu0 %3366
      %3368 = vrot.lane.b32.xlu0 %v3289, 12
      %v3369 = vpop.permute.xlu0 %3368
      %3370 = vrot.lane.b32.xlu0 %v3290, 12
      %v3371 = vpop.permute.xlu0 %3370
      %3372 = vrot.lane.b32.xlu0 %v3291, 12
      %v3373 = vpop.permute.xlu0 %3372
      %3374 = vrot.lane.b32.xlu0 %v3292, 12
      %v3375 = vpop.permute.xlu0 %3374
      %3376 = vrot.lane.b32.xlu0 %v3293, 12
      %v3377 = vpop.permute.xlu0 %3376
      %3378 = vrot.lane.b32.xlu0 %v3294, 12
      %v3379 = vpop.permute.xlu0 %3378
      %3380 = vrot.lane.b32.xlu0 %v3295, 12
      %v3381 = vpop.permute.xlu0 %3380
      %3382 = vrot.lane.b32.xlu0 %v3296, 12
      %v3383 = vpop.permute.xlu0 %3382
      %3384 = vrot.lane.b32.xlu0 %v3297, 12
      %v3385 = vpop.permute.xlu0 %3384
      %3386 = vrot.lane.b32.xlu0 %v3298, 12
      %v3387 = vpop.permute.xlu0 %3386
      %3388 = vrot.lane.b32.xlu0 %v3299, 12
      %v3389 = vpop.permute.xlu0 %3388
      %3390 = vrot.lane.b32.xlu0 %v3300, 12
      %v3391 = vpop.permute.xlu0 %3390
      %3392 = vrot.lane.b32.xlu0 %v3301, 12
      %v3393 = vpop.permute.xlu0 %3392
      %3394 = vrot.lane.b32.xlu0 %v3302, 12
      %v3395 = vpop.permute.xlu0 %3394
      %3396 = vrot.lane.b32.xlu0 %v3303, 12
      %v3397 = vpop.permute.xlu0 %3396
      %3398 = vrot.lane.b32.xlu0 %v3304, 12
      %v3399 = vpop.permute.xlu0 %3398
      %3400 = vrot.lane.b32.xlu0 %v3305, 12
      %v3401 = vpop.permute.xlu0 %3400
      %3434 = vst.msk [vmem:[#allocation3] sm:$0xff] %vm987, %v3339
      %3435 = vst.msk [vmem:[#allocation3 + $0x8] sm:$0xff] %vm987, %v3341
      %3436 = vst.msk [vmem:[#allocation3 + $0x10] sm:$0xff] %vm987, %v3343
      %3437 = vst.msk [vmem:[#allocation3 + $0x18] sm:$0xff] %vm987, %v3345
      %3438 = vst.msk [vmem:[#allocation3 + $0x20] sm:$0xff] %vm987, %v3347
      %3439 = vst.msk [vmem:[#allocation3 + $0x28] sm:$0xff] %vm987, %v3349
      %3440 = vst.msk [vmem:[#allocation3 + $0x30] sm:$0xff] %vm987, %v3351
      %3441 = vst.msk [vmem:[#allocation3 + $0x38] sm:$0xff] %vm987, %v3353
      %3442 = vst.msk [vmem:[#allocation3 + $0x40] sm:$0xff] %vm987, %v3355
      %3443 = vst.msk [vmem:[#allocation3 + $0x48] sm:$0xff] %vm987, %v3357
      %3444 = vst.msk [vmem:[#allocation3 + $0x50] sm:$0xff] %vm987, %v3359
      %3445 = vst.msk [vmem:[#allocation3 + $0x58] sm:$0xff] %vm987, %v3361
      %3446 = vst.msk [vmem:[#allocation3 + $0x60] sm:$0xff] %vm987, %v3363
      %3447 = vst.msk [vmem:[#allocation3 + $0x68] sm:$0xff] %vm987, %v3365
      %3448 = vst.msk [vmem:[#allocation3 + $0x70] sm:$0xff] %vm987, %v3367
      %3449 = vst.msk [vmem:[#allocation3 + $0x78] sm:$0xff] %vm987, %v3369
      %3450 = vst.msk [vmem:[#allocation3 + $0x80] sm:$0xff] %vm987, %v3371
      %3451 = vst.msk [vmem:[#allocation3 + $0x88] sm:$0xff] %vm987, %v3373
      %3452 = vst.msk [vmem:[#allocation3 + $0x90] sm:$0xff] %vm987, %v3375
      %3453 = vst.msk [vmem:[#allocation3 + $0x98] sm:$0xff] %vm987, %v3377
      %3454 = vst.msk [vmem:[#allocation3 + $0xa0] sm:$0xff] %vm987, %v3379
      %3455 = vst.msk [vmem:[#allocation3 + $0xa8] sm:$0xff] %vm987, %v3381
      %3456 = vst.msk [vmem:[#allocation3 + $0xb0] sm:$0xff] %vm987, %v3383
      %3457 = vst.msk [vmem:[#allocation3 + $0xb8] sm:$0xff] %vm987, %v3385
      %3458 = vst.msk [vmem:[#allocation3 + $0xc0] sm:$0xff] %vm987, %v3387
      %3459 = vst.msk [vmem:[#allocation3 + $0xc8] sm:$0xff] %vm987, %v3389
      %3460 = vst.msk [vmem:[#allocation3 + $0xd0] sm:$0xff] %vm987, %v3391
      %3461 = vst.msk [vmem:[#allocation3 + $0xd8] sm:$0xff] %vm987, %v3393
      %3462 = vst.msk [vmem:[#allocation3 + $0xe0] sm:$0xff] %vm987, %v3395
      %3463 = vst.msk [vmem:[#allocation3 + $0xe8] sm:$0xff] %vm987, %v3397
      %3464 = vst.msk [vmem:[#allocation3 + $0xf0] sm:$0xff] %vm987, %v3399
      %3465 = vst.msk [vmem:[#allocation3 + $0xf8] sm:$0xff] %vm987, %v3401
      %v3466 = vld [vmem:[%s257 + $0x1] sm:$0xff]
      %v3467 = vld [vmem:[%s257 + $0x9] sm:$0xff]
      %v3468 = vld [vmem:[%s257 + $0x19] sm:$0xff]
      %v3469 = vld [vmem:[%s257 + $0x21] sm:$0xff]
      %v3470 = vld [vmem:[%s257 + $0x31] sm:$0xff]
      %v3471 = vld [vmem:[%s257 + $0x39] sm:$0xff]
      %v3472 = vld [vmem:[%s257 + $0x49] sm:$0xff]
      %v3473 = vld [vmem:[%s257 + $0x51] sm:$0xff]
      %v3474 = vld [vmem:[%s257 + $0x61] sm:$0xff]
      %v3475 = vld [vmem:[%s257 + $0x69] sm:$0xff]
      %v3476 = vld [vmem:[%s257 + $0x79] sm:$0xff]
      %v3477 = vld [vmem:[%s257 + $0x81] sm:$0xff]
      %v3478 = vld [vmem:[%s257 + $0x91] sm:$0xff]
      %v3479 = vld [vmem:[%s257 + $0x99] sm:$0xff]
      %v3480 = vld [vmem:[%s257 + $0xa9] sm:$0xff]
      %v3481 = vld [vmem:[%s257 + $0xb1] sm:$0xff]
      %v3482 = vld [vmem:[%s257 + $0xc1] sm:$0xff]
      %v3483 = vld [vmem:[%s257 + $0xc9] sm:$0xff]
      %v3484 = vld [vmem:[%s257 + $0xd9] sm:$0xff]
      %v3485 = vld [vmem:[%s257 + $0xe1] sm:$0xff]
      %v3486 = vld [vmem:[%s257 + $0xf1] sm:$0xff]
      %v3487 = vld [vmem:[%s257 + $0xf9] sm:$0xff]
      %v3488 = vld [vmem:[%s257 + $0x109] sm:$0xff]
      %v3489 = vld [vmem:[%s257 + $0x111] sm:$0xff]
      %v3490 = vld [vmem:[%s257 + $0x121] sm:$0xff]
      %v3491 = vld [vmem:[%s257 + $0x129] sm:$0xff]
      %v3492 = vld [vmem:[%s257 + $0x139] sm:$0xff]
      %v3493 = vld [vmem:[%s257 + $0x141] sm:$0xff]
      %v3494 = vld [vmem:[%s257 + $0x151] sm:$0xff]
      %v3495 = vld [vmem:[%s257 + $0x159] sm:$0xff]
      %v3496 = vld [vmem:[%s257 + $0x169] sm:$0xff]
      %v3497 = vld [vmem:[%s257 + $0x171] sm:$0xff]
      %3530 = vrot.lane.b32.xlu0 %v3466, 16
      %v3531 = vpop.permute.xlu0 %3530
      %3532 = vrot.lane.b32.xlu0 %v3467, 16
      %v3533 = vpop.permute.xlu0 %3532
      %3534 = vrot.lane.b32.xlu0 %v3468, 16
      %v3535 = vpop.permute.xlu0 %3534
      %3536 = vrot.lane.b32.xlu0 %v3469, 16
      %v3537 = vpop.permute.xlu0 %3536
      %3538 = vrot.lane.b32.xlu0 %v3470, 16
      %v3539 = vpop.permute.xlu0 %3538
      %3540 = vrot.lane.b32.xlu0 %v3471, 16
      %v3541 = vpop.permute.xlu0 %3540
      %3542 = vrot.lane.b32.xlu0 %v3472, 16
      %v3543 = vpop.permute.xlu0 %3542
      %3544 = vrot.lane.b32.xlu0 %v3473, 16
      %v3545 = vpop.permute.xlu0 %3544
      %3546 = vrot.lane.b32.xlu0 %v3474, 16
      %v3547 = vpop.permute.xlu0 %3546
      %3548 = vrot.lane.b32.xlu0 %v3475, 16
      %v3549 = vpop.permute.xlu0 %3548
      %3550 = vrot.lane.b32.xlu0 %v3476, 16
      %v3551 = vpop.permute.xlu0 %3550
      %3552 = vrot.lane.b32.xlu0 %v3477, 16
      %v3553 = vpop.permute.xlu0 %3552
      %3554 = vrot.lane.b32.xlu0 %v3478, 16
      %v3555 = vpop.permute.xlu0 %3554
      %3556 = vrot.lane.b32.xlu0 %v3479, 16
      %v3557 = vpop.permute.xlu0 %3556
      %3558 = vrot.lane.b32.xlu0 %v3480, 16
      %v3559 = vpop.permute.xlu0 %3558
      %3560 = vrot.lane.b32.xlu0 %v3481, 16
      %v3561 = vpop.permute.xlu0 %3560
      %3562 = vrot.lane.b32.xlu0 %v3482, 16
      %v3563 = vpop.permute.xlu0 %3562
      %3564 = vrot.lane.b32.xlu0 %v3483, 16
      %v3565 = vpop.permute.xlu0 %3564
      %3566 = vrot.lane.b32.xlu0 %v3484, 16
      %v3567 = vpop.permute.xlu0 %3566
      %3568 = vrot.lane.b32.xlu0 %v3485, 16
      %v3569 = vpop.permute.xlu0 %3568
      %3570 = vrot.lane.b32.xlu0 %v3486, 16
      %v3571 = vpop.permute.xlu0 %3570
      %3572 = vrot.lane.b32.xlu0 %v3487, 16
      %v3573 = vpop.permute.xlu0 %3572
      %3574 = vrot.lane.b32.xlu0 %v3488, 16
      %v3575 = vpop.permute.xlu0 %3574
      %3576 = vrot.lane.b32.xlu0 %v3489, 16
      %v3577 = vpop.permute.xlu0 %3576
      %3578 = vrot.lane.b32.xlu0 %v3490, 16
      %v3579 = vpop.permute.xlu0 %3578
      %3580 = vrot.lane.b32.xlu0 %v3491, 16
      %v3581 = vpop.permute.xlu0 %3580
      %3582 = vrot.lane.b32.xlu0 %v3492, 16
      %v3583 = vpop.permute.xlu0 %3582
      %3584 = vrot.lane.b32.xlu0 %v3493, 16
      %v3585 = vpop.permute.xlu0 %3584
      %3586 = vrot.lane.b32.xlu0 %v3494, 16
      %v3587 = vpop.permute.xlu0 %3586
      %3588 = vrot.lane.b32.xlu0 %v3495, 16
      %v3589 = vpop.permute.xlu0 %3588
      %3590 = vrot.lane.b32.xlu0 %v3496, 16
      %v3591 = vpop.permute.xlu0 %3590
      %3592 = vrot.lane.b32.xlu0 %v3497, 16
      %v3593 = vpop.permute.xlu0 %3592
      %3626 = vst.msk [vmem:[#allocation3] sm:$0xff] %vm1180, %v3531
      %3627 = vst.msk [vmem:[#allocation3 + $0x8] sm:$0xff] %vm1180, %v3533
      %3628 = vst.msk [vmem:[#allocation3 + $0x10] sm:$0xff] %vm1180, %v3535
      %3629 = vst.msk [vmem:[#allocation3 + $0x18] sm:$0xff] %vm1180, %v3537
      %3630 = vst.msk [vmem:[#allocation3 + $0x20] sm:$0xff] %vm1180, %v3539
      %3631 = vst.msk [vmem:[#allocation3 + $0x28] sm:$0xff] %vm1180, %v3541
      %3632 = vst.msk [vmem:[#allocation3 + $0x30] sm:$0xff] %vm1180, %v3543
      %3633 = vst.msk [vmem:[#allocation3 + $0x38] sm:$0xff] %vm1180, %v3545
      %3634 = vst.msk [vmem:[#allocation3 + $0x40] sm:$0xff] %vm1180, %v3547
      %3635 = vst.msk [vmem:[#allocation3 + $0x48] sm:$0xff] %vm1180, %v3549
      %3636 = vst.msk [vmem:[#allocation3 + $0x50] sm:$0xff] %vm1180, %v3551
      %3637 = vst.msk [vmem:[#allocation3 + $0x58] sm:$0xff] %vm1180, %v3553
      %3638 = vst.msk [vmem:[#allocation3 + $0x60] sm:$0xff] %vm1180, %v3555
      %3639 = vst.msk [vmem:[#allocation3 + $0x68] sm:$0xff] %vm1180, %v3557
      %3640 = vst.msk [vmem:[#allocation3 + $0x70] sm:$0xff] %vm1180, %v3559
      %3641 = vst.msk [vmem:[#allocation3 + $0x78] sm:$0xff] %vm1180, %v3561
      %3642 = vst.msk [vmem:[#allocation3 + $0x80] sm:$0xff] %vm1180, %v3563
      %3643 = vst.msk [vmem:[#allocation3 + $0x88] sm:$0xff] %vm1180, %v3565
      %3644 = vst.msk [vmem:[#allocation3 + $0x90] sm:$0xff] %vm1180, %v3567
      %3645 = vst.msk [vmem:[#allocation3 + $0x98] sm:$0xff] %vm1180, %v3569
      %3646 = vst.msk [vmem:[#allocation3 + $0xa0] sm:$0xff] %vm1180, %v3571
      %3647 = vst.msk [vmem:[#allocation3 + $0xa8] sm:$0xff] %vm1180, %v3573
      %3648 = vst.msk [vmem:[#allocation3 + $0xb0] sm:$0xff] %vm1180, %v3575
      %3649 = vst.msk [vmem:[#allocation3 + $0xb8] sm:$0xff] %vm1180, %v3577
      %3650 = vst.msk [vmem:[#allocation3 + $0xc0] sm:$0xff] %vm1180, %v3579
      %3651 = vst.msk [vmem:[#allocation3 + $0xc8] sm:$0xff] %vm1180, %v3581
      %3652 = vst.msk [vmem:[#allocation3 + $0xd0] sm:$0xff] %vm1180, %v3583
      %3653 = vst.msk [vmem:[#allocation3 + $0xd8] sm:$0xff] %vm1180, %v3585
      %3654 = vst.msk [vmem:[#allocation3 + $0xe0] sm:$0xff] %vm1180, %v3587
      %3655 = vst.msk [vmem:[#allocation3 + $0xe8] sm:$0xff] %vm1180, %v3589
      %3656 = vst.msk [vmem:[#allocation3 + $0xf0] sm:$0xff] %vm1180, %v3591
      %3657 = vst.msk [vmem:[#allocation3 + $0xf8] sm:$0xff] %vm1180, %v3593
      %v3658 = vld [vmem:[%s257 + $0x2] sm:$0xff]
      %v3659 = vld [vmem:[%s257 + $0xa] sm:$0xff]
      %v3660 = vld [vmem:[%s257 + $0x1a] sm:$0xff]
      %v3661 = vld [vmem:[%s257 + $0x22] sm:$0xff]
      %v3662 = vld [vmem:[%s257 + $0x32] sm:$0xff]
      %v3663 = vld [vmem:[%s257 + $0x3a] sm:$0xff]
      %v3664 = vld [vmem:[%s257 + $0x4a] sm:$0xff]
      %v3665 = vld [vmem:[%s257 + $0x52] sm:$0xff]
      %v3666 = vld [vmem:[%s257 + $0x62] sm:$0xff]
      %v3667 = vld [vmem:[%s257 + $0x6a] sm:$0xff]
      %v3668 = vld [vmem:[%s257 + $0x7a] sm:$0xff]
      %v3669 = vld [vmem:[%s257 + $0x82] sm:$0xff]
      %v3670 = vld [vmem:[%s257 + $0x92] sm:$0xff]
      %v3671 = vld [vmem:[%s257 + $0x9a] sm:$0xff]
      %v3672 = vld [vmem:[%s257 + $0xaa] sm:$0xff]
      %v3673 = vld [vmem:[%s257 + $0xb2] sm:$0xff]
      %v3674 = vld [vmem:[%s257 + $0xc2] sm:$0xff]
      %v3675 = vld [vmem:[%s257 + $0xca] sm:$0xff]
      %v3676 = vld [vmem:[%s257 + $0xda] sm:$0xff]
      %v3677 = vld [vmem:[%s257 + $0xe2] sm:$0xff]
      %v3678 = vld [vmem:[%s257 + $0xf2] sm:$0xff]
      %v3679 = vld [vmem:[%s257 + $0xfa] sm:$0xff]
      %v3680 = vld [vmem:[%s257 + $0x10a] sm:$0xff]
      %v3681 = vld [vmem:[%s257 + $0x112] sm:$0xff]
      %v3682 = vld [vmem:[%s257 + $0x122] sm:$0xff]
      %v3683 = vld [vmem:[%s257 + $0x12a] sm:$0xff]
      %v3684 = vld [vmem:[%s257 + $0x13a] sm:$0xff]
      %v3685 = vld [vmem:[%s257 + $0x142] sm:$0xff]
      %v3686 = vld [vmem:[%s257 + $0x152] sm:$0xff]
      %v3687 = vld [vmem:[%s257 + $0x15a] sm:$0xff]
      %v3688 = vld [vmem:[%s257 + $0x16a] sm:$0xff]
      %v3689 = vld [vmem:[%s257 + $0x172] sm:$0xff]
      %3722 = vrot.lane.b32.xlu0 %v3658, 20
      %v3723 = vpop.permute.xlu0 %3722
      %3724 = vrot.lane.b32.xlu0 %v3659, 20
      %v3725 = vpop.permute.xlu0 %3724
      %3726 = vrot.lane.b32.xlu0 %v3660, 20
      %v3727 = vpop.permute.xlu0 %3726
      %3728 = vrot.lane.b32.xlu0 %v3661, 20
      %v3729 = vpop.permute.xlu0 %3728
      %3730 = vrot.lane.b32.xlu0 %v3662, 20
      %v3731 = vpop.permute.xlu0 %3730
      %3732 = vrot.lane.b32.xlu0 %v3663, 20
      %v3733 = vpop.permute.xlu0 %3732
      %3734 = vrot.lane.b32.xlu0 %v3664, 20
      %v3735 = vpop.permute.xlu0 %3734
      %3736 = vrot.lane.b32.xlu0 %v3665, 20
      %v3737 = vpop.permute.xlu0 %3736
      %3738 = vrot.lane.b32.xlu0 %v3666, 20
      %v3739 = vpop.permute.xlu0 %3738
      %3740 = vrot.lane.b32.xlu0 %v3667, 20
      %v3741 = vpop.permute.xlu0 %3740
      %3742 = vrot.lane.b32.xlu0 %v3668, 20
      %v3743 = vpop.permute.xlu0 %3742
      %3744 = vrot.lane.b32.xlu0 %v3669, 20
      %v3745 = vpop.permute.xlu0 %3744
      %3746 = vrot.lane.b32.xlu0 %v3670, 20
      %v3747 = vpop.permute.xlu0 %3746
      %3748 = vrot.lane.b32.xlu0 %v3671, 20
      %v3749 = vpop.permute.xlu0 %3748
      %3750 = vrot.lane.b32.xlu0 %v3672, 20
      %v3751 = vpop.permute.xlu0 %3750
      %3752 = vrot.lane.b32.xlu0 %v3673, 20
      %v3753 = vpop.permute.xlu0 %3752
      %3754 = vrot.lane.b32.xlu0 %v3674, 20
      %v3755 = vpop.permute.xlu0 %3754
      %3756 = vrot.lane.b32.xlu0 %v3675, 20
      %v3757 = vpop.permute.xlu0 %3756
      %3758 = vrot.lane.b32.xlu0 %v3676, 20
      %v3759 = vpop.permute.xlu0 %3758
      %3760 = vrot.lane.b32.xlu0 %v3677, 20
      %v3761 = vpop.permute.xlu0 %3760
      %3762 = vrot.lane.b32.xlu0 %v3678, 20
      %v3763 = vpop.permute.xlu0 %3762
      %3764 = vrot.lane.b32.xlu0 %v3679, 20
      %v3765 = vpop.permute.xlu0 %3764
      %3766 = vrot.lane.b32.xlu0 %v3680, 20
      %v3767 = vpop.permute.xlu0 %3766
      %3768 = vrot.lane.b32.xlu0 %v3681, 20
      %v3769 = vpop.permute.xlu0 %3768
      %3770 = vrot.lane.b32.xlu0 %v3682, 20
      %v3771 = vpop.permute.xlu0 %3770
      %3772 = vrot.lane.b32.xlu0 %v3683, 20
      %v3773 = vpop.permute.xlu0 %3772
      %3774 = vrot.lane.b32.xlu0 %v3684, 20
      %v3775 = vpop.permute.xlu0 %3774
      %3776 = vrot.lane.b32.xlu0 %v3685, 20
      %v3777 = vpop.permute.xlu0 %3776
      %3778 = vrot.lane.b32.xlu0 %v3686, 20
      %v3779 = vpop.permute.xlu0 %3778
      %3780 = vrot.lane.b32.xlu0 %v3687, 20
      %v3781 = vpop.permute.xlu0 %3780
      %3782 = vrot.lane.b32.xlu0 %v3688, 20
      %v3783 = vpop.permute.xlu0 %3782
      %3784 = vrot.lane.b32.xlu0 %v3689, 20
      %v3785 = vpop.permute.xlu0 %3784
      %3818 = vst.msk [vmem:[#allocation3] sm:$0xff] %vm1373, %v3723
      %3819 = vst.msk [vmem:[#allocation3 + $0x8] sm:$0xff] %vm1373, %v3725
      %3820 = vst.msk [vmem:[#allocation3 + $0x10] sm:$0xff] %vm1373, %v3727
      %3821 = vst.msk [vmem:[#allocation3 + $0x18] sm:$0xff] %vm1373, %v3729
      %3822 = vst.msk [vmem:[#allocation3 + $0x20] sm:$0xff] %vm1373, %v3731
      %3823 = vst.msk [vmem:[#allocation3 + $0x28] sm:$0xff] %vm1373, %v3733
      %3824 = vst.msk [vmem:[#allocation3 + $0x30] sm:$0xff] %vm1373, %v3735
      %3825 = vst.msk [vmem:[#allocation3 + $0x38] sm:$0xff] %vm1373, %v3737
      %3826 = vst.msk [vmem:[#allocation3 + $0x40] sm:$0xff] %vm1373, %v3739
      %3827 = vst.msk [vmem:[#allocation3 + $0x48] sm:$0xff] %vm1373, %v3741
      %3828 = vst.msk [vmem:[#allocation3 + $0x50] sm:$0xff] %vm1373, %v3743
      %3829 = vst.msk [vmem:[#allocation3 + $0x58] sm:$0xff] %vm1373, %v3745
      %3830 = vst.msk [vmem:[#allocation3 + $0x60] sm:$0xff] %vm1373, %v3747
      %3831 = vst.msk [vmem:[#allocation3 + $0x68] sm:$0xff] %vm1373, %v3749
      %3832 = vst.msk [vmem:[#allocation3 + $0x70] sm:$0xff] %vm1373, %v3751
      %3833 = vst.msk [vmem:[#allocation3 + $0x78] sm:$0xff] %vm1373, %v3753
      %3834 = vst.msk [vmem:[#allocation3 + $0x80] sm:$0xff] %vm1373, %v3755
      %3835 = vst.msk [vmem:[#allocation3 + $0x88] sm:$0xff] %vm1373, %v3757
      %3836 = vst.msk [vmem:[#allocation3 + $0x90] sm:$0xff] %vm1373, %v3759
      %3837 = vst.msk [vmem:[#allocation3 + $0x98] sm:$0xff] %vm1373, %v3761
      %3838 = vst.msk [vmem:[#allocation3 + $0xa0] sm:$0xff] %vm1373, %v3763
      %3839 = vst.msk [vmem:[#allocation3 + $0xa8] sm:$0xff] %vm1373, %v3765
      %3840 = vst.msk [vmem:[#allocation3 + $0xb0] sm:$0xff] %vm1373, %v3767
      %3841 = vst.msk [vmem:[#allocation3 + $0xb8] sm:$0xff] %vm1373, %v3769
      %3842 = vst.msk [vmem:[#allocation3 + $0xc0] sm:$0xff] %vm1373, %v3771
      %3843 = vst.msk [vmem:[#allocation3 + $0xc8] sm:$0xff] %vm1373, %v3773
      %3844 = vst.msk [vmem:[#allocation3 + $0xd0] sm:$0xff] %vm1373, %v3775
      %3845 = vst.msk [vmem:[#allocation3 + $0xd8] sm:$0xff] %vm1373, %v3777
      %3846 = vst.msk [vmem:[#allocation3 + $0xe0] sm:$0xff] %vm1373, %v3779
      %3847 = vst.msk [vmem:[#allocation3 + $0xe8] sm:$0xff] %vm1373, %v3781
      %3848 = vst.msk [vmem:[#allocation3 + $0xf0] sm:$0xff] %vm1373, %v3783
      %3849 = vst.msk [vmem:[#allocation3 + $0xf8] sm:$0xff] %vm1373, %v3785
      %v3850 = vld [vmem:[%s291] sm:$0xff]
      %v3851 = vld [vmem:[%s291 + $0x8] sm:$0xff]
      %v3852 = vld [vmem:[%s291 + $0x18] sm:$0xff]
      %v3853 = vld [vmem:[%s291 + $0x20] sm:$0xff]
      %v3854 = vld [vmem:[%s291 + $0x30] sm:$0xff]
      %v3855 = vld [vmem:[%s291 + $0x38] sm:$0xff]
      %v3856 = vld [vmem:[%s291 + $0x48] sm:$0xff]
      %v3857 = vld [vmem:[%s291 + $0x50] sm:$0xff]
      %v3858 = vld [vmem:[%s291 + $0x60] sm:$0xff]
      %v3859 = vld [vmem:[%s291 + $0x68] sm:$0xff]
      %v3860 = vld [vmem:[%s291 + $0x78] sm:$0xff]
      %v3861 = vld [vmem:[%s291 + $0x80] sm:$0xff]
      %v3862 = vld [vmem:[%s291 + $0x90] sm:$0xff]
      %v3863 = vld [vmem:[%s291 + $0x98] sm:$0xff]
      %v3864 = vld [vmem:[%s291 + $0xa8] sm:$0xff]
      %v3865 = vld [vmem:[%s291 + $0xb0] sm:$0xff]
      %v3866 = vld [vmem:[%s291 + $0xc0] sm:$0xff]
      %v3867 = vld [vmem:[%s291 + $0xc8] sm:$0xff]
      %v3868 = vld [vmem:[%s291 + $0xd8] sm:$0xff]
      %v3869 = vld [vmem:[%s291 + $0xe0] sm:$0xff]
      %v3870 = vld [vmem:[%s291 + $0xf0] sm:$0xff]
      %v3871 = vld [vmem:[%s291 + $0xf8] sm:$0xff]
      %v3872 = vld [vmem:[%s291 + $0x108] sm:$0xff]
      %v3873 = vld [vmem:[%s291 + $0x110] sm:$0xff]
      %v3874 = vld [vmem:[%s291 + $0x120] sm:$0xff]
      %v3875 = vld [vmem:[%s291 + $0x128] sm:$0xff]
      %v3876 = vld [vmem:[%s291 + $0x138] sm:$0xff]
      %v3877 = vld [vmem:[%s291 + $0x140] sm:$0xff]
      %v3878 = vld [vmem:[%s291 + $0x150] sm:$0xff]
      %v3879 = vld [vmem:[%s291 + $0x158] sm:$0xff]
      %v3880 = vld [vmem:[%s291 + $0x168] sm:$0xff]
      %v3881 = vld [vmem:[%s291 + $0x170] sm:$0xff]
      %3914 = vrot.lane.b32.xlu0 %v3850, 24
      %v3915 = vpop.permute.xlu0 %3914
      %3916 = vrot.lane.b32.xlu0 %v3851, 24
      %v3917 = vpop.permute.xlu0 %3916
      %3918 = vrot.lane.b32.xlu0 %v3852, 24
      %v3919 = vpop.permute.xlu0 %3918
      %3920 = vrot.lane.b32.xlu0 %v3853, 24
      %v3921 = vpop.permute.xlu0 %3920
      %3922 = vrot.lane.b32.xlu0 %v3854, 24
      %v3923 = vpop.permute.xlu0 %3922
      %3924 = vrot.lane.b32.xlu0 %v3855, 24
      %v3925 = vpop.permute.xlu0 %3924
      %3926 = vrot.lane.b32.xlu0 %v3856, 24
      %v3927 = vpop.permute.xlu0 %3926
      %3928 = vrot.lane.b32.xlu0 %v3857, 24
      %v3929 = vpop.permute.xlu0 %3928
      %3930 = vrot.lane.b32.xlu0 %v3858, 24
      %v3931 = vpop.permute.xlu0 %3930
      %3932 = vrot.lane.b32.xlu0 %v3859, 24
      %v3933 = vpop.permute.xlu0 %3932
      %3934 = vrot.lane.b32.xlu0 %v3860, 24
      %v3935 = vpop.permute.xlu0 %3934
      %3936 = vrot.lane.b32.xlu0 %v3861, 24
      %v3937 = vpop.permute.xlu0 %3936
      %3938 = vrot.lane.b32.xlu0 %v3862, 24
      %v3939 = vpop.permute.xlu0 %3938
      %3940 = vrot.lane.b32.xlu0 %v3863, 24
      %v3941 = vpop.permute.xlu0 %3940
      %3942 = vrot.lane.b32.xlu0 %v3864, 24
      %v3943 = vpop.permute.xlu0 %3942
      %3944 = vrot.lane.b32.xlu0 %v3865, 24
      %v3945 = vpop.permute.xlu0 %3944
      %3946 = vrot.lane.b32.xlu0 %v3866, 24
      %v3947 = vpop.permute.xlu0 %3946
      %3948 = vrot.lane.b32.xlu0 %v3867, 24
      %v3949 = vpop.permute.xlu0 %3948
      %3950 = vrot.lane.b32.xlu0 %v3868, 24
      %v3951 = vpop.permute.xlu0 %3950
      %3952 = vrot.lane.b32.xlu0 %v3869, 24
      %v3953 = vpop.permute.xlu0 %3952
      %3954 = vrot.lane.b32.xlu0 %v3870, 24
      %v3955 = vpop.permute.xlu0 %3954
      %3956 = vrot.lane.b32.xlu0 %v3871, 24
      %v3957 = vpop.permute.xlu0 %3956
      %3958 = vrot.lane.b32.xlu0 %v3872, 24
      %v3959 = vpop.permute.xlu0 %3958
      %3960 = vrot.lane.b32.xlu0 %v3873, 24
      %v3961 = vpop.permute.xlu0 %3960
      %3962 = vrot.lane.b32.xlu0 %v3874, 24
      %v3963 = vpop.permute.xlu0 %3962
      %3964 = vrot.lane.b32.xlu0 %v3875, 24
      %v3965 = vpop.permute.xlu0 %3964
      %3966 = vrot.lane.b32.xlu0 %v3876, 24
      %v3967 = vpop.permute.xlu0 %3966
      %3968 = vrot.lane.b32.xlu0 %v3877, 24
      %v3969 = vpop.permute.xlu0 %3968
      %3970 = vrot.lane.b32.xlu0 %v3878, 24
      %v3971 = vpop.permute.xlu0 %3970
      %3972 = vrot.lane.b32.xlu0 %v3879, 24
      %v3973 = vpop.permute.xlu0 %3972
      %3974 = vrot.lane.b32.xlu0 %v3880, 24
      %v3975 = vpop.permute.xlu0 %3974
      %3976 = vrot.lane.b32.xlu0 %v3881, 24
      %v3977 = vpop.permute.xlu0 %3976
      %4010 = vst.msk [vmem:[#allocation3] sm:$0xff] %vm1566, %v3915
      %4011 = vst.msk [vmem:[#allocation3 + $0x8] sm:$0xff] %vm1566, %v3917
      %4012 = vst.msk [vmem:[#allocation3 + $0x10] sm:$0xff] %vm1566, %v3919
      %4013 = vst.msk [vmem:[#allocation3 + $0x18] sm:$0xff] %vm1566, %v3921
      %4014 = vst.msk [vmem:[#allocation3 + $0x20] sm:$0xff] %vm1566, %v3923
      %4015 = vst.msk [vmem:[#allocation3 + $0x28] sm:$0xff] %vm1566, %v3925
      %4016 = vst.msk [vmem:[#allocation3 + $0x30] sm:$0xff] %vm1566, %v3927
      %4017 = vst.msk [vmem:[#allocation3 + $0x38] sm:$0xff] %vm1566, %v3929
      %4018 = vst.msk [vmem:[#allocation3 + $0x40] sm:$0xff] %vm1566, %v3931
      %4019 = vst.msk [vmem:[#allocation3 + $0x48] sm:$0xff] %vm1566, %v3933
      %4020 = vst.msk [vmem:[#allocation3 + $0x50] sm:$0xff] %vm1566, %v3935
      %4021 = vst.msk [vmem:[#allocation3 + $0x58] sm:$0xff] %vm1566, %v3937
      %4022 = vst.msk [vmem:[#allocation3 + $0x60] sm:$0xff] %vm1566, %v3939
      %4023 = vst.msk [vmem:[#allocation3 + $0x68] sm:$0xff] %vm1566, %v3941
      %4024 = vst.msk [vmem:[#allocation3 + $0x70] sm:$0xff] %vm1566, %v3943
      %4025 = vst.msk [vmem:[#allocation3 + $0x78] sm:$0xff] %vm1566, %v3945
      %4026 = vst.msk [vmem:[#allocation3 + $0x80] sm:$0xff] %vm1566, %v3947
      %4027 = vst.msk [vmem:[#allocation3 + $0x88] sm:$0xff] %vm1566, %v3949
      %4028 = vst.msk [vmem:[#allocation3 + $0x90] sm:$0xff] %vm1566, %v3951
      %4029 = vst.msk [vmem:[#allocation3 + $0x98] sm:$0xff] %vm1566, %v3953
      %4030 = vst.msk [vmem:[#allocation3 + $0xa0] sm:$0xff] %vm1566, %v3955
      %4031 = vst.msk [vmem:[#allocation3 + $0xa8] sm:$0xff] %vm1566, %v3957
      %4032 = vst.msk [vmem:[#allocation3 + $0xb0] sm:$0xff] %vm1566, %v3959
      %4033 = vst.msk [vmem:[#allocation3 + $0xb8] sm:$0xff] %vm1566, %v3961
      %4034 = vst.msk [vmem:[#allocation3 + $0xc0] sm:$0xff] %vm1566, %v3963
      %4035 = vst.msk [vmem:[#allocation3 + $0xc8] sm:$0xff] %vm1566, %v3965
      %4036 = vst.msk [vmem:[#allocation3 + $0xd0] sm:$0xff] %vm1566, %v3967
      %4037 = vst.msk [vmem:[#allocation3 + $0xd8] sm:$0xff] %vm1566, %v3969
      %4038 = vst.msk [vmem:[#allocation3 + $0xe0] sm:$0xff] %vm1566, %v3971
      %4039 = vst.msk [vmem:[#allocation3 + $0xe8] sm:$0xff] %vm1566, %v3973
      %4040 = vst.msk [vmem:[#allocation3 + $0xf0] sm:$0xff] %vm1566, %v3975
      %4041 = vst.msk [vmem:[#allocation3 + $0xf8] sm:$0xff] %vm1566, %v3977
      %v4042 = vld [vmem:[%s291 + $0x1] sm:$0xff]
      %v4043 = vld [vmem:[%s291 + $0x9] sm:$0xff]
      %v4044 = vld [vmem:[%s291 + $0x19] sm:$0xff]
      %v4045 = vld [vmem:[%s291 + $0x21] sm:$0xff]
      %v4046 = vld [vmem:[%s291 + $0x31] sm:$0xff]
      %v4047 = vld [vmem:[%s291 + $0x39] sm:$0xff]
      %v4048 = vld [vmem:[%s291 + $0x49] sm:$0xff]
      %v4049 = vld [vmem:[%s291 + $0x51] sm:$0xff]
      %v4050 = vld [vmem:[%s291 + $0x61] sm:$0xff]
      %v4051 = vld [vmem:[%s291 + $0x69] sm:$0xff]
      %v4052 = vld [vmem:[%s291 + $0x79] sm:$0xff]
      %v4053 = vld [vmem:[%s291 + $0x81] sm:$0xff]
      %v4054 = vld [vmem:[%s291 + $0x91] sm:$0xff]
      %v4055 = vld [vmem:[%s291 + $0x99] sm:$0xff]
      %v4056 = vld [vmem:[%s291 + $0xa9] sm:$0xff]
      %v4057 = vld [vmem:[%s291 + $0xb1] sm:$0xff]
      %v4058 = vld [vmem:[%s291 + $0xc1] sm:$0xff]
      %v4059 = vld [vmem:[%s291 + $0xc9] sm:$0xff]
      %v4060 = vld [vmem:[%s291 + $0xd9] sm:$0xff]
      %v4061 = vld [vmem:[%s291 + $0xe1] sm:$0xff]
      %v4062 = vld [vmem:[%s291 + $0xf1] sm:$0xff]
      %v4063 = vld [vmem:[%s291 + $0xf9] sm:$0xff]
      %v4064 = vld [vmem:[%s291 + $0x109] sm:$0xff]
      %v4065 = vld [vmem:[%s291 + $0x111] sm:$0xff]
      %v4066 = vld [vmem:[%s291 + $0x121] sm:$0xff]
      %v4067 = vld [vmem:[%s291 + $0x129] sm:$0xff]
      %v4068 = vld [vmem:[%s291 + $0x139] sm:$0xff]
      %v4069 = vld [vmem:[%s291 + $0x141] sm:$0xff]
      %v4070 = vld [vmem:[%s291 + $0x151] sm:$0xff]
      %v4071 = vld [vmem:[%s291 + $0x159] sm:$0xff]
      %v4072 = vld [vmem:[%s291 + $0x169] sm:$0xff]
      %v4073 = vld [vmem:[%s291 + $0x171] sm:$0xff]
      %4106 = vrot.lane.b32.xlu0 %v4042, 28
      %v4107 = vpop.permute.xlu0 %4106
      %4108 = vrot.lane.b32.xlu0 %v4043, 28
      %v4109 = vpop.permute.xlu0 %4108
      %4110 = vrot.lane.b32.xlu0 %v4044, 28
      %v4111 = vpop.permute.xlu0 %4110
      %4112 = vrot.lane.b32.xlu0 %v4045, 28
      %v4113 = vpop.permute.xlu0 %4112
      %4114 = vrot.lane.b32.xlu0 %v4046, 28
      %v4115 = vpop.permute.xlu0 %4114
      %4116 = vrot.lane.b32.xlu0 %v4047, 28
      %v4117 = vpop.permute.xlu0 %4116
      %4118 = vrot.lane.b32.xlu0 %v4048, 28
      %v4119 = vpop.permute.xlu0 %4118
      %4120 = vrot.lane.b32.xlu0 %v4049, 28
      %v4121 = vpop.permute.xlu0 %4120
      %4122 = vrot.lane.b32.xlu0 %v4050, 28
      %v4123 = vpop.permute.xlu0 %4122
      %4124 = vrot.lane.b32.xlu0 %v4051, 28
      %v4125 = vpop.permute.xlu0 %4124
      %4126 = vrot.lane.b32.xlu0 %v4052, 28
      %v4127 = vpop.permute.xlu0 %4126
      %4128 = vrot.lane.b32.xlu0 %v4053, 28
      %v4129 = vpop.permute.xlu0 %4128
      %4130 = vrot.lane.b32.xlu0 %v4054, 28
      %v4131 = vpop.permute.xlu0 %4130
      %4132 = vrot.lane.b32.xlu0 %v4055, 28
      %v4133 = vpop.permute.xlu0 %4132
      %4134 = vrot.lane.b32.xlu0 %v4056, 28
      %v4135 = vpop.permute.xlu0 %4134
      %4136 = vrot.lane.b32.xlu0 %v4057, 28
      %v4137 = vpop.permute.xlu0 %4136
      %4138 = vrot.lane.b32.xlu0 %v4058, 28
      %v4139 = vpop.permute.xlu0 %4138
      %4140 = vrot.lane.b32.xlu0 %v4059, 28
      %v4141 = vpop.permute.xlu0 %4140
      %4142 = vrot.lane.b32.xlu0 %v4060, 28
      %v4143 = vpop.permute.xlu0 %4142
      %4144 = vrot.lane.b32.xlu0 %v4061, 28
      %v4145 = vpop.permute.xlu0 %4144
      %4146 = vrot.lane.b32.xlu0 %v4062, 28
      %v4147 = vpop.permute.xlu0 %4146
      %4148 = vrot.lane.b32.xlu0 %v4063, 28
      %v4149 = vpop.permute.xlu0 %4148
      %4150 = vrot.lane.b32.xlu0 %v4064, 28
      %v4151 = vpop.permute.xlu0 %4150
      %4152 = vrot.lane.b32.xlu0 %v4065, 28
      %v4153 = vpop.permute.xlu0 %4152
      %4154 = vrot.lane.b32.xlu0 %v4066, 28
      %v4155 = vpop.permute.xlu0 %4154
      %4156 = vrot.lane.b32.xlu0 %v4067, 28
      %v4157 = vpop.permute.xlu0 %4156
      %4158 = vrot.lane.b32.xlu0 %v4068, 28
      %v4159 = vpop.permute.xlu0 %4158
      %4160 = vrot.lane.b32.xlu0 %v4069, 28
      %v4161 = vpop.permute.xlu0 %4160
      %4162 = vrot.lane.b32.xlu0 %v4070, 28
      %v4163 = vpop.permute.xlu0 %4162
      %4164 = vrot.lane.b32.xlu0 %v4071, 28
      %v4165 = vpop.permute.xlu0 %4164
      %4166 = vrot.lane.b32.xlu0 %v4072, 28
      %v4167 = vpop.permute.xlu0 %4166
      %4168 = vrot.lane.b32.xlu0 %v4073, 28
      %v4169 = vpop.permute.xlu0 %4168
      %4202 = vst.msk [vmem:[#allocation3] sm:$0xff] %vm1759, %v4107
      %4203 = vst.msk [vmem:[#allocation3 + $0x8] sm:$0xff] %vm1759, %v4109
      %4204 = vst.msk [vmem:[#allocation3 + $0x10] sm:$0xff] %vm1759, %v4111
      %4205 = vst.msk [vmem:[#allocation3 + $0x18] sm:$0xff] %vm1759, %v4113
      %4206 = vst.msk [vmem:[#allocation3 + $0x20] sm:$0xff] %vm1759, %v4115
      %4207 = vst.msk [vmem:[#allocation3 + $0x28] sm:$0xff] %vm1759, %v4117
      %4208 = vst.msk [vmem:[#allocation3 + $0x30] sm:$0xff] %vm1759, %v4119
      %4209 = vst.msk [vmem:[#allocation3 + $0x38] sm:$0xff] %vm1759, %v4121
      %4210 = vst.msk [vmem:[#allocation3 + $0x40] sm:$0xff] %vm1759, %v4123
      %4211 = vst.msk [vmem:[#allocation3 + $0x48] sm:$0xff] %vm1759, %v4125
      %4212 = vst.msk [vmem:[#allocation3 + $0x50] sm:$0xff] %vm1759, %v4127
      %4213 = vst.msk [vmem:[#allocation3 + $0x58] sm:$0xff] %vm1759, %v4129
      %4214 = vst.msk [vmem:[#allocation3 + $0x60] sm:$0xff] %vm1759, %v4131
      %4215 = vst.msk [vmem:[#allocation3 + $0x68] sm:$0xff] %vm1759, %v4133
      %4216 = vst.msk [vmem:[#allocation3 + $0x70] sm:$0xff] %vm1759, %v4135
      %4217 = vst.msk [vmem:[#allocation3 + $0x78] sm:$0xff] %vm1759, %v4137
      %4218 = vst.msk [vmem:[#allocation3 + $0x80] sm:$0xff] %vm1759, %v4139
      %4219 = vst.msk [vmem:[#allocation3 + $0x88] sm:$0xff] %vm1759, %v4141
      %4220 = vst.msk [vmem:[#allocation3 + $0x90] sm:$0xff] %vm1759, %v4143
      %4221 = vst.msk [vmem:[#allocation3 + $0x98] sm:$0xff] %vm1759, %v4145
      %4222 = vst.msk [vmem:[#allocation3 + $0xa0] sm:$0xff] %vm1759, %v4147
      %4223 = vst.msk [vmem:[#allocation3 + $0xa8] sm:$0xff] %vm1759, %v4149
      %4224 = vst.msk [vmem:[#allocation3 + $0xb0] sm:$0xff] %vm1759, %v4151
      %4225 = vst.msk [vmem:[#allocation3 + $0xb8] sm:$0xff] %vm1759, %v4153
      %4226 = vst.msk [vmem:[#allocation3 + $0xc0] sm:$0xff] %vm1759, %v4155
      %4227 = vst.msk [vmem:[#allocation3 + $0xc8] sm:$0xff] %vm1759, %v4157
      %4228 = vst.msk [vmem:[#allocation3 + $0xd0] sm:$0xff] %vm1759, %v4159
      %4229 = vst.msk [vmem:[#allocation3 + $0xd8] sm:$0xff] %vm1759, %v4161
      %4230 = vst.msk [vmem:[#allocation3 + $0xe0] sm:$0xff] %vm1759, %v4163
      %4231 = vst.msk [vmem:[#allocation3 + $0xe8] sm:$0xff] %vm1759, %v4165
      %4232 = vst.msk [vmem:[#allocation3 + $0xf0] sm:$0xff] %vm1759, %v4167
      %4233 = vst.msk [vmem:[#allocation3 + $0xf8] sm:$0xff] %vm1759, %v4169
      %v4234 = vld [vmem:[%s291 + $0x2] sm:$0xff]
      %v4235 = vld [vmem:[%s291 + $0xa] sm:$0xff]
      %v4236 = vld [vmem:[%s291 + $0x1a] sm:$0xff]
      %v4237 = vld [vmem:[%s291 + $0x22] sm:$0xff]
      %v4238 = vld [vmem:[%s291 + $0x32] sm:$0xff]
      %v4239 = vld [vmem:[%s291 + $0x3a] sm:$0xff]
      %v4240 = vld [vmem:[%s291 + $0x4a] sm:$0xff]
      %v4241 = vld [vmem:[%s291 + $0x52] sm:$0xff]
      %v4242 = vld [vmem:[%s291 + $0x62] sm:$0xff]
      %v4243 = vld [vmem:[%s291 + $0x6a] sm:$0xff]
      %v4244 = vld [vmem:[%s291 + $0x7a] sm:$0xff]
      %v4245 = vld [vmem:[%s291 + $0x82] sm:$0xff]
      %v4246 = vld [vmem:[%s291 + $0x92] sm:$0xff]
      %v4247 = vld [vmem:[%s291 + $0x9a] sm:$0xff]
      %v4248 = vld [vmem:[%s291 + $0xaa] sm:$0xff]
      %v4249 = vld [vmem:[%s291 + $0xb2] sm:$0xff]
      %v4250 = vld [vmem:[%s291 + $0xc2] sm:$0xff]
      %v4251 = vld [vmem:[%s291 + $0xca] sm:$0xff]
      %v4252 = vld [vmem:[%s291 + $0xda] sm:$0xff]
      %v4253 = vld [vmem:[%s291 + $0xe2] sm:$0xff]
      %v4254 = vld [vmem:[%s291 + $0xf2] sm:$0xff]
      %v4255 = vld [vmem:[%s291 + $0xfa] sm:$0xff]
      %v4256 = vld [vmem:[%s291 + $0x10a] sm:$0xff]
      %v4257 = vld [vmem:[%s291 + $0x112] sm:$0xff]
      %v4258 = vld [vmem:[%s291 + $0x122] sm:$0xff]
      %v4259 = vld [vmem:[%s291 + $0x12a] sm:$0xff]
      %v4260 = vld [vmem:[%s291 + $0x13a] sm:$0xff]
      %v4261 = vld [vmem:[%s291 + $0x142] sm:$0xff]
      %v4262 = vld [vmem:[%s291 + $0x152] sm:$0xff]
      %v4263 = vld [vmem:[%s291 + $0x15a] sm:$0xff]
      %v4264 = vld [vmem:[%s291 + $0x16a] sm:$0xff]
      %v4265 = vld [vmem:[%s291 + $0x172] sm:$0xff]
      %4298 = vrot.lane.b32.xlu0 %v4234, 32
      %v4299 = vpop.permute.xlu0 %4298
      %4300 = vrot.lane.b32.xlu0 %v4235, 32
      %v4301 = vpop.permute.xlu0 %4300
      %4302 = vrot.lane.b32.xlu0 %v4236, 32
      %v4303 = vpop.permute.xlu0 %4302
      %4304 = vrot.lane.b32.xlu0 %v4237, 32
      %v4305 = vpop.permute.xlu0 %4304
      %4306 = vrot.lane.b32.xlu0 %v4238, 32
      %v4307 = vpop.permute.xlu0 %4306
      %4308 = vrot.lane.b32.xlu0 %v4239, 32
      %v4309 = vpop.permute.xlu0 %4308
      %4310 = vrot.lane.b32.xlu0 %v4240, 32
      %v4311 = vpop.permute.xlu0 %4310
      %4312 = vrot.lane.b32.xlu0 %v4241, 32
      %v4313 = vpop.permute.xlu0 %4312
      %4314 = vrot.lane.b32.xlu0 %v4242, 32
      %v4315 = vpop.permute.xlu0 %4314
      %4316 = vrot.lane.b32.xlu0 %v4243, 32
      %v4317 = vpop.permute.xlu0 %4316
      %4318 = vrot.lane.b32.xlu0 %v4244, 32
      %v4319 = vpop.permute.xlu0 %4318
      %4320 = vrot.lane.b32.xlu0 %v4245, 32
      %v4321 = vpop.permute.xlu0 %4320
      %4322 = vrot.lane.b32.xlu0 %v4246, 32
      %v4323 = vpop.permute.xlu0 %4322
      %4324 = vrot.lane.b32.xlu0 %v4247, 32
      %v4325 = vpop.permute.xlu0 %4324
      %4326 = vrot.lane.b32.xlu0 %v4248, 32
      %v4327 = vpop.permute.xlu0 %4326
      %4328 = vrot.lane.b32.xlu0 %v4249, 32
      %v4329 = vpop.permute.xlu0 %4328
      %4330 = vrot.lane.b32.xlu0 %v4250, 32
      %v4331 = vpop.permute.xlu0 %4330
      %4332 = vrot.lane.b32.xlu0 %v4251, 32
      %v4333 = vpop.permute.xlu0 %4332
      %4334 = vrot.lane.b32.xlu0 %v4252, 32
      %v4335 = vpop.permute.xlu0 %4334
      %4336 = vrot.lane.b32.xlu0 %v4253, 32
      %v4337 = vpop.permute.xlu0 %4336
      %4338 = vrot.lane.b32.xlu0 %v4254, 32
      %v4339 = vpop.permute.xlu0 %4338
      %4340 = vrot.lane.b32.xlu0 %v4255, 32
      %v4341 = vpop.permute.xlu0 %4340
      %4342 = vrot.lane.b32.xlu0 %v4256, 32
      %v4343 = vpop.permute.xlu0 %4342
      %4344 = vrot.lane.b32.xlu0 %v4257, 32
      %v4345 = vpop.permute.xlu0 %4344
      %4346 = vrot.lane.b32.xlu0 %v4258, 32
      %v4347 = vpop.permute.xlu0 %4346
      %4348 = vrot.lane.b32.xlu0 %v4259, 32
      %v4349 = vpop.permute.xlu0 %4348
      %4350 = vrot.lane.b32.xlu0 %v4260, 32
      %v4351 = vpop.permute.xlu0 %4350
      %4352 = vrot.lane.b32.xlu0 %v4261, 32
      %v4353 = vpop.permute.xlu0 %4352
      %4354 = vrot.lane.b32.xlu0 %v4262, 32
      %v4355 = vpop.permute.xlu0 %4354
      %4356 = vrot.lane.b32.xlu0 %v4263, 32
      %v4357 = vpop.permute.xlu0 %4356
      %4358 = vrot.lane.b32.xlu0 %v4264, 32
      %v4359 = vpop.permute.xlu0 %4358
      %4360 = vrot.lane.b32.xlu0 %v4265, 32
      %v4361 = vpop.permute.xlu0 %4360
      %4394 = vst.msk [vmem:[#allocation3] sm:$0xff] %vm1952, %v4299
      %4395 = vst.msk [vmem:[#allocation3 + $0x8] sm:$0xff] %vm1952, %v4301
      %4396 = vst.msk [vmem:[#allocation3 + $0x10] sm:$0xff] %vm1952, %v4303
      %4397 = vst.msk [vmem:[#allocation3 + $0x18] sm:$0xff] %vm1952, %v4305
      %4398 = vst.msk [vmem:[#allocation3 + $0x20] sm:$0xff] %vm1952, %v4307
      %4399 = vst.msk [vmem:[#allocation3 + $0x28] sm:$0xff] %vm1952, %v4309
      %4400 = vst.msk [vmem:[#allocation3 + $0x30] sm:$0xff] %vm1952, %v4311
      %4401 = vst.msk [vmem:[#allocation3 + $0x38] sm:$0xff] %vm1952, %v4313
      %4402 = vst.msk [vmem:[#allocation3 + $0x40] sm:$0xff] %vm1952, %v4315
      %4403 = vst.msk [vmem:[#allocation3 + $0x48] sm:$0xff] %vm1952, %v4317
      %4404 = vst.msk [vmem:[#allocation3 + $0x50] sm:$0xff] %vm1952, %v4319
      %4405 = vst.msk [vmem:[#allocation3 + $0x58] sm:$0xff] %vm1952, %v4321
      %4406 = vst.msk [vmem:[#allocation3 + $0x60] sm:$0xff] %vm1952, %v4323
      %4407 = vst.msk [vmem:[#allocation3 + $0x68] sm:$0xff] %vm1952, %v4325
      %4408 = vst.msk [vmem:[#allocation3 + $0x70] sm:$0xff] %vm1952, %v4327
      %4409 = vst.msk [vmem:[#allocation3 + $0x78] sm:$0xff] %vm1952, %v4329
      %4410 = vst.msk [vmem:[#allocation3 + $0x80] sm:$0xff] %vm1952, %v4331
      %4411 = vst.msk [vmem:[#allocation3 + $0x88] sm:$0xff] %vm1952, %v4333
      %4412 = vst.msk [vmem:[#allocation3 + $0x90] sm:$0xff] %vm1952, %v4335
      %4413 = vst.msk [vmem:[#allocation3 + $0x98] sm:$0xff] %vm1952, %v4337
      %4414 = vst.msk [vmem:[#allocation3 + $0xa0] sm:$0xff] %vm1952, %v4339
      %4415 = vst.msk [vmem:[#allocation3 + $0xa8] sm:$0xff] %vm1952, %v4341
      %4416 = vst.msk [vmem:[#allocation3 + $0xb0] sm:$0xff] %vm1952, %v4343
      %4417 = vst.msk [vmem:[#allocation3 + $0xb8] sm:$0xff] %vm1952, %v4345
      %4418 = vst.msk [vmem:[#allocation3 + $0xc0] sm:$0xff] %vm1952, %v4347
      %4419 = vst.msk [vmem:[#allocation3 + $0xc8] sm:$0xff] %vm1952, %v4349
      %4420 = vst.msk [vmem:[#allocation3 + $0xd0] sm:$0xff] %vm1952, %v4351
      %4421 = vst.msk [vmem:[#allocation3 + $0xd8] sm:$0xff] %vm1952, %v4353
      %4422 = vst.msk [vmem:[#allocation3 + $0xe0] sm:$0xff] %vm1952, %v4355
      %4423 = vst.msk [vmem:[#allocation3 + $0xe8] sm:$0xff] %vm1952, %v4357
      %4424 = vst.msk [vmem:[#allocation3 + $0xf0] sm:$0xff] %vm1952, %v4359
      %4425 = vst.msk [vmem:[#allocation3 + $0xf8] sm:$0xff] %vm1952, %v4361
      %v4426 = vld [vmem:[#allocation3] sm:$0xff]
      %v4427 = vld [vmem:[#allocation3 + $0x8] sm:$0xff]
      %v4428 = vld [vmem:[#allocation3 + $0x10] sm:$0xff]
      %v4429 = vld [vmem:[#allocation3 + $0x18] sm:$0xff]
      %v4430 = vld [vmem:[#allocation3 + $0x20] sm:$0xff]
      %v4431 = vld [vmem:[#allocation3 + $0x28] sm:$0xff]
      %v4432 = vld [vmem:[#allocation3 + $0x30] sm:$0xff]
      %v4433 = vld [vmem:[#allocation3 + $0x38] sm:$0xff]
      %v4434 = vld [vmem:[#allocation3 + $0x40] sm:$0xff]
      %v4435 = vld [vmem:[#allocation3 + $0x48] sm:$0xff]
      %v4436 = vld [vmem:[#allocation3 + $0x50] sm:$0xff]
      %v4437 = vld [vmem:[#allocation3 + $0x58] sm:$0xff]
      %v4438 = vld [vmem:[#allocation3 + $0x60] sm:$0xff]
      %v4439 = vld [vmem:[#allocation3 + $0x68] sm:$0xff]
      %v4440 = vld [vmem:[#allocation3 + $0x70] sm:$0xff]
      %v4441 = vld [vmem:[#allocation3 + $0x78] sm:$0xff]
      %v4442 = vld [vmem:[#allocation3 + $0x80] sm:$0xff]
      %v4443 = vld [vmem:[#allocation3 + $0x88] sm:$0xff]
      %v4444 = vld [vmem:[#allocation3 + $0x90] sm:$0xff]
      %v4445 = vld [vmem:[#allocation3 + $0x98] sm:$0xff]
      %v4446 = vld [vmem:[#allocation3 + $0xa0] sm:$0xff]
      %v4447 = vld [vmem:[#allocation3 + $0xa8] sm:$0xff]
      %v4448 = vld [vmem:[#allocation3 + $0xb0] sm:$0xff]
      %v4449 = vld [vmem:[#allocation3 + $0xb8] sm:$0xff]
      %v4450 = vld [vmem:[#allocation3 + $0xc0] sm:$0xff]
      %v4451 = vld [vmem:[#allocation3 + $0xc8] sm:$0xff]
      %v4452 = vld [vmem:[#allocation3 + $0xd0] sm:$0xff]
      %v4453 = vld [vmem:[#allocation3 + $0xd8] sm:$0xff]
      %v4454 = vld [vmem:[#allocation3 + $0xe0] sm:$0xff]
      %v4455 = vld [vmem:[#allocation3 + $0xe8] sm:$0xff]
      %v4456 = vld [vmem:[#allocation3 + $0xf0] sm:$0xff]
      %v4457 = vld [vmem:[#allocation3 + $0xf8] sm:$0xff]
      %v4458 = vld [vmem:[%s3] sm:$0xff]
      %v4459 = vld [vmem:[%s3 + $0x8] sm:$0xff]
      %v4460 = vld [vmem:[%s3 + $0x10] sm:$0xff]
      %v4461 = vld [vmem:[%s3 + $0x18] sm:$0xff]
      %v4462 = vld [vmem:[%s3 + $0x20] sm:$0xf]
      %v4463 = vld [vmem:[%s4] sm:$0x1]
      %v4465 = vlaneseq
      %v4466 = vshrl.u32 %v4465, 7
      %v4467 = vsub.s32 0, %v4466
      %v4468 = vrot.slane %v4463, %v4467
      %v4471 = vsel %vm2029, %v4426, 0
      %v4474 = vsel %vm2029, %v4427, 0
      %v4477 = vsel %vm2029, %v4428, 0
      %v4480 = vsel %vm2029, %v4429, 0
      %v4483 = vsel %vm2029, %v4430, 0
      %v4486 = vsel %vm2029, %v4431, 0
      %v4489 = vsel %vm2029, %v4432, 0
      %v4492 = vsel %vm2029, %v4433, 0
      %v4495 = vsel %vm2029, %v4434, 0
      %v4498 = vsel %vm2029, %v4435, 0
      %v4501 = vsel %vm2029, %v4436, 0
      %v4504 = vsel %vm2029, %v4437, 0
      %v4507 = vsel %vm2029, %v4438, 0
      %v4510 = vsel %vm2029, %v4439, 0
      %v4513 = vsel %vm2029, %v4440, 0
      %v4516 = vsel %vm2029, %v4441, 0
      %v4519 = vsel %vm2029, %v4442, 0
      %v4522 = vsel %vm2029, %v4443, 0
      %v4525 = vsel %vm2029, %v4444, 0
      %v4528 = vsel %vm2029, %v4445, 0
      %v4531 = vsel %vm2029, %v4446, 0
      %v4534 = vsel %vm2029, %v4447, 0
      %v4537 = vsel %vm2029, %v4448, 0
      %v4540 = vsel %vm2029, %v4449, 0
      %v4543 = vsel %vm2029, %v4450, 0
      %v4546 = vsel %vm2029, %v4451, 0
      %v4549 = vsel %vm2029, %v4452, 0
      %v4552 = vsel %vm2029, %v4453, 0
      %v4555 = vsel %vm2029, %v4454, 0
      %v4558 = vsel %vm2029, %v4455, 0
      %v4561 = vsel %vm2029, %v4456, 0
      %v4564 = vsel %vm2029, %v4457, 0
      %v4567 = vsel %vm2126, %v4462, 0
      %4569 = vmatprep.subr.mxu0 0.0
      %4570 = vmatpush1.msra.mxu0 %v4458
      %4571 = vmatprep.subr.mxu0 0.0
      %4572 = vmatpush1.msra.mxu0 %v4459
      %4573 = vmatprep.subr.mxu0 0.0
      %4574 = vmatpush1.msra.mxu0 %v4460
      %4575 = vmatprep.subr.mxu0 0.0
      %4576 = vmatpush1.msra.mxu0 %v4461
      %4577 = vmatprep.subr.mxu0 0.0
      %4578 = vmatpush1.msra.mxu0 %v4567
      %4579 = vmatprep.subr.mxu0 0.0
      %4580 = vmatpush1.msra.mxu0 0.0
      %4581 = vmatprep.subr.mxu0 0.0
      %4582 = vmatpush1.msra.mxu0 0.0
      %4583 = vmatprep.subr.mxu0 0.0
      %4584 = vmatpush1.msra.mxu0 0.0
      %4585 = vmatprep.subr.mxu0 0.0
      %4586 = vmatpush1.msra.mxu0 0.0
      %4587 = vmatprep.subr.mxu0 0.0
      %4588 = vmatpush1.msra.mxu0 0.0
      %4589 = vmatprep.subr.mxu0 0.0
      %4590 = vmatpush1.msra.mxu0 0.0
      %4591 = vmatprep.subr.mxu0 0.0
      %4592 = vmatpush1.msra.mxu0 0.0
      %4593 = vmatprep.subr.mxu0 0.0
      %4594 = vmatpush1.msra.mxu0 0.0
      %4595 = vmatprep.subr.mxu0 0.0
      %4596 = vmatpush1.msra.mxu0 0.0
      %4597 = vmatprep.subr.mxu0 0.0
      %4598 = vmatpush1.msra.mxu0 0.0
      %4599 = vmatprep.subr.mxu0 0.0
      %4600 = vmatpush1.msra.mxu0 0.0
      %4601 = vmatprep.subr.mxu0 0.0
      %4602 = vmatpush1.msra.mxu0 0.0
      %4603 = vmatprep.subr.mxu0 0.0
      %4604 = vmatpush1.msra.mxu0 0.0
      %4605 = vmatprep.subr.mxu0 0.0
      %4606 = vmatpush1.msra.mxu0 0.0
      %4607 = vmatprep.subr.mxu0 0.0
      %4608 = vmatpush1.msra.mxu0 0.0
      %4609 = vmatprep.subr.mxu0 0.0
      %4610 = vmatpush1.msra.mxu0 0.0
      %4611 = vmatprep.subr.mxu0 0.0
      %4612 = vmatpush1.msra.mxu0 0.0
      %4613 = vmatprep.subr.mxu0 0.0
      %4614 = vmatpush1.msra.mxu0 0.0
      %4615 = vmatprep.subr.mxu0 0.0
      %4616 = vmatpush1.msra.mxu0 0.0
      %4617 = vmatprep.subr.mxu0 0.0
      %4618 = vmatpush1.msra.mxu0 0.0
      %4619 = vmatprep.subr.mxu0 0.0
      %4620 = vmatpush1.msra.mxu0 0.0
      %4621 = vmatprep.subr.mxu0 0.0
      %4622 = vmatpush1.msra.mxu0 0.0
      %4623 = vmatprep.subr.mxu0 0.0
      %4624 = vmatpush1.msra.mxu0 0.0
      %4625 = vmatprep.subr.mxu0 0.0
      %4626 = vmatpush1.msra.mxu0 0.0
      %4627 = vmatprep.subr.mxu0 0.0
      %4628 = vmatpush1.msra.mxu0 0.0
      %4629 = vmatprep.subr.mxu0 0.0
      %4630 = vmatpush1.msra.mxu0 0.0
      %4631 = vmatprep.subr.mxu0 0.0
      %4632 = vmatpush1.msra.mxu0 0.0
      %4633 = vmatprep.mubr.f32.mxu0 0.0
      %4634 = vmatmul.mubr.f32.gmra.mrb[0].mxu0 %v4471
      %v4635 = vpop.f32.mrb[0].mxu0
      %v4636 = vadd.f32 %v4468, %v4635
      %v4637 = vpop.f32.mrb[0].mxu0
      %4638 = vmatprep.mubr.f32.mxu0 0.0
      %4639 = vmatmul.mubr.f32.gmra.mrb[0].mxu0 %v4474
      %v4640 = vpop.f32.mrb[0].mxu0
      %v4641 = vadd.f32 %v4468, %v4640
      %v4642 = vpop.f32.mrb[0].mxu0
      %4643 = vmatprep.mubr.f32.mxu0 0.0
      %4644 = vmatmul.mubr.f32.gmra.mrb[0].mxu0 %v4477
      %v4645 = vpop.f32.mrb[0].mxu0
      %v4646 = vadd.f32 %v4468, %v4645
      %v4647 = vpop.f32.mrb[0].mxu0
      %4648 = vmatprep.mubr.f32.mxu0 0.0
      %4649 = vmatmul.mubr.f32.gmra.mrb[0].mxu0 %v4480
      %v4650 = vpop.f32.mrb[0].mxu0
      %v4651 = vadd.f32 %v4468, %v4650
      %v4652 = vpop.f32.mrb[0].mxu0
      %4653 = vmatprep.mubr.f32.mxu0 0.0
      %4654 = vmatmul.mubr.f32.gmra.mrb[0].mxu0 %v4483
      %v4655 = vpop.f32.mrb[0].mxu0
      %v4656 = vadd.f32 %v4468, %v4655
      %v4657 = vpop.f32.mrb[0].mxu0
      %4658 = vmatprep.mubr.f32.mxu0 0.0
      %4659 = vmatmul.mubr.f32.gmra.mrb[0].mxu0 %v4486
      %v4660 = vpop.f32.mrb[0].mxu0
      %v4661 = vadd.f32 %v4468, %v4660
      %v4662 = vpop.f32.mrb[0].mxu0
      %4663 = vmatprep.mubr.f32.mxu0 0.0
      %4664 = vmatmul.mubr.f32.gmra.mrb[0].mxu0 %v4489
      %v4665 = vpop.f32.mrb[0].mxu0
      %v4666 = vadd.f32 %v4468, %v4665
      %v4667 = vpop.f32.mrb[0].mxu0
      %4668 = vmatprep.mubr.f32.mxu0 0.0
      %4669 = vmatmul.mubr.f32.gmra.mrb[0].mxu0 %v4492
      %v4670 = vpop.f32.mrb[0].mxu0
      %v4671 = vadd.f32 %v4468, %v4670
      %v4672 = vpop.f32.mrb[0].mxu0
      %4673 = vmatprep.mubr.f32.mxu0 0.0
      %4674 = vmatmul.mubr.f32.gmra.mrb[0].mxu0 %v4495
      %v4675 = vpop.f32.mrb[0].mxu0
      %v4676 = vadd.f32 %v4468, %v4675
      %v4677 = vpop.f32.mrb[0].mxu0
      %4678 = vmatprep.mubr.f32.mxu0 0.0
      %4679 = vmatmul.mubr.f32.gmra.mrb[0].mxu0 %v4498
      %v4680 = vpop.f32.mrb[0].mxu0
      %v4681 = vadd.f32 %v4468, %v4680
      %v4682 = vpop.f32.mrb[0].mxu0
      %4683 = vmatprep.mubr.f32.mxu0 0.0
      %4684 = vmatmul.mubr.f32.gmra.mrb[0].mxu0 %v4501
      %v4685 = vpop.f32.mrb[0].mxu0
      %v4686 = vadd.f32 %v4468, %v4685
      %v4687 = vpop.f32.mrb[0].mxu0
      %4688 = vmatprep.mubr.f32.mxu0 0.0
      %4689 = vmatmul.mubr.f32.gmra.mrb[0].mxu0 %v4504
      %v4690 = vpop.f32.mrb[0].mxu0
      %v4691 = vadd.f32 %v4468, %v4690
      %v4692 = vpop.f32.mrb[0].mxu0
      %4693 = vmatprep.mubr.f32.mxu0 0.0
      %4694 = vmatmul.mubr.f32.gmra.mrb[0].mxu0 %v4507
      %v4695 = vpop.f32.mrb[0].mxu0
      %v4696 = vadd.f32 %v4468, %v4695
      %v4697 = vpop.f32.mrb[0].mxu0
      %4698 = vmatprep.mubr.f32.mxu0 0.0
      %4699 = vmatmul.mubr.f32.gmra.mrb[0].mxu0 %v4510
      %v4700 = vpop.f32.mrb[0].mxu0
      %v4701 = vadd.f32 %v4468, %v4700
      %v4702 = vpop.f32.mrb[0].mxu0
      %4703 = vmatprep.mubr.f32.mxu0 0.0
      %4704 = vmatmul.mubr.f32.gmra.mrb[0].mxu0 %v4513
      %v4705 = vpop.f32.mrb[0].mxu0
      %v4706 = vadd.f32 %v4468, %v4705
      %v4707 = vpop.f32.mrb[0].mxu0
      %4708 = vmatprep.mubr.f32.mxu0 0.0
      %4709 = vmatmul.mubr.f32.gmra.mrb[0].mxu0 %v4516
      %v4710 = vpop.f32.mrb[0].mxu0
      %v4711 = vadd.f32 %v4468, %v4710
      %v4712 = vpop.f32.mrb[0].mxu0
      %4713 = vmatprep.mubr.f32.mxu0 0.0
      %4714 = vmatmul.mubr.f32.gmra.mrb[0].mxu0 %v4519
      %v4715 = vpop.f32.mrb[0].mxu0
      %v4716 = vadd.f32 %v4468, %v4715
      %v4717 = vpop.f32.mrb[0].mxu0
      %4718 = vmatprep.mubr.f32.mxu0 0.0
      %4719 = vmatmul.mubr.f32.gmra.mrb[0].mxu0 %v4522
      %v4720 = vpop.f32.mrb[0].mxu0
      %v4721 = vadd.f32 %v4468, %v4720
      %v4722 = vpop.f32.mrb[0].mxu0
      %4723 = vmatprep.mubr.f32.mxu0 0.0
      %4724 = vmatmul.mubr.f32.gmra.mrb[0].mxu0 %v4525
      %v4725 = vpop.f32.mrb[0].mxu0
      %v4726 = vadd.f32 %v4468, %v4725
      %v4727 = vpop.f32.mrb[0].mxu0
      %4728 = vmatprep.mubr.f32.mxu0 0.0
      %4729 = vmatmul.mubr.f32.gmra.mrb[0].mxu0 %v4528
      %v4730 = vpop.f32.mrb[0].mxu0
      %v4731 = vadd.f32 %v4468, %v4730
      %v4732 = vpop.f32.mrb[0].mxu0
      %4733 = vmatprep.mubr.f32.mxu0 0.0
      %4734 = vmatmul.mubr.f32.gmra.mrb[0].mxu0 %v4531
      %v4735 = vpop.f32.mrb[0].mxu0
      %v4736 = vadd.f32 %v4468, %v4735
      %v4737 = vpop.f32.mrb[0].mxu0
      %4738 = vmatprep.mubr.f32.mxu0 0.0
      %4739 = vmatmul.mubr.f32.gmra.mrb[0].mxu0 %v4534
      %v4740 = vpop.f32.mrb[0].mxu0
      %v4741 = vadd.f32 %v4468, %v4740
      %v4742 = vpop.f32.mrb[0].mxu0
      %4743 = vmatprep.mubr.f32.mxu0 0.0
      %4744 = vmatmul.mubr.f32.gmra.mrb[0].mxu0 %v4537
      %v4745 = vpop.f32.mrb[0].mxu0
      %v4746 = vadd.f32 %v4468, %v4745
      %v4747 = vpop.f32.mrb[0].mxu0
      %4748 = vmatprep.mubr.f32.mxu0 0.0
      %4749 = vmatmul.mubr.f32.gmra.mrb[0].mxu0 %v4540
      %v4750 = vpop.f32.mrb[0].mxu0
      %v4751 = vadd.f32 %v4468, %v4750
      %v4752 = vpop.f32.mrb[0].mxu0
      %4753 = vmatprep.mubr.f32.mxu0 0.0
      %4754 = vmatmul.mubr.f32.gmra.mrb[0].mxu0 %v4543
      %v4755 = vpop.f32.mrb[0].mxu0
      %v4756 = vadd.f32 %v4468, %v4755
      %v4757 = vpop.f32.mrb[0].mxu0
      %4758 = vmatprep.mubr.f32.mxu0 0.0
      %4759 = vmatmul.mubr.f32.gmra.mrb[0].mxu0 %v4546
      %v4760 = vpop.f32.mrb[0].mxu0
      %v4761 = vadd.f32 %v4468, %v4760
      %v4762 = vpop.f32.mrb[0].mxu0
      %4763 = vmatprep.mubr.f32.mxu0 0.0
      %4764 = vmatmul.mubr.f32.gmra.mrb[0].mxu0 %v4549
      %v4765 = vpop.f32.mrb[0].mxu0
      %v4766 = vadd.f32 %v4468, %v4765
      %v4767 = vpop.f32.mrb[0].mxu0
      %4768 = vmatprep.mubr.f32.mxu0 0.0
      %4769 = vmatmul.mubr.f32.gmra.mrb[0].mxu0 %v4552
      %v4770 = vpop.f32.mrb[0].mxu0
      %v4771 = vadd.f32 %v4468, %v4770
      %v4772 = vpop.f32.mrb[0].mxu0
      %4773 = vmatprep.mubr.f32.mxu0 0.0
      %4774 = vmatmul.mubr.f32.gmra.mrb[0].mxu0 %v4555
      %v4775 = vpop.f32.mrb[0].mxu0
      %v4776 = vadd.f32 %v4468, %v4775
      %v4777 = vpop.f32.mrb[0].mxu0
      %4778 = vmatprep.mubr.f32.mxu0 0.0
      %4779 = vmatmul.mubr.f32.gmra.mrb[0].mxu0 %v4558
      %v4780 = vpop.f32.mrb[0].mxu0
      %v4781 = vadd.f32 %v4468, %v4780
      %v4782 = vpop.f32.mrb[0].mxu0
      %4783 = vmatprep.mubr.f32.mxu0 0.0
      %4784 = vmatmul.mubr.f32.gmra.mrb[0].mxu0 %v4561
      %v4785 = vpop.f32.mrb[0].mxu0
      %v4786 = vadd.f32 %v4468, %v4785
      %v4787 = vpop.f32.mrb[0].mxu0
      %4788 = vmatprep.mubr.f32.mxu0 0.0
      %4789 = vmatmul.mubr.f32.gmra.mrb[0].mxu0 %v4564
      %v4790 = vpop.f32.mrb[0].mxu0
      %v4791 = vadd.f32 %v4468, %v4790
      %v4792 = vpop.f32.mrb[0].mxu0
      %4793 = vdwg.mxu0
      %4794 = vst.msk [vmem:[#allocation4] sm:$0xff] %vm258, %v4636
      %4795 = vst.msk [vmem:[#allocation4 + $0x8] sm:$0xff] %vm258, %v4641
      %4796 = vst.msk [vmem:[#allocation4 + $0x10] sm:$0xff] %vm258, %v4646
      %4797 = vst.msk [vmem:[#allocation4 + $0x18] sm:$0xff] %vm258, %v4651
      %4798 = vst.msk [vmem:[#allocation4 + $0x20] sm:$0xff] %vm258, %v4656
      %4799 = vst.msk [vmem:[#allocation4 + $0x28] sm:$0xff] %vm258, %v4661
      %4800 = vst.msk [vmem:[#allocation4 + $0x30] sm:$0xff] %vm258, %v4666
      %4801 = vst.msk [vmem:[#allocation4 + $0x38] sm:$0xff] %vm258, %v4671
      %4802 = vst.msk [vmem:[#allocation4 + $0x40] sm:$0xff] %vm258, %v4676
      %4803 = vst.msk [vmem:[#allocation4 + $0x48] sm:$0xff] %vm258, %v4681
      %4804 = vst.msk [vmem:[#allocation4 + $0x50] sm:$0xff] %vm258, %v4686
      %4805 = vst.msk [vmem:[#allocation4 + $0x58] sm:$0xff] %vm258, %v4691
      %4806 = vst.msk [vmem:[#allocation4 + $0x60] sm:$0xff] %vm258, %v4696
      %4807 = vst.msk [vmem:[#allocation4 + $0x68] sm:$0xff] %vm258, %v4701
      %4808 = vst.msk [vmem:[#allocation4 + $0x70] sm:$0xff] %vm258, %v4706
      %4809 = vst.msk [vmem:[#allocation4 + $0x78] sm:$0xff] %vm258, %v4711
      %4810 = vst.msk [vmem:[#allocation4 + $0x80] sm:$0xff] %vm258, %v4716
      %4811 = vst.msk [vmem:[#allocation4 + $0x88] sm:$0xff] %vm258, %v4721
      %4812 = vst.msk [vmem:[#allocation4 + $0x90] sm:$0xff] %vm258, %v4726
      %4813 = vst.msk [vmem:[#allocation4 + $0x98] sm:$0xff] %vm258, %v4731
      %4814 = vst.msk [vmem:[#allocation4 + $0xa0] sm:$0xff] %vm258, %v4736
      %4815 = vst.msk [vmem:[#allocation4 + $0xa8] sm:$0xff] %vm258, %v4741
      %4816 = vst.msk [vmem:[#allocation4 + $0xb0] sm:$0xff] %vm258, %v4746
      %4817 = vst.msk [vmem:[#allocation4 + $0xb8] sm:$0xff] %vm258, %v4751
      %4818 = vst.msk [vmem:[#allocation4 + $0xc0] sm:$0xff] %vm258, %v4756
      %4819 = vst.msk [vmem:[#allocation4 + $0xc8] sm:$0xff] %vm258, %v4761
      %4820 = vst.msk [vmem:[#allocation4 + $0xd0] sm:$0xff] %vm258, %v4766
      %4821 = vst.msk [vmem:[#allocation4 + $0xd8] sm:$0xff] %vm258, %v4771
      %4822 = vst.msk [vmem:[#allocation4 + $0xe0] sm:$0xff] %vm258, %v4776
      %4823 = vst.msk [vmem:[#allocation4 + $0xe8] sm:$0xff] %vm258, %v4781
      %4824 = vst.msk [vmem:[#allocation4 + $0xf0] sm:$0xff] %vm258, %v4786
      %4825 = vst.msk [vmem:[#allocation4 + $0xf8] sm:$0xff] %vm258, %v4791
      %v4826 = vld [vmem:[#allocation5] sm:$0x1]
      %v4827 = vsel %vm258, %v4636, 0.0
      %v4828 = vsel %vm258, %v4641, 0.0
      %v4829 = vadd.f32 %v4827, %v4828
      %v4830 = vsel %vm258, %v4646, 0.0
      %v4831 = vadd.f32 %v4829, %v4830
      %v4832 = vsel %vm258, %v4651, 0.0
      %v4833 = vadd.f32 %v4831, %v4832
      %v4834 = vsel %vm258, %v4656, 0.0
      %v4835 = vadd.f32 %v4833, %v4834
      %v4836 = vsel %vm258, %v4661, 0.0
      %v4837 = vadd.f32 %v4835, %v4836
      %v4838 = vsel %vm258, %v4666, 0.0
      %v4839 = vadd.f32 %v4837, %v4838
      %v4840 = vsel %vm258, %v4671, 0.0
      %v4841 = vadd.f32 %v4839, %v4840
      %v4842 = vsel %vm258, %v4676, 0.0
      %v4843 = vadd.f32 %v4841, %v4842
      %v4844 = vsel %vm258, %v4681, 0.0
      %v4845 = vadd.f32 %v4843, %v4844
      %v4846 = vsel %vm258, %v4686, 0.0
      %v4847 = vadd.f32 %v4845, %v4846
      %v4848 = vsel %vm258, %v4691, 0.0
      %v4849 = vadd.f32 %v4847, %v4848
      %v4850 = vsel %vm258, %v4696, 0.0
      %v4851 = vadd.f32 %v4849, %v4850
      %v4852 = vsel %vm258, %v4701, 0.0
      %v4853 = vadd.f32 %v4851, %v4852
      %v4854 = vsel %vm258, %v4706, 0.0
      %v4855 = vadd.f32 %v4853, %v4854
      %v4856 = vsel %vm258, %v4711, 0.0
      %v4857 = vadd.f32 %v4855, %v4856
      %v4858 = vsel %vm258, %v4716, 0.0
      %v4859 = vadd.f32 %v4857, %v4858
      %v4860 = vsel %vm258, %v4721, 0.0
      %v4861 = vadd.f32 %v4859, %v4860
      %v4862 = vsel %vm258, %v4726, 0.0
      %v4863 = vadd.f32 %v4861, %v4862
      %v4864 = vsel %vm258, %v4731, 0.0
      %v4865 = vadd.f32 %v4863, %v4864
      %v4866 = vsel %vm258, %v4736, 0.0
      %v4867 = vadd.f32 %v4865, %v4866
      %v4868 = vsel %vm258, %v4741, 0.0
      %v4869 = vadd.f32 %v4867, %v4868
      %v4870 = vsel %vm258, %v4746, 0.0
      %v4871 = vadd.f32 %v4869, %v4870
      %v4872 = vsel %vm258, %v4751, 0.0
      %v4873 = vadd.f32 %v4871, %v4872
      %v4874 = vsel %vm258, %v4756, 0.0
      %v4875 = vadd.f32 %v4873, %v4874
      %v4876 = vsel %vm258, %v4761, 0.0
      %v4877 = vadd.f32 %v4875, %v4876
      %v4878 = vsel %vm258, %v4766, 0.0
      %v4879 = vadd.f32 %v4877, %v4878
      %v4880 = vsel %vm258, %v4771, 0.0
      %v4881 = vadd.f32 %v4879, %v4880
      %v4882 = vsel %vm258, %v4776, 0.0
      %v4883 = vadd.f32 %v4881, %v4882
      %v4884 = vsel %vm258, %v4781, 0.0
      %v4885 = vadd.f32 %v4883, %v4884
      %v4886 = vsel %vm258, %v4786, 0.0
      %v4887 = vadd.f32 %v4885, %v4886
      %v4888 = vsel %vm258, %v4791, 0.0
      %v4889 = vadd.f32 %v4887, %v4888
      %v4890 = vrot.slane %v4889, 4
      %v4891 = vadd.f32 %v4889, %v4890
      %v4892 = vrot.slane %v4891, 2
      %v4893 = vadd.f32 %v4891, %v4892
      %v4894 = vrot.slane %v4893, 1
      %v4895 = vadd.f32 %v4893, %v4894
      %v4896 = vadd.f32 %v4826, %v4895
      %4897 = vst.msk [vmem:[#allocation5] sm:$0x1] %vm320, %v4896
      %v4898 = vld [vmem:[#allocation6] sm:$0x1]
      %v4899 = vmul.f32 %v4636, %v4636
      %v4900 = vmul.f32 %v4641, %v4641
      %v4901 = vmul.f32 %v4646, %v4646
      %v4902 = vmul.f32 %v4651, %v4651
      %v4903 = vmul.f32 %v4656, %v4656
      %v4904 = vmul.f32 %v4661, %v4661
      %v4905 = vmul.f32 %v4666, %v4666
      %v4906 = vmul.f32 %v4671, %v4671
      %v4907 = vmul.f32 %v4676, %v4676
      %v4908 = vmul.f32 %v4681, %v4681
      %v4909 = vmul.f32 %v4686, %v4686
      %v4910 = vmul.f32 %v4691, %v4691
      %v4911 = vmul.f32 %v4696, %v4696
      %v4912 = vmul.f32 %v4701, %v4701
      %v4913 = vmul.f32 %v4706, %v4706
      %v4914 = vmul.f32 %v4711, %v4711
      %v4915 = vmul.f32 %v4716, %v4716
      %v4916 = vmul.f32 %v4721, %v4721
      %v4917 = vmul.f32 %v4726, %v4726
      %v4918 = vmul.f32 %v4731, %v4731
      %v4919 = vmul.f32 %v4736, %v4736
      %v4920 = vmul.f32 %v4741, %v4741
      %v4921 = vmul.f32 %v4746, %v4746
      %v4922 = vmul.f32 %v4751, %v4751
      %v4923 = vmul.f32 %v4756, %v4756
      %v4924 = vmul.f32 %v4761, %v4761
      %v4925 = vmul.f32 %v4766, %v4766
      %v4926 = vmul.f32 %v4771, %v4771
      %v4927 = vmul.f32 %v4776, %v4776
      %v4928 = vmul.f32 %v4781, %v4781
      %v4929 = vmul.f32 %v4786, %v4786
      %v4930 = vmul.f32 %v4791, %v4791
      %v4931 = vsel %vm258, %v4899, 0.0
      %v4932 = vsel %vm258, %v4900, 0.0
      %v4933 = vadd.f32 %v4931, %v4932
      %v4934 = vsel %vm258, %v4901, 0.0
      %v4935 = vadd.f32 %v4933, %v4934
      %v4936 = vsel %vm258, %v4902, 0.0
      %v4937 = vadd.f32 %v4935, %v4936
      %v4938 = vsel %vm258, %v4903, 0.0
      %v4939 = vadd.f32 %v4937, %v4938
      %v4940 = vsel %vm258, %v4904, 0.0
      %v4941 = vadd.f32 %v4939, %v4940
      %v4942 = vsel %vm258, %v4905, 0.0
      %v4943 = vadd.f32 %v4941, %v4942
      %v4944 = vsel %vm258, %v4906, 0.0
      %v4945 = vadd.f32 %v4943, %v4944
      %v4946 = vsel %vm258, %v4907, 0.0
      %v4947 = vadd.f32 %v4945, %v4946
      %v4948 = vsel %vm258, %v4908, 0.0
      %v4949 = vadd.f32 %v4947, %v4948
      %v4950 = vsel %vm258, %v4909, 0.0
      %v4951 = vadd.f32 %v4949, %v4950
      %v4952 = vsel %vm258, %v4910, 0.0
      %v4953 = vadd.f32 %v4951, %v4952
      %v4954 = vsel %vm258, %v4911, 0.0
      %v4955 = vadd.f32 %v4953, %v4954
      %v4956 = vsel %vm258, %v4912, 0.0
      %v4957 = vadd.f32 %v4955, %v4956
      %v4958 = vsel %vm258, %v4913, 0.0
      %v4959 = vadd.f32 %v4957, %v4958
      %v4960 = vsel %vm258, %v4914, 0.0
      %v4961 = vadd.f32 %v4959, %v4960
      %v4962 = vsel %vm258, %v4915, 0.0
      %v4963 = vadd.f32 %v4961, %v4962
      %v4964 = vsel %vm258, %v4916, 0.0
      %v4965 = vadd.f32 %v4963, %v4964
      %v4966 = vsel %vm258, %v4917, 0.0
      %v4967 = vadd.f32 %v4965, %v4966
      %v4968 = vsel %vm258, %v4918, 0.0
      %v4969 = vadd.f32 %v4967, %v4968
      %v4970 = vsel %vm258, %v4919, 0.0
      %v4971 = vadd.f32 %v4969, %v4970
      %v4972 = vsel %vm258, %v4920, 0.0
      %v4973 = vadd.f32 %v4971, %v4972
      %v4974 = vsel %vm258, %v4921, 0.0
      %v4975 = vadd.f32 %v4973, %v4974
      %v4976 = vsel %vm258, %v4922, 0.0
      %v4977 = vadd.f32 %v4975, %v4976
      %v4978 = vsel %vm258, %v4923, 0.0
      %v4979 = vadd.f32 %v4977, %v4978
      %v4980 = vsel %vm258, %v4924, 0.0
      %v4981 = vadd.f32 %v4979, %v4980
      %v4982 = vsel %vm258, %v4925, 0.0
      %v4983 = vadd.f32 %v4981, %v4982
      %v4984 = vsel %vm258, %v4926, 0.0
      %v4985 = vadd.f32 %v4983, %v4984
      %v4986 = vsel %vm258, %v4927, 0.0
      %v4987 = vadd.f32 %v4985, %v4986
      %v4988 = vsel %vm258, %v4928, 0.0
      %v4989 = vadd.f32 %v4987, %v4988
      %v4990 = vsel %vm258, %v4929, 0.0
      %v4991 = vadd.f32 %v4989, %v4990
      %v4992 = vsel %vm258, %v4930, 0.0
      %v4993 = vadd.f32 %v4991, %v4992
      %v4994 = vrot.slane %v4993, 4
      %v4995 = vadd.f32 %v4993, %v4994
      %v4996 = vrot.slane %v4995, 2
      %v4997 = vadd.f32 %v4995, %v4996
      %v4998 = vrot.slane %v4997, 1
      %v4999 = vadd.f32 %v4997, %v4998
      %v5000 = vadd.f32 %v4898, %v4999
      %5001 = vst.msk [vmem:[#allocation6] sm:$0x1] %vm320, %v5000
      %v5002 = vld [vmem:[#allocation5] sm:$0x1]
      %v5003 = vmul.f32 %v5002, 0.00390625
      %v5004 = vld [vmem:[#allocation6] sm:$0x1]
      %v5005 = vmul.f32 %v5004, 0.00390625
      %v5006 = vmul.f32 %v5003, %v5003
      %v5007 = vsub.f32 %v5005, %v5006
      %v5008 = vmax.f32 %v5007, 0.0
      %v5009 = vadd.f32 %v5008, 1e-05
      %v5010 = vrsqrt.pop %v5009
      %v5011 = vld [vmem:[#allocation4] sm:$0xff]
      %v5012 = vld [vmem:[#allocation4 + $0x8] sm:$0xff]
      %v5013 = vld [vmem:[#allocation4 + $0x10] sm:$0xff]
      %v5014 = vld [vmem:[#allocation4 + $0x18] sm:$0xff]
      %v5015 = vld [vmem:[#allocation4 + $0x20] sm:$0xff]
      %v5016 = vld [vmem:[#allocation4 + $0x28] sm:$0xff]
      %v5017 = vld [vmem:[#allocation4 + $0x30] sm:$0xff]
      %v5018 = vld [vmem:[#allocation4 + $0x38] sm:$0xff]
      %v5019 = vld [vmem:[#allocation4 + $0x40] sm:$0xff]
      %v5020 = vld [vmem:[#allocation4 + $0x48] sm:$0xff]
      %v5021 = vld [vmem:[#allocation4 + $0x50] sm:$0xff]
      %v5022 = vld [vmem:[#allocation4 + $0x58] sm:$0xff]
      %v5023 = vld [vmem:[#allocation4 + $0x60] sm:$0xff]
      %v5024 = vld [vmem:[#allocation4 + $0x68] sm:$0xff]
      %v5025 = vld [vmem:[#allocation4 + $0x70] sm:$0xff]
      %v5026 = vld [vmem:[#allocation4 + $0x78] sm:$0xff]
      %v5027 = vld [vmem:[#allocation4 + $0x80] sm:$0xff]
      %v5028 = vld [vmem:[#allocation4 + $0x88] sm:$0xff]
      %v5029 = vld [vmem:[#allocation4 + $0x90] sm:$0xff]
      %v5030 = vld [vmem:[#allocation4 + $0x98] sm:$0xff]
      %v5031 = vld [vmem:[#allocation4 + $0xa0] sm:$0xff]
      %v5032 = vld [vmem:[#allocation4 + $0xa8] sm:$0xff]
      %v5033 = vld [vmem:[#allocation4 + $0xb0] sm:$0xff]
      %v5034 = vld [vmem:[#allocation4 + $0xb8] sm:$0xff]
      %v5035 = vld [vmem:[#allocation4 + $0xc0] sm:$0xff]
      %v5036 = vld [vmem:[#allocation4 + $0xc8] sm:$0xff]
      %v5037 = vld [vmem:[#allocation4 + $0xd0] sm:$0xff]
      %v5038 = vld [vmem:[#allocation4 + $0xd8] sm:$0xff]
      %v5039 = vld [vmem:[#allocation4 + $0xe0] sm:$0xff]
      %v5040 = vld [vmem:[#allocation4 + $0xe8] sm:$0xff]
      %v5041 = vld [vmem:[#allocation4 + $0xf0] sm:$0xff]
      %v5042 = vld [vmem:[#allocation4 + $0xf8] sm:$0xff]
      %v5044 = vlaneseq
      %v5045 = vshrl.u32 %v5044, 7
      %v5046 = vsub.s32 0, %v5045
      %v5047 = vrot.slane %v5003, %v5046
      %v5049 = vsub.f32 %v5011, %v5047
      %v5050 = vsub.f32 %v5012, %v5047
      %v5051 = vsub.f32 %v5013, %v5047
      %v5052 = vsub.f32 %v5014, %v5047
      %v5053 = vsub.f32 %v5015, %v5047
      %v5054 = vsub.f32 %v5016, %v5047
      %v5055 = vsub.f32 %v5017, %v5047
      %v5056 = vsub.f32 %v5018, %v5047
      %v5057 = vsub.f32 %v5019, %v5047
      %v5058 = vsub.f32 %v5020, %v5047
      %v5059 = vsub.f32 %v5021, %v5047
      %v5060 = vsub.f32 %v5022, %v5047
      %v5061 = vsub.f32 %v5023, %v5047
      %v5062 = vsub.f32 %v5024, %v5047
      %v5063 = vsub.f32 %v5025, %v5047
      %v5064 = vsub.f32 %v5026, %v5047
      %v5065 = vsub.f32 %v5027, %v5047
      %v5066 = vsub.f32 %v5028, %v5047
      %v5067 = vsub.f32 %v5029, %v5047
      %v5068 = vsub.f32 %v5030, %v5047
      %v5069 = vsub.f32 %v5031, %v5047
      %v5070 = vsub.f32 %v5032, %v5047
      %v5071 = vsub.f32 %v5033, %v5047
      %v5072 = vsub.f32 %v5034, %v5047
      %v5073 = vsub.f32 %v5035, %v5047
      %v5074 = vsub.f32 %v5036, %v5047
      %v5075 = vsub.f32 %v5037, %v5047
      %v5076 = vsub.f32 %v5038, %v5047
      %v5077 = vsub.f32 %v5039, %v5047
      %v5078 = vsub.f32 %v5040, %v5047
      %v5079 = vsub.f32 %v5041, %v5047
      %v5080 = vsub.f32 %v5042, %v5047
      %v5082 = vlaneseq
      %v5083 = vshrl.u32 %v5082, 7
      %v5084 = vsub.s32 0, %v5083
      %v5085 = vrot.slane %v5010, %v5084
      %v5087 = vmul.f32 %v5049, %v5085
      %v5088 = vmul.f32 %v5050, %v5085
      %v5089 = vmul.f32 %v5051, %v5085
      %v5090 = vmul.f32 %v5052, %v5085
      %v5091 = vmul.f32 %v5053, %v5085
      %v5092 = vmul.f32 %v5054, %v5085
      %v5093 = vmul.f32 %v5055, %v5085
      %v5094 = vmul.f32 %v5056, %v5085
      %v5095 = vmul.f32 %v5057, %v5085
      %v5096 = vmul.f32 %v5058, %v5085
      %v5097 = vmul.f32 %v5059, %v5085
      %v5098 = vmul.f32 %v5060, %v5085
      %v5099 = vmul.f32 %v5061, %v5085
      %v5100 = vmul.f32 %v5062, %v5085
      %v5101 = vmul.f32 %v5063, %v5085
      %v5102 = vmul.f32 %v5064, %v5085
      %v5103 = vmul.f32 %v5065, %v5085
      %v5104 = vmul.f32 %v5066, %v5085
      %v5105 = vmul.f32 %v5067, %v5085
      %v5106 = vmul.f32 %v5068, %v5085
      %v5107 = vmul.f32 %v5069, %v5085
      %v5108 = vmul.f32 %v5070, %v5085
      %v5109 = vmul.f32 %v5071, %v5085
      %v5110 = vmul.f32 %v5072, %v5085
      %v5111 = vmul.f32 %v5073, %v5085
      %v5112 = vmul.f32 %v5074, %v5085
      %v5113 = vmul.f32 %v5075, %v5085
      %v5114 = vmul.f32 %v5076, %v5085
      %v5115 = vmul.f32 %v5077, %v5085
      %v5116 = vmul.f32 %v5078, %v5085
      %v5117 = vmul.f32 %v5079, %v5085
      %v5118 = vmul.f32 %v5080, %v5085
      %v5119 = vld [vmem:[%s219] sm:$0xff]
      %v5120 = vld [vmem:[%s219 + $0x8] sm:$0xff]
      %v5121 = vld [vmem:[%s219 + $0x10] sm:$0xff]
      %v5122 = vld [vmem:[%s219 + $0x18] sm:$0xff]
      %v5123 = vld [vmem:[%s219 + $0x20] sm:$0xff]
      %v5124 = vld [vmem:[%s219 + $0x28] sm:$0xff]
      %v5125 = vld [vmem:[%s219 + $0x30] sm:$0xff]
      %v5126 = vld [vmem:[%s219 + $0x38] sm:$0xff]
      %v5127 = vld [vmem:[%s219 + $0x40] sm:$0xff]
      %v5128 = vld [vmem:[%s219 + $0x48] sm:$0xff]
      %v5129 = vld [vmem:[%s219 + $0x50] sm:$0xff]
      %v5130 = vld [vmem:[%s219 + $0x58] sm:$0xff]
      %v5131 = vld [vmem:[%s219 + $0x60] sm:$0xff]
      %v5132 = vld [vmem:[%s219 + $0x68] sm:$0xff]
      %v5133 = vld [vmem:[%s219 + $0x70] sm:$0xff]
      %v5134 = vld [vmem:[%s219 + $0x78] sm:$0xff]
      %v5135 = vld [vmem:[%s219 + $0x80] sm:$0xff]
      %v5136 = vld [vmem:[%s219 + $0x88] sm:$0xff]
      %v5137 = vld [vmem:[%s219 + $0x90] sm:$0xff]
      %v5138 = vld [vmem:[%s219 + $0x98] sm:$0xff]
      %v5139 = vld [vmem:[%s219 + $0xa0] sm:$0xff]
      %v5140 = vld [vmem:[%s219 + $0xa8] sm:$0xff]
      %v5141 = vld [vmem:[%s219 + $0xb0] sm:$0xff]
      %v5142 = vld [vmem:[%s219 + $0xb8] sm:$0xff]
      %v5143 = vld [vmem:[%s219 + $0xc0] sm:$0xff]
      %v5144 = vld [vmem:[%s219 + $0xc8] sm:$0xff]
      %v5145 = vld [vmem:[%s219 + $0xd0] sm:$0xff]
      %v5146 = vld [vmem:[%s219 + $0xd8] sm:$0xff]
      %v5147 = vld [vmem:[%s219 + $0xe0] sm:$0xff]
      %v5148 = vld [vmem:[%s219 + $0xe8] sm:$0xff]
      %v5149 = vld [vmem:[%s219 + $0xf0] sm:$0xff]
      %v5150 = vld [vmem:[%s219 + $0xf8] sm:$0xff]
      %v5151 = vadd.f32 %v5119, %v5087
      %v5152 = vadd.f32 %v5120, %v5088
      %v5153 = vadd.f32 %v5121, %v5089
      %v5154 = vadd.f32 %v5122, %v5090
      %v5155 = vadd.f32 %v5123, %v5091
      %v5156 = vadd.f32 %v5124, %v5092
      %v5157 = vadd.f32 %v5125, %v5093
      %v5158 = vadd.f32 %v5126, %v5094
      %v5159 = vadd.f32 %v5127, %v5095
      %v5160 = vadd.f32 %v5128, %v5096
      %v5161 = vadd.f32 %v5129, %v5097
      %v5162 = vadd.f32 %v5130, %v5098
      %v5163 = vadd.f32 %v5131, %v5099
      %v5164 = vadd.f32 %v5132, %v5100
      %v5165 = vadd.f32 %v5133, %v5101
      %v5166 = vadd.f32 %v5134, %v5102
      %v5167 = vadd.f32 %v5135, %v5103
      %v5168 = vadd.f32 %v5136, %v5104
      %v5169 = vadd.f32 %v5137, %v5105
      %v5170 = vadd.f32 %v5138, %v5106
      %v5171 = vadd.f32 %v5139, %v5107
      %v5172 = vadd.f32 %v5140, %v5108
      %v5173 = vadd.f32 %v5141, %v5109
      %v5174 = vadd.f32 %v5142, %v5110
      %v5175 = vadd.f32 %v5143, %v5111
      %v5176 = vadd.f32 %v5144, %v5112
      %v5177 = vadd.f32 %v5145, %v5113
      %v5178 = vadd.f32 %v5146, %v5114
      %v5179 = vadd.f32 %v5147, %v5115
      %v5180 = vadd.f32 %v5148, %v5116
      %v5181 = vadd.f32 %v5149, %v5117
      %v5182 = vadd.f32 %v5150, %v5118
      %5183 = vst.msk [vmem:[%s224] sm:$0xff] %vm258, %v5151
      %5184 = vst.msk [vmem:[%s224 + $0x8] sm:$0xff] %vm258, %v5152
      %5185 = vst.msk [vmem:[%s224 + $0x10] sm:$0xff] %vm258, %v5153
      %5186 = vst.msk [vmem:[%s224 + $0x18] sm:$0xff] %vm258, %v5154
      %5187 = vst.msk [vmem:[%s224 + $0x20] sm:$0xff] %vm258, %v5155
      %5188 = vst.msk [vmem:[%s224 + $0x28] sm:$0xff] %vm258, %v5156
      %5189 = vst.msk [vmem:[%s224 + $0x30] sm:$0xff] %vm258, %v5157
      %5190 = vst.msk [vmem:[%s224 + $0x38] sm:$0xff] %vm258, %v5158
      %5191 = vst.msk [vmem:[%s224 + $0x40] sm:$0xff] %vm258, %v5159
      %5192 = vst.msk [vmem:[%s224 + $0x48] sm:$0xff] %vm258, %v5160
      %5193 = vst.msk [vmem:[%s224 + $0x50] sm:$0xff] %vm258, %v5161
      %5194 = vst.msk [vmem:[%s224 + $0x58] sm:$0xff] %vm258, %v5162
      %5195 = vst.msk [vmem:[%s224 + $0x60] sm:$0xff] %vm258, %v5163
      %5196 = vst.msk [vmem:[%s224 + $0x68] sm:$0xff] %vm258, %v5164
      %5197 = vst.msk [vmem:[%s224 + $0x70] sm:$0xff] %vm258, %v5165
      %5198 = vst.msk [vmem:[%s224 + $0x78] sm:$0xff] %vm258, %v5166
      %5199 = vst.msk [vmem:[%s224 + $0x80] sm:$0xff] %vm258, %v5167
      %5200 = vst.msk [vmem:[%s224 + $0x88] sm:$0xff] %vm258, %v5168
      %5201 = vst.msk [vmem:[%s224 + $0x90] sm:$0xff] %vm258, %v5169
      %5202 = vst.msk [vmem:[%s224 + $0x98] sm:$0xff] %vm258, %v5170
      %5203 = vst.msk [vmem:[%s224 + $0xa0] sm:$0xff] %vm258, %v5171
      %5204 = vst.msk [vmem:[%s224 + $0xa8] sm:$0xff] %vm258, %v5172
      %5205 = vst.msk [vmem:[%s224 + $0xb0] sm:$0xff] %vm258, %v5173
      %5206 = vst.msk [vmem:[%s224 + $0xb8] sm:$0xff] %vm258, %v5174
      %5207 = vst.msk [vmem:[%s224 + $0xc0] sm:$0xff] %vm258, %v5175
      %5208 = vst.msk [vmem:[%s224 + $0xc8] sm:$0xff] %vm258, %v5176
      %5209 = vst.msk [vmem:[%s224 + $0xd0] sm:$0xff] %vm258, %v5177
      %5210 = vst.msk [vmem:[%s224 + $0xd8] sm:$0xff] %vm258, %v5178
      %5211 = vst.msk [vmem:[%s224 + $0xe0] sm:$0xff] %vm258, %v5179
      %5212 = vst.msk [vmem:[%s224 + $0xe8] sm:$0xff] %vm258, %v5180
      %5213 = vst.msk [vmem:[%s224 + $0xf0] sm:$0xff] %vm258, %v5181
      %5214 = vst.msk [vmem:[%s224 + $0xf8] sm:$0xff] %vm258, %v5182
      %p5215 = scmp.lt.s32.totalorder %s16, 1
      %s5216 = scalar_select %p5215, %s16, 1
      %s5217 = smul.addr %s5216, 32
      %s5218 = smul.addr %s5217, 8
      %s5219 = scalar_lea.vmem %s5, %s5218
      // Predicated region
      $region41: #{tpu_custom_call.1} parent=39 // pred_check
        %p5220 = pneg %p144
      $region42: #{tpu_custom_call.1} parent=39 // pred_check_branch
        %5222 = sbr.rel (%p5220) target = $region44
      $region43: #{tpu_custom_call.1} parent=39 // pred_region
        _
      $region44: #{tpu_custom_call.1} parent=39 // pred_fallthru
        _
    $region40: #{tpu_custom_call.1} parent=5 // pred_fallthru
      _
    %p5223 = scmp.le.s32.totalorder 2, %s11
    // Predicated region
    $region45: #{tpu_custom_call.1} parent=5 // pred_check
      %p5224 = pneg %p5223
    $region46: #{tpu_custom_call.1} parent=5 // pred_check_branch
      %5226 = sbr.rel (%p5224) target = $region48
    $region47: #{tpu_custom_call.1} parent=5 // pred_region
      %s5227 = ssub.s32 %s11, 2
      // Predicated region
      $region49: #{tpu_custom_call.1} parent=47 // pred_check
        %p5228 = pneg %p150
      $region50: #{tpu_custom_call.1} parent=47 // pred_check_branch
        %5230 = sbr.rel (%p5228) target = $region52
      $region51: #{tpu_custom_call.1} parent=47 // pred_region
        %p5231 = scmp.lt.s32.totalorder %s17, 1
        %s5232 = scalar_select %p5231, %s17, 1
        %s5233 = smul.addr %s5232, 32
        %s5234 = smul.addr %s5233, 8
        %s5235 = scalar_lea.vmem %s5, %s5234
      $region52: #{tpu_custom_call.1} parent=47 // pred_fallthru
        _
    $region48: #{tpu_custom_call.1} parent=5 // pred_fallthru
      _
  $region6: #{tpu_custom_call.1} parent=0 // loop_footer
    %s15 = sadd.s32 1, %s11
  $region7: #{tpu_custom_call.1} parent=0 // loop_footer_branch
    %10 = sbr.rel target = $region3
  $region8: #{tpu_custom_call.1} parent=0 // loop_exit
    _

</llo_original>
